<compile_context>
chip_gen: v7x
topology: tpu7x:2x2x1
jax: 0.10.0
libtpu: 0.0.40
codegen_flags: <defaults>
</compile_context>

<pallas_src>
import functools

import numpy as np

import jax
import jax.numpy as jnp
from jax.experimental import pallas as pl
from jax.experimental.pallas import tpu as pltpu


def _make_halo_masks(N, H, W, KH, KW):
    """(KH*KW, N*H*W) f32 0/1 masks: 1 where the tap stays inside its image."""
    S = H * W
    NS = N * S
    p = np.arange(NS) % S
    hh = p // W
    ww = p % W
    ph, pw = (KH - 1) // 2, (KW - 1) // 2
    rows = []
    for dh in range(KH):
        oh = dh - ph
        for dw in range(KW):
            ow = dw - pw
            valid = ((hh + oh >= 0) & (hh + oh < H) &
                     (ww + ow >= 0) & (ww + ow < W))
            rows.append(valid.astype(np.float32))
    return np.stack(rows, axis=0)


def _dense_block_kernel(H, W, KH, KW, C0, K, n_layers, *refs):
    """Fused dense_block.

    refs layout:
      refs[0]            x_ref      (C0, NS)        f32   original input
      refs[1]            masks_ref  (KH*KW, NS)     f32   0/1 halo masks
      refs[2 + 3i + 0]   w_ref_i    (KH*KW, K, C_i) bf16  conv weight, per tap
      refs[2 + 3i + 1]   gamma_i    (C_i, 1)        f32
      refs[2 + 3i + 2]   beta_i     (C_i, 1)        f32
      refs[-1]           out_ref    (C0+n*K, NS)    f32   final concat result;
                         doubles as the persistent VMEM activation buffer.
    Final channel order (PyTorch cat semantics): [conv_n; ...; conv_1; x0].
    """
    x_ref, masks_ref = refs[0], refs[1]
    layer_refs = refs[2:-1]
    out_ref = refs[-1]

    NS = x_ref.shape[1]
    ph, pw = (KH - 1) // 2, (KW - 1) // 2
    inv_ns = 1.0 / NS

    # Original input goes to the bottom of the output, written exactly once.
    out_ref[n_layers * K:, :] = x_ref[...]

    # Halo masks reused by every layer (no per-layer rebuild).
    masks = masks_ref[...]                           # (KH*KW, NS) f32

    for i in range(n_layers):
        c_in = C0 + i * K
        w_ref = layer_refs[3 * i]                    # (KH*KW, K, c_in) bf16
        g_ref = layer_refs[3 * i + 1]                # (c_in, 1) f32
        b_ref = layer_refs[3 * i + 2]                # (c_in, 1) f32

        # Layer i's input = [conv_i; ...; conv_1; x0] = bottom c_in rows of
        # the persistent VMEM output buffer.
        in_lo = (n_layers - i) * K
        x = out_ref[in_lo:in_lo + c_in, :]           # (c_in, NS) f32

        # BatchNorm2d (training-mode batch stats over the lane axis) + ReLU:
        # one pass over x (sum & sum-of-squares), biased var clamped at 0,
        # then a single FMA + max on the VPU.  All f32.
        s1 = jnp.sum(x, axis=1, keepdims=True)
        s2 = jnp.sum(x * x, axis=1, keepdims=True)
        mean = s1 * inv_ns
        var = jnp.maximum(s2 * inv_ns - mean * mean, 0.0)
        scale = g_ref[...] * jax.lax.rsqrt(var + 1e-5)
        shift = b_ref[...] - mean * scale
        y = jnp.maximum(x * scale + shift, 0.0)      # (c_in, NS) f32

        # 3x3 conv as 9 accumulating MXU matmuls.  Per tap: XLU lane roll of
        # the flattened-spatial axis + 0/1 halo mask (the circular-wrap lanes
        # are exactly the out-of-image taps), cast to bf16 for the MXU only,
        # then (K, c_in) @ (c_in, NS) accumulated in f32.  No im2col scratch.
        acc = None
        t = 0
        for dh in range(KH):
            oh = dh - ph
            for dw in range(KW):
                ow = dw - pw
                d = oh * W + ow
                sh = y if d == 0 else pltpu.roll(y, (-d) % NS, 1)
                patch = (sh * masks[t:t + 1, :]).astype(jnp.bfloat16)
                contrib = jnp.dot(w_ref[t], patch,
                                  preferred_element_type=jnp.float32)
                acc = contrib if acc is None else acc + contrib
                t += 1

        # Write ONLY the K new conv channels.  Offset (n-1-i)*K may be
        # sublane-misaligned (K=12) -> small masked store; prior channels are
        # never re-copied.
        out_lo = (n_layers - 1 - i) * K
        out_ref[out_lo:out_lo + K, :] = acc


@jax.jit
def dense_block_forward(x_nchw, conv_weights, gammas, betas):
    """x_nchw: (N, C0, H, W); conv_weights[i]: (K, C_i, KH, KW);
    gammas/betas[i]: (C_i,).  Returns (N, C0 + n*K, H, W), matching
    dense_block.forward (training-mode BatchNorm)."""
    N, C0, H, W = x_nchw.shape
    NS = N * H * W
    n_layers = len(conv_weights)
    K, _, KH, KW = conv_weights[0].shape
    C_total = C0 + n_layers * K

    # One layout change for the whole block: NCHW -> (C, N*H*W), lane-dense.
    x_cq = jnp.transpose(x_nchw, (1, 0, 2, 3)).reshape(C0, NS).astype(jnp.float32)

    # Halo masks depend only on (N, H, W, KH, KW): built once, host-side.
    masks = jnp.asarray(_make_halo_masks(N, H, W, KH, KW))

    args = [x_cq, masks]
    c = C0
    for w, g, b in zip(conv_weights, gammas, betas):
        # (K, C, KH, KW) -> (KH*KW, K, C): one (K, C) MXU operand per tap,
        # channel order matching the activation rows.  bf16 for the MXU only.
        w_taps = jnp.transpose(w, (2, 3, 0, 1)).reshape(KH * KW, K, c)
        args += [w_taps.astype(jnp.bfloat16),
                 g.reshape(c, 1).astype(jnp.float32),
                 b.reshape(c, 1).astype(jnp.float32)]
        c += K

    kernel = functools.partial(_dense_block_kernel, H, W, KH, KW, C0, K,
                               n_layers)
    vmem = pl.BlockSpec(memory_space=pltpu.MemorySpace.VMEM)
    out = pl.pallas_call(
        kernel,
        out_shape=jax.ShapeDtypeStruct((C_total, NS), jnp.float32),
        in_specs=[vmem] * len(args),
        out_specs=vmem,
    )(*args)

    return jnp.transpose(out.reshape(C_total, N, H, W), (1, 0, 2, 3))


def _reference_block(x_nchw, conv_weights, gammas, betas):
    """Pure-JAX reference mirroring the PyTorch dense_block forward (f32)."""
    x = x_nchw
    for w, g, b in zip(conv_weights, gammas, betas):
        mean = jnp.mean(x, axis=(0, 2, 3), keepdims=True)
        var = jnp.mean((x - mean) ** 2, axis=(0, 2, 3), keepdims=True)
        xn = (x - mean) / jnp.sqrt(var + 1e-5)
        xn = xn * g.reshape(1, -1, 1, 1) + b.reshape(1, -1, 1, 1)
        y = jnp.maximum(xn, 0.0)
        conv = jax.lax.conv_general_dilated(
            y, w, window_strides=(1, 1), padding="SAME",
            dimension_numbers=("NCHW", "OIHW", "NCHW"))
        x = jnp.concatenate([conv, x], axis=1)
    return x


if __name__ == "__main__":
    # dense_block(input_channel=4, n=2, kernel_size=3, k=12) at small shapes.
    N, C_IN, H, W = 2, 4, 16, 16
    K_GROWTH, KSIZE, N_LAYERS = 12, 3, 2

    key = jax.random.PRNGKey(0)
    keys = jax.random.split(key, 3 * N_LAYERS + 1)
    x = jax.random.normal(keys[0], (N, C_IN, H, W), dtype=jnp.float32)

    conv_ws, gammas, betas = [], [], []
    c = C_IN
    for i in range(N_LAYERS):
        fan_in = c * KSIZE * KSIZE
        w = jax.random.normal(keys[3 * i + 1], (K_GROWTH, c, KSIZE, KSIZE),
                              dtype=jnp.float32) * (2.0 / fan_in) ** 0.5
        conv_ws.append(w)
        gammas.append(1.0 + 0.1 * jax.random.normal(keys[3 * i + 2], (c,),
                                                    dtype=jnp.float32))
        betas.append(0.1 * jax.random.normal(keys[3 * i + 3], (c,),
                                             dtype=jnp.float32))
        c += K_GROWTH

    out = dense_block_forward(x, conv_ws, gammas, betas)
    out = jax.block_until_ready(out)

    ref = _reference_block(x, conv_ws, gammas, betas)
    assert out.shape == (N, C_IN + N_LAYERS * K_GROWTH, H, W), out.shape
    # bf16 MXU operands (f32 accumulation) -> tolerance loosened vs f32-only.
    max_err = float(jnp.max(jnp.abs(out - ref)))
    assert jnp.allclose(out, ref, rtol=5e-2, atol=5e-2), max_err

    print("KERNEL_OK")
</pallas_src>

<mosaic_0001>
module attributes {stable_mosaic.version = 11 : i64} {
  func.func @_dense_block_kernel(%arg0: memref<4x512xf32, #tpu.memory_space<vmem>>, %arg1: memref<9x512xf32, #tpu.memory_space<vmem>>, %arg2: memref<9x12x4xbf16, #tpu.memory_space<vmem>>, %arg3: memref<4x1xf32, #tpu.memory_space<vmem>>, %arg4: memref<4x1xf32, #tpu.memory_space<vmem>>, %arg5: memref<9x12x16xbf16, #tpu.memory_space<vmem>>, %arg6: memref<16x1xf32, #tpu.memory_space<vmem>>, %arg7: memref<16x1xf32, #tpu.memory_space<vmem>>, %arg8: memref<28x512xf32, #tpu.memory_space<vmem>>) attributes {dimension_semantics = [], scalar_prefetch = 0 : i64, scratch_operands = 0 : i64, tpu.core_type = #tpu.core_type<tc>} {
    %c0 = arith.constant 0 : index
    %c0_0 = arith.constant 0 : index
    %0 = vector.load %arg0[%c0, %c0_0] : memref<4x512xf32, #tpu.memory_space<vmem>>, vector<4x512xf32>
    %c24 = arith.constant 24 : index
    %c0_1 = arith.constant 0 : index
    %1 = vector.load %arg8[%c24, %c0_1] : memref<28x512xf32, #tpu.memory_space<vmem>>, vector<4x512xf32>
    tpu.vector_store %arg8[%c24, %c0_1], %0 {strides = array<i32>} : memref<28x512xf32, #tpu.memory_space<vmem>>, vector<4x512xf32>,
    %c0_2 = arith.constant 0 : index
    %c0_3 = arith.constant 0 : index
    %2 = vector.load %arg1[%c0_2, %c0_3] : memref<9x512xf32, #tpu.memory_space<vmem>>, vector<9x512xf32>
    %c24_4 = arith.constant 24 : index
    %c0_5 = arith.constant 0 : index
    %3 = vector.load %arg8[%c24_4, %c0_5] : memref<28x512xf32, #tpu.memory_space<vmem>>, vector<4x512xf32>
    %cst = arith.constant dense<0.000000e+00> : vector<4xf32>
    %4 = vector.multi_reduction <add>, %3, %cst [1] : vector<4x512xf32> to vector<4xf32>
    %5 = vector.shape_cast %4 : vector<4xf32> to vector<4x1xf32>
    %6 = arith.mulf %3, %3 : vector<4x512xf32>
    %cst_6 = arith.constant dense<0.000000e+00> : vector<4xf32>
    %7 = vector.multi_reduction <add>, %6, %cst_6 [1] : vector<4x512xf32> to vector<4xf32>
    %8 = vector.shape_cast %7 : vector<4xf32> to vector<4x1xf32>
    %cst_7 = arith.constant 0.001953125 : f32
    %9 = vector.broadcast %cst_7 : f32 to vector<4x1xf32>
    %10 = arith.mulf %5, %9 : vector<4x1xf32>
    %cst_8 = arith.constant 0.001953125 : f32
    %11 = vector.broadcast %cst_8 : f32 to vector<4x1xf32>
    %12 = arith.mulf %8, %11 : vector<4x1xf32>
    %13 = arith.mulf %10, %10 : vector<4x1xf32>
    %14 = arith.subf %12, %13 : vector<4x1xf32>
    %cst_9 = arith.constant 0.000000e+00 : f32
    %15 = vector.broadcast %cst_9 : f32 to vector<4x1xf32>
    %16 = arith.maximumf %14, %15 : vector<4x1xf32>
    %c0_10 = arith.constant 0 : index
    %c0_11 = arith.constant 0 : index
    %17 = vector.load %arg3[%c0_10, %c0_11] : memref<4x1xf32, #tpu.memory_space<vmem>>, vector<4x1xf32>
    %cst_12 = arith.constant 9.99999974E-6 : f32
    %18 = vector.broadcast %cst_12 : f32 to vector<4x1xf32>
    %19 = arith.addf %16, %18 : vector<4x1xf32>
    %20 = math.rsqrt %19 : vector<4x1xf32>
    %21 = arith.mulf %17, %20 : vector<4x1xf32>
    %c0_13 = arith.constant 0 : index
    %c0_14 = arith.constant 0 : index
    %22 = vector.load %arg4[%c0_13, %c0_14] : memref<4x1xf32, #tpu.memory_space<vmem>>, vector<4x1xf32>
    %23 = arith.mulf %10, %21 : vector<4x1xf32>
    %24 = arith.subf %22, %23 : vector<4x1xf32>
    %25 = vector.broadcast %21 : vector<4x1xf32> to vector<4x512xf32>
    %26 = arith.mulf %3, %25 : vector<4x512xf32>
    %27 = vector.broadcast %24 : vector<4x1xf32> to vector<4x512xf32>
    %28 = arith.addf %26, %27 : vector<4x512xf32>
    %cst_15 = arith.constant 0.000000e+00 : f32
    %29 = vector.broadcast %cst_15 : f32 to vector<4x512xf32>
    %30 = arith.maximumf %28, %29 : vector<4x512xf32>
    %c17_i32 = arith.constant 17 : i32
    %31 = tpu.dynamic_rotate %30 by %c17_i32 dim 1 : vector<4x512xf32>, i32 -> vector<4x512xf32>
    %32 = vector.extract_strided_slice %2 {offsets = [0, 0], sizes = [1, 512], strides = [1, 1]} : vector<9x512xf32> to vector<1x512xf32>
    %33 = vector.broadcast %32 : vector<1x512xf32> to vector<4x512xf32>
    %34 = arith.mulf %31, %33 : vector<4x512xf32>
    %35 = arith.truncf %34 : vector<4x512xf32> to vector<4x512xbf16>
    %c0_16 = arith.constant 0 : index
    %c0_17 = arith.constant 0 : index
    %c0_18 = arith.constant 0 : index
    %36 = vector.load %arg2[%c0_16, %c0_17, %c0_18] : memref<9x12x4xbf16, #tpu.memory_space<vmem>>, vector<1x12x4xbf16>
    %37 = vector.shape_cast %36 : vector<1x12x4xbf16> to vector<12x4xbf16>
    %cst_19 = arith.constant dense<0.000000e+00> : vector<12x512xf32>
    %38 = tpu.matmul %37, %35, %cst_19 {dimension_numbers = #tpu.dot_dimension_numbers<[1], [0], [0], [1], [0, 0, 1, 1], [], []>} : vector<12x4xbf16>, vector<4x512xbf16>, vector<12x512xf32> -> vector<12x512xf32>
    %c16_i32 = arith.constant 16 : i32
    %39 = tpu.dynamic_rotate %30 by %c16_i32 dim 1 : vector<4x512xf32>, i32 -> vector<4x512xf32>
    %40 = vector.extract_strided_slice %2 {offsets = [1, 0], sizes = [1, 512], strides = [1, 1]} : vector<9x512xf32> to vector<1x512xf32>
    %41 = vector.broadcast %40 : vector<1x512xf32> to vector<4x512xf32>
    %42 = arith.mulf %39, %41 : vector<4x512xf32>
    %43 = arith.truncf %42 : vector<4x512xf32> to vector<4x512xbf16>
    %c1 = arith.constant 1 : index
    %c0_20 = arith.constant 0 : index
    %c0_21 = arith.constant 0 : index
    %44 = vector.load %arg2[%c1, %c0_20, %c0_21] : memref<9x12x4xbf16, #tpu.memory_space<vmem>>, vector<1x12x4xbf16>
    %45 = vector.shape_cast %44 : vector<1x12x4xbf16> to vector<12x4xbf16>
    %cst_22 = arith.constant dense<0.000000e+00> : vector<12x512xf32>
    %46 = tpu.matmul %45, %43, %cst_22 {dimension_numbers = #tpu.dot_dimension_numbers<[1], [0], [0], [1], [0, 0, 1, 1], [], []>} : vector<12x4xbf16>, vector<4x512xbf16>, vector<12x512xf32> -> vector<12x512xf32>
    %47 = arith.addf %38, %46 : vector<12x512xf32>
    %c15_i32 = arith.constant 15 : i32
    %48 = tpu.dynamic_rotate %30 by %c15_i32 dim 1 : vector<4x512xf32>, i32 -> vector<4x512xf32>
    %49 = vector.extract_strided_slice %2 {offsets = [2, 0], sizes = [1, 512], strides = [1, 1]} : vector<9x512xf32> to vector<1x512xf32>
    %50 = vector.broadcast %49 : vector<1x512xf32> to vector<4x512xf32>
    %51 = arith.mulf %48, %50 : vector<4x512xf32>
    %52 = arith.truncf %51 : vector<4x512xf32> to vector<4x512xbf16>
    %c2 = arith.constant 2 : index
    %c0_23 = arith.constant 0 : index
    %c0_24 = arith.constant 0 : index
    %53 = vector.load %arg2[%c2, %c0_23, %c0_24] : memref<9x12x4xbf16, #tpu.memory_space<vmem>>, vector<1x12x4xbf16>
    %54 = vector.shape_cast %53 : vector<1x12x4xbf16> to vector<12x4xbf16>
    %cst_25 = arith.constant dense<0.000000e+00> : vector<12x512xf32>
    %55 = tpu.matmul %54, %52, %cst_25 {dimension_numbers = #tpu.dot_dimension_numbers<[1], [0], [0], [1], [0, 0, 1, 1], [], []>} : vector<12x4xbf16>, vector<4x512xbf16>, vector<12x512xf32> -> vector<12x512xf32>
    %56 = arith.addf %47, %55 : vector<12x512xf32>
    %c1_i32 = arith.constant 1 : i32
    %57 = tpu.dynamic_rotate %30 by %c1_i32 dim 1 : vector<4x512xf32>, i32 -> vector<4x512xf32>
    %58 = vector.extract_strided_slice %2 {offsets = [3, 0], sizes = [1, 512], strides = [1, 1]} : vector<9x512xf32> to vector<1x512xf32>
    %59 = vector.broadcast %58 : vector<1x512xf32> to vector<4x512xf32>
    %60 = arith.mulf %57, %59 : vector<4x512xf32>
    %61 = arith.truncf %60 : vector<4x512xf32> to vector<4x512xbf16>
    %c3 = arith.constant 3 : index
    %c0_26 = arith.constant 0 : index
    %c0_27 = arith.constant 0 : index
    %62 = vector.load %arg2[%c3, %c0_26, %c0_27] : memref<9x12x4xbf16, #tpu.memory_space<vmem>>, vector<1x12x4xbf16>
    %63 = vector.shape_cast %62 : vector<1x12x4xbf16> to vector<12x4xbf16>
    %cst_28 = arith.constant dense<0.000000e+00> : vector<12x512xf32>
    %64 = tpu.matmul %63, %61, %cst_28 {dimension_numbers = #tpu.dot_dimension_numbers<[1], [0], [0], [1], [0, 0, 1, 1], [], []>} : vector<12x4xbf16>, vector<4x512xbf16>, vector<12x512xf32> -> vector<12x512xf32>
    %65 = arith.addf %56, %64 : vector<12x512xf32>
    %66 = vector.extract_strided_slice %2 {offsets = [4, 0], sizes = [1, 512], strides = [1, 1]} : vector<9x512xf32> to vector<1x512xf32>
    %67 = vector.broadcast %66 : vector<1x512xf32> to vector<4x512xf32>
    %68 = arith.mulf %30, %67 : vector<4x512xf32>
    %69 = arith.truncf %68 : vector<4x512xf32> to vector<4x512xbf16>
    %c4 = arith.constant 4 : index
    %c0_29 = arith.constant 0 : index
    %c0_30 = arith.constant 0 : index
    %70 = vector.load %arg2[%c4, %c0_29, %c0_30] : memref<9x12x4xbf16, #tpu.memory_space<vmem>>, vector<1x12x4xbf16>
    %71 = vector.shape_cast %70 : vector<1x12x4xbf16> to vector<12x4xbf16>
    %cst_31 = arith.constant dense<0.000000e+00> : vector<12x512xf32>
    %72 = tpu.matmul %71, %69, %cst_31 {dimension_numbers = #tpu.dot_dimension_numbers<[1], [0], [0], [1], [0, 0, 1, 1], [], []>} : vector<12x4xbf16>, vector<4x512xbf16>, vector<12x512xf32> -> vector<12x512xf32>
    %73 = arith.addf %65, %72 : vector<12x512xf32>
    %c511_i32 = arith.constant 511 : i32
    %74 = tpu.dynamic_rotate %30 by %c511_i32 dim 1 : vector<4x512xf32>, i32 -> vector<4x512xf32>
    %75 = vector.extract_strided_slice %2 {offsets = [5, 0], sizes = [1, 512], strides = [1, 1]} : vector<9x512xf32> to vector<1x512xf32>
    %76 = vector.broadcast %75 : vector<1x512xf32> to vector<4x512xf32>
    %77 = arith.mulf %74, %76 : vector<4x512xf32>
    %78 = arith.truncf %77 : vector<4x512xf32> to vector<4x512xbf16>
    %c5 = arith.constant 5 : index
    %c0_32 = arith.constant 0 : index
    %c0_33 = arith.constant 0 : index
    %79 = vector.load %arg2[%c5, %c0_32, %c0_33] : memref<9x12x4xbf16, #tpu.memory_space<vmem>>, vector<1x12x4xbf16>
    %80 = vector.shape_cast %79 : vector<1x12x4xbf16> to vector<12x4xbf16>
    %cst_34 = arith.constant dense<0.000000e+00> : vector<12x512xf32>
    %81 = tpu.matmul %80, %78, %cst_34 {dimension_numbers = #tpu.dot_dimension_numbers<[1], [0], [0], [1], [0, 0, 1, 1], [], []>} : vector<12x4xbf16>, vector<4x512xbf16>, vector<12x512xf32> -> vector<12x512xf32>
    %82 = arith.addf %73, %81 : vector<12x512xf32>
    %c497_i32 = arith.constant 497 : i32
    %83 = tpu.dynamic_rotate %30 by %c497_i32 dim 1 : vector<4x512xf32>, i32 -> vector<4x512xf32>
    %84 = vector.extract_strided_slice %2 {offsets = [6, 0], sizes = [1, 512], strides = [1, 1]} : vector<9x512xf32> to vector<1x512xf32>
    %85 = vector.broadcast %84 : vector<1x512xf32> to vector<4x512xf32>
    %86 = arith.mulf %83, %85 : vector<4x512xf32>
    %87 = arith.truncf %86 : vector<4x512xf32> to vector<4x512xbf16>
    %c6 = arith.constant 6 : index
    %c0_35 = arith.constant 0 : index
    %c0_36 = arith.constant 0 : index
    %88 = vector.load %arg2[%c6, %c0_35, %c0_36] : memref<9x12x4xbf16, #tpu.memory_space<vmem>>, vector<1x12x4xbf16>
    %89 = vector.shape_cast %88 : vector<1x12x4xbf16> to vector<12x4xbf16>
    %cst_37 = arith.constant dense<0.000000e+00> : vector<12x512xf32>
    %90 = tpu.matmul %89, %87, %cst_37 {dimension_numbers = #tpu.dot_dimension_numbers<[1], [0], [0], [1], [0, 0, 1, 1], [], []>} : vector<12x4xbf16>, vector<4x512xbf16>, vector<12x512xf32> -> vector<12x512xf32>
    %91 = arith.addf %82, %90 : vector<12x512xf32>
    %c496_i32 = arith.constant 496 : i32
    %92 = tpu.dynamic_rotate %30 by %c496_i32 dim 1 : vector<4x512xf32>, i32 -> vector<4x512xf32>
    %93 = vector.extract_strided_slice %2 {offsets = [7, 0], sizes = [1, 512], strides = [1, 1]} : vector<9x512xf32> to vector<1x512xf32>
    %94 = vector.broadcast %93 : vector<1x512xf32> to vector<4x512xf32>
    %95 = arith.mulf %92, %94 : vector<4x512xf32>
    %96 = arith.truncf %95 : vector<4x512xf32> to vector<4x512xbf16>
    %c7 = arith.constant 7 : index
    %c0_38 = arith.constant 0 : index
    %c0_39 = arith.constant 0 : index
    %97 = vector.load %arg2[%c7, %c0_38, %c0_39] : memref<9x12x4xbf16, #tpu.memory_space<vmem>>, vector<1x12x4xbf16>
    %98 = vector.shape_cast %97 : vector<1x12x4xbf16> to vector<12x4xbf16>
    %cst_40 = arith.constant dense<0.000000e+00> : vector<12x512xf32>
    %99 = tpu.matmul %98, %96, %cst_40 {dimension_numbers = #tpu.dot_dimension_numbers<[1], [0], [0], [1], [0, 0, 1, 1], [], []>} : vector<12x4xbf16>, vector<4x512xbf16>, vector<12x512xf32> -> vector<12x512xf32>
    %100 = arith.addf %91, %99 : vector<12x512xf32>
    %c495_i32 = arith.constant 495 : i32
    %101 = tpu.dynamic_rotate %30 by %c495_i32 dim 1 : vector<4x512xf32>, i32 -> vector<4x512xf32>
    %102 = vector.extract_strided_slice %2 {offsets = [8, 0], sizes = [1, 512], strides = [1, 1]} : vector<9x512xf32> to vector<1x512xf32>
    %103 = vector.broadcast %102 : vector<1x512xf32> to vector<4x512xf32>
    %104 = arith.mulf %101, %103 : vector<4x512xf32>
    %105 = arith.truncf %104 : vector<4x512xf32> to vector<4x512xbf16>
    %c8 = arith.constant 8 : index
    %c0_41 = arith.constant 0 : index
    %c0_42 = arith.constant 0 : index
    %106 = vector.load %arg2[%c8, %c0_41, %c0_42] : memref<9x12x4xbf16, #tpu.memory_space<vmem>>, vector<1x12x4xbf16>
    %107 = vector.shape_cast %106 : vector<1x12x4xbf16> to vector<12x4xbf16>
    %cst_43 = arith.constant dense<0.000000e+00> : vector<12x512xf32>
    %108 = tpu.matmul %107, %105, %cst_43 {dimension_numbers = #tpu.dot_dimension_numbers<[1], [0], [0], [1], [0, 0, 1, 1], [], []>} : vector<12x4xbf16>, vector<4x512xbf16>, vector<12x512xf32> -> vector<12x512xf32>
    %109 = arith.addf %100, %108 : vector<12x512xf32>
    %c12 = arith.constant 12 : index
    %c0_44 = arith.constant 0 : index
    %110 = vector.load %arg8[%c12, %c0_44] : memref<28x512xf32, #tpu.memory_space<vmem>>, vector<12x512xf32>
    tpu.vector_store %arg8[%c12, %c0_44], %109 {strides = array<i32>} : memref<28x512xf32, #tpu.memory_space<vmem>>, vector<12x512xf32>,
    %c12_45 = arith.constant 12 : index
    %c0_46 = arith.constant 0 : index
    %111 = vector.load %arg8[%c12_45, %c0_46] : memref<28x512xf32, #tpu.memory_space<vmem>>, vector<16x512xf32>
    %cst_47 = arith.constant dense<0.000000e+00> : vector<16xf32>
    %112 = vector.multi_reduction <add>, %111, %cst_47 [1] : vector<16x512xf32> to vector<16xf32>
    %113 = vector.shape_cast %112 : vector<16xf32> to vector<16x1xf32>
    %114 = arith.mulf %111, %111 : vector<16x512xf32>
    %cst_48 = arith.constant dense<0.000000e+00> : vector<16xf32>
    %115 = vector.multi_reduction <add>, %114, %cst_48 [1] : vector<16x512xf32> to vector<16xf32>
    %116 = vector.shape_cast %115 : vector<16xf32> to vector<16x1xf32>
    %cst_49 = arith.constant 0.001953125 : f32
    %117 = vector.broadcast %cst_49 : f32 to vector<16x1xf32>
    %118 = arith.mulf %113, %117 : vector<16x1xf32>
    %cst_50 = arith.constant 0.001953125 : f32
    %119 = vector.broadcast %cst_50 : f32 to vector<16x1xf32>
    %120 = arith.mulf %116, %119 : vector<16x1xf32>
    %121 = arith.mulf %118, %118 : vector<16x1xf32>
    %122 = arith.subf %120, %121 : vector<16x1xf32>
    %cst_51 = arith.constant 0.000000e+00 : f32
    %123 = vector.broadcast %cst_51 : f32 to vector<16x1xf32>
    %124 = arith.maximumf %122, %123 : vector<16x1xf32>
    %c0_52 = arith.constant 0 : index
    %c0_53 = arith.constant 0 : index
    %125 = vector.load %arg6[%c0_52, %c0_53] : memref<16x1xf32, #tpu.memory_space<vmem>>, vector<16x1xf32>
    %cst_54 = arith.constant 9.99999974E-6 : f32
    %126 = vector.broadcast %cst_54 : f32 to vector<16x1xf32>
    %127 = arith.addf %124, %126 : vector<16x1xf32>
    %128 = math.rsqrt %127 : vector<16x1xf32>
    %129 = arith.mulf %125, %128 : vector<16x1xf32>
    %c0_55 = arith.constant 0 : index
    %c0_56 = arith.constant 0 : index
    %130 = vector.load %arg7[%c0_55, %c0_56] : memref<16x1xf32, #tpu.memory_space<vmem>>, vector<16x1xf32>
    %131 = arith.mulf %118, %129 : vector<16x1xf32>
    %132 = arith.subf %130, %131 : vector<16x1xf32>
    %133 = vector.broadcast %129 : vector<16x1xf32> to vector<16x512xf32>
    %134 = arith.mulf %111, %133 : vector<16x512xf32>
    %135 = vector.broadcast %132 : vector<16x1xf32> to vector<16x512xf32>
    %136 = arith.addf %134, %135 : vector<16x512xf32>
    %cst_57 = arith.constant 0.000000e+00 : f32
    %137 = vector.broadcast %cst_57 : f32 to vector<16x512xf32>
    %138 = arith.maximumf %136, %137 : vector<16x512xf32>
    %c17_i32_58 = arith.constant 17 : i32
    %139 = tpu.dynamic_rotate %138 by %c17_i32_58 dim 1 : vector<16x512xf32>, i32 -> vector<16x512xf32>
    %140 = vector.extract_strided_slice %2 {offsets = [0, 0], sizes = [1, 512], strides = [1, 1]} : vector<9x512xf32> to vector<1x512xf32>
    %141 = vector.broadcast %140 : vector<1x512xf32> to vector<16x512xf32>
    %142 = arith.mulf %139, %141 : vector<16x512xf32>
    %143 = arith.truncf %142 : vector<16x512xf32> to vector<16x512xbf16>
    %c0_59 = arith.constant 0 : index
    %c0_60 = arith.constant 0 : index
    %c0_61 = arith.constant 0 : index
    %144 = vector.load %arg5[%c0_59, %c0_60, %c0_61] : memref<9x12x16xbf16, #tpu.memory_space<vmem>>, vector<1x12x16xbf16>
    %145 = vector.shape_cast %144 : vector<1x12x16xbf16> to vector<12x16xbf16>
    %cst_62 = arith.constant dense<0.000000e+00> : vector<12x512xf32>
    %146 = tpu.matmul %145, %143, %cst_62 {dimension_numbers = #tpu.dot_dimension_numbers<[1], [0], [0], [1], [0, 0, 1, 1], [], []>} : vector<12x16xbf16>, vector<16x512xbf16>, vector<12x512xf32> -> vector<12x512xf32>
    %c16_i32_63 = arith.constant 16 : i32
    %147 = tpu.dynamic_rotate %138 by %c16_i32_63 dim 1 : vector<16x512xf32>, i32 -> vector<16x512xf32>
    %148 = vector.extract_strided_slice %2 {offsets = [1, 0], sizes = [1, 512], strides = [1, 1]} : vector<9x512xf32> to vector<1x512xf32>
    %149 = vector.broadcast %148 : vector<1x512xf32> to vector<16x512xf32>
    %150 = arith.mulf %147, %149 : vector<16x512xf32>
    %151 = arith.truncf %150 : vector<16x512xf32> to vector<16x512xbf16>
    %c1_64 = arith.constant 1 : index
    %c0_65 = arith.constant 0 : index
    %c0_66 = arith.constant 0 : index
    %152 = vector.load %arg5[%c1_64, %c0_65, %c0_66] : memref<9x12x16xbf16, #tpu.memory_space<vmem>>, vector<1x12x16xbf16>
    %153 = vector.shape_cast %152 : vector<1x12x16xbf16> to vector<12x16xbf16>
    %cst_67 = arith.constant dense<0.000000e+00> : vector<12x512xf32>
    %154 = tpu.matmul %153, %151, %cst_67 {dimension_numbers = #tpu.dot_dimension_numbers<[1], [0], [0], [1], [0, 0, 1, 1], [], []>} : vector<12x16xbf16>, vector<16x512xbf16>, vector<12x512xf32> -> vector<12x512xf32>
    %155 = arith.addf %146, %154 : vector<12x512xf32>
    %c15_i32_68 = arith.constant 15 : i32
    %156 = tpu.dynamic_rotate %138 by %c15_i32_68 dim 1 : vector<16x512xf32>, i32 -> vector<16x512xf32>
    %157 = vector.extract_strided_slice %2 {offsets = [2, 0], sizes = [1, 512], strides = [1, 1]} : vector<9x512xf32> to vector<1x512xf32>
    %158 = vector.broadcast %157 : vector<1x512xf32> to vector<16x512xf32>
    %159 = arith.mulf %156, %158 : vector<16x512xf32>
    %160 = arith.truncf %159 : vector<16x512xf32> to vector<16x512xbf16>
    %c2_69 = arith.constant 2 : index
    %c0_70 = arith.constant 0 : index
    %c0_71 = arith.constant 0 : index
    %161 = vector.load %arg5[%c2_69, %c0_70, %c0_71] : memref<9x12x16xbf16, #tpu.memory_space<vmem>>, vector<1x12x16xbf16>
    %162 = vector.shape_cast %161 : vector<1x12x16xbf16> to vector<12x16xbf16>
    %cst_72 = arith.constant dense<0.000000e+00> : vector<12x512xf32>
    %163 = tpu.matmul %162, %160, %cst_72 {dimension_numbers = #tpu.dot_dimension_numbers<[1], [0], [0], [1], [0, 0, 1, 1], [], []>} : vector<12x16xbf16>, vector<16x512xbf16>, vector<12x512xf32> -> vector<12x512xf32>
    %164 = arith.addf %155, %163 : vector<12x512xf32>
    %c1_i32_73 = arith.constant 1 : i32
    %165 = tpu.dynamic_rotate %138 by %c1_i32_73 dim 1 : vector<16x512xf32>, i32 -> vector<16x512xf32>
    %166 = vector.extract_strided_slice %2 {offsets = [3, 0], sizes = [1, 512], strides = [1, 1]} : vector<9x512xf32> to vector<1x512xf32>
    %167 = vector.broadcast %166 : vector<1x512xf32> to vector<16x512xf32>
    %168 = arith.mulf %165, %167 : vector<16x512xf32>
    %169 = arith.truncf %168 : vector<16x512xf32> to vector<16x512xbf16>
    %c3_74 = arith.constant 3 : index
    %c0_75 = arith.constant 0 : index
    %c0_76 = arith.constant 0 : index
    %170 = vector.load %arg5[%c3_74, %c0_75, %c0_76] : memref<9x12x16xbf16, #tpu.memory_space<vmem>>, vector<1x12x16xbf16>
    %171 = vector.shape_cast %170 : vector<1x12x16xbf16> to vector<12x16xbf16>
    %cst_77 = arith.constant dense<0.000000e+00> : vector<12x512xf32>
    %172 = tpu.matmul %171, %169, %cst_77 {dimension_numbers = #tpu.dot_dimension_numbers<[1], [0], [0], [1], [0, 0, 1, 1], [], []>} : vector<12x16xbf16>, vector<16x512xbf16>, vector<12x512xf32> -> vector<12x512xf32>
    %173 = arith.addf %164, %172 : vector<12x512xf32>
    %174 = vector.extract_strided_slice %2 {offsets = [4, 0], sizes = [1, 512], strides = [1, 1]} : vector<9x512xf32> to vector<1x512xf32>
    %175 = vector.broadcast %174 : vector<1x512xf32> to vector<16x512xf32>
    %176 = arith.mulf %138, %175 : vector<16x512xf32>
    %177 = arith.truncf %176 : vector<16x512xf32> to vector<16x512xbf16>
    %c4_78 = arith.constant 4 : index
    %c0_79 = arith.constant 0 : index
    %c0_80 = arith.constant 0 : index
    %178 = vector.load %arg5[%c4_78, %c0_79, %c0_80] : memref<9x12x16xbf16, #tpu.memory_space<vmem>>, vector<1x12x16xbf16>
    %179 = vector.shape_cast %178 : vector<1x12x16xbf16> to vector<12x16xbf16>
    %cst_81 = arith.constant dense<0.000000e+00> : vector<12x512xf32>
    %180 = tpu.matmul %179, %177, %cst_81 {dimension_numbers = #tpu.dot_dimension_numbers<[1], [0], [0], [1], [0, 0, 1, 1], [], []>} : vector<12x16xbf16>, vector<16x512xbf16>, vector<12x512xf32> -> vector<12x512xf32>
    %181 = arith.addf %173, %180 : vector<12x512xf32>
    %c511_i32_82 = arith.constant 511 : i32
    %182 = tpu.dynamic_rotate %138 by %c511_i32_82 dim 1 : vector<16x512xf32>, i32 -> vector<16x512xf32>
    %183 = vector.extract_strided_slice %2 {offsets = [5, 0], sizes = [1, 512], strides = [1, 1]} : vector<9x512xf32> to vector<1x512xf32>
    %184 = vector.broadcast %183 : vector<1x512xf32> to vector<16x512xf32>
    %185 = arith.mulf %182, %184 : vector<16x512xf32>
    %186 = arith.truncf %185 : vector<16x512xf32> to vector<16x512xbf16>
    %c5_83 = arith.constant 5 : index
    %c0_84 = arith.constant 0 : index
    %c0_85 = arith.constant 0 : index
    %187 = vector.load %arg5[%c5_83, %c0_84, %c0_85] : memref<9x12x16xbf16, #tpu.memory_space<vmem>>, vector<1x12x16xbf16>
    %188 = vector.shape_cast %187 : vector<1x12x16xbf16> to vector<12x16xbf16>
    %cst_86 = arith.constant dense<0.000000e+00> : vector<12x512xf32>
    %189 = tpu.matmul %188, %186, %cst_86 {dimension_numbers = #tpu.dot_dimension_numbers<[1], [0], [0], [1], [0, 0, 1, 1], [], []>} : vector<12x16xbf16>, vector<16x512xbf16>, vector<12x512xf32> -> vector<12x512xf32>
    %190 = arith.addf %181, %189 : vector<12x512xf32>
    %c497_i32_87 = arith.constant 497 : i32
    %191 = tpu.dynamic_rotate %138 by %c497_i32_87 dim 1 : vector<16x512xf32>, i32 -> vector<16x512xf32>
    %192 = vector.extract_strided_slice %2 {offsets = [6, 0], sizes = [1, 512], strides = [1, 1]} : vector<9x512xf32> to vector<1x512xf32>
    %193 = vector.broadcast %192 : vector<1x512xf32> to vector<16x512xf32>
    %194 = arith.mulf %191, %193 : vector<16x512xf32>
    %195 = arith.truncf %194 : vector<16x512xf32> to vector<16x512xbf16>
    %c6_88 = arith.constant 6 : index
    %c0_89 = arith.constant 0 : index
    %c0_90 = arith.constant 0 : index
    %196 = vector.load %arg5[%c6_88, %c0_89, %c0_90] : memref<9x12x16xbf16, #tpu.memory_space<vmem>>, vector<1x12x16xbf16>
    %197 = vector.shape_cast %196 : vector<1x12x16xbf16> to vector<12x16xbf16>
    %cst_91 = arith.constant dense<0.000000e+00> : vector<12x512xf32>
    %198 = tpu.matmul %197, %195, %cst_91 {dimension_numbers = #tpu.dot_dimension_numbers<[1], [0], [0], [1], [0, 0, 1, 1], [], []>} : vector<12x16xbf16>, vector<16x512xbf16>, vector<12x512xf32> -> vector<12x512xf32>
    %199 = arith.addf %190, %198 : vector<12x512xf32>
    %c496_i32_92 = arith.constant 496 : i32
    %200 = tpu.dynamic_rotate %138 by %c496_i32_92 dim 1 : vector<16x512xf32>, i32 -> vector<16x512xf32>
    %201 = vector.extract_strided_slice %2 {offsets = [7, 0], sizes = [1, 512], strides = [1, 1]} : vector<9x512xf32> to vector<1x512xf32>
    %202 = vector.broadcast %201 : vector<1x512xf32> to vector<16x512xf32>
    %203 = arith.mulf %200, %202 : vector<16x512xf32>
    %204 = arith.truncf %203 : vector<16x512xf32> to vector<16x512xbf16>
    %c7_93 = arith.constant 7 : index
    %c0_94 = arith.constant 0 : index
    %c0_95 = arith.constant 0 : index
    %205 = vector.load %arg5[%c7_93, %c0_94, %c0_95] : memref<9x12x16xbf16, #tpu.memory_space<vmem>>, vector<1x12x16xbf16>
    %206 = vector.shape_cast %205 : vector<1x12x16xbf16> to vector<12x16xbf16>
    %cst_96 = arith.constant dense<0.000000e+00> : vector<12x512xf32>
    %207 = tpu.matmul %206, %204, %cst_96 {dimension_numbers = #tpu.dot_dimension_numbers<[1], [0], [0], [1], [0, 0, 1, 1], [], []>} : vector<12x16xbf16>, vector<16x512xbf16>, vector<12x512xf32> -> vector<12x512xf32>
    %208 = arith.addf %199, %207 : vector<12x512xf32>
    %c495_i32_97 = arith.constant 495 : i32
    %209 = tpu.dynamic_rotate %138 by %c495_i32_97 dim 1 : vector<16x512xf32>, i32 -> vector<16x512xf32>
    %210 = vector.extract_strided_slice %2 {offsets = [8, 0], sizes = [1, 512], strides = [1, 1]} : vector<9x512xf32> to vector<1x512xf32>
    %211 = vector.broadcast %210 : vector<1x512xf32> to vector<16x512xf32>
    %212 = arith.mulf %209, %211 : vector<16x512xf32>
    %213 = arith.truncf %212 : vector<16x512xf32> to vector<16x512xbf16>
    %c8_98 = arith.constant 8 : index
    %c0_99 = arith.constant 0 : index
    %c0_100 = arith.constant 0 : index
    %214 = vector.load %arg5[%c8_98, %c0_99, %c0_100] : memref<9x12x16xbf16, #tpu.memory_space<vmem>>, vector<1x12x16xbf16>
    %215 = vector.shape_cast %214 : vector<1x12x16xbf16> to vector<12x16xbf16>
    %cst_101 = arith.constant dense<0.000000e+00> : vector<12x512xf32>
    %216 = tpu.matmul %215, %213, %cst_101 {dimension_numbers = #tpu.dot_dimension_numbers<[1], [0], [0], [1], [0, 0, 1, 1], [], []>} : vector<12x16xbf16>, vector<16x512xbf16>, vector<12x512xf32> -> vector<12x512xf32>
    %217 = arith.addf %208, %216 : vector<12x512xf32>
    %c0_102 = arith.constant 0 : index
    %c0_103 = arith.constant 0 : index
    %218 = vector.load %arg8[%c0_102, %c0_103] : memref<28x512xf32, #tpu.memory_space<vmem>>, vector<12x512xf32>
    tpu.vector_store %arg8[%c0_102, %c0_103], %217 {strides = array<i32>} : memref<28x512xf32, #tpu.memory_space<vmem>>, vector<12x512xf32>,
    return
  }
}

</mosaic_0001>

<llo_original>
// kernel: dense_block_forward.1
$region0: #{dense_block_forward.1}
  #allocation0 [shape = 'u32[]', space=smem, size = 0x4, offset = 0x4, fixed_abs, tag = 'smem constant byte address 0x4 - core index']
  #allocation1 [shape = 'u32[144,128]{1,0:T(1,128)}', space=vmem, size = 0x12000, scoped, tag = 'internal scratch']
  %s0 = inlined_call_operand.vmem [shape: f32[4,512], index: 0, kind: input, shape index: {}]
  %s1 = inlined_call_operand.vmem [shape: f32[9,512], index: 1, kind: input, shape index: {}]
  %s2 = inlined_call_operand.vmem [shape: bf16[9,12,4], index: 2, kind: input, shape index: {}]
  %s3 = inlined_call_operand.vmem [shape: f32[4,1], index: 3, kind: input, shape index: {}]
  %s4 = inlined_call_operand.vmem [shape: f32[4,1], index: 4, kind: input, shape index: {}]
  %s5 = inlined_call_operand.vmem [shape: bf16[9,12,16], index: 5, kind: input, shape index: {}]
  %s6 = inlined_call_operand.vmem [shape: f32[16,1], index: 6, kind: input, shape index: {}]
  %s7 = inlined_call_operand.vmem [shape: f32[16,1], index: 7, kind: input, shape index: {}]
  %s8 = inlined_call_operand.vmem [shape: f32[28,512], index: 8, kind: output, shape index: {}]
  %s9 = sld [smem:[#allocation0]]
  $region42: #{dense_block_forward.1} parent=0
    _
  %s11 = ssub.s32 1, %s9
  %s12 = scalar_select 0, %s11, %s9
  // Predicated region
  $region2: #{dense_block_forward.1} parent=0 // pred_check
    _
  $region3: #{dense_block_forward.1} parent=0 // pred_check_branch
    %14 = sbr.rel (0) target = $region5
  $region4: #{dense_block_forward.1} parent=0 // pred_region
    _
  $region5: #{dense_block_forward.1} parent=0 // pred_fallthru
    _
  // Predicated region
  $region6: #{dense_block_forward.1} parent=0 // pred_check
    _
  $region7: #{dense_block_forward.1} parent=0 // pred_check_branch
    %16 = sbr.rel (0) target = $region9
  $region8: #{dense_block_forward.1} parent=0 // pred_region
    _
  $region9: #{dense_block_forward.1} parent=0 // pred_fallthru
    _
  // Predicated region
  $region10: #{dense_block_forward.1} parent=0 // pred_check
    _
  $region11: #{dense_block_forward.1} parent=0 // pred_check_branch
    %18 = sbr.rel (0) target = $region13
  $region12: #{dense_block_forward.1} parent=0 // pred_region
    _
  $region13: #{dense_block_forward.1} parent=0 // pred_fallthru
    _
  // Predicated region
  $region14: #{dense_block_forward.1} parent=0 // pred_check
    _
  $region15: #{dense_block_forward.1} parent=0 // pred_check_branch
    %20 = sbr.rel (0) target = $region17
  $region16: #{dense_block_forward.1} parent=0 // pred_region
    _
  $region17: #{dense_block_forward.1} parent=0 // pred_fallthru
    _
  // Predicated region
  $region18: #{dense_block_forward.1} parent=0 // pred_check
    _
  $region19: #{dense_block_forward.1} parent=0 // pred_check_branch
    %22 = sbr.rel (0) target = $region21
  $region20: #{dense_block_forward.1} parent=0 // pred_region
    _
  $region21: #{dense_block_forward.1} parent=0 // pred_fallthru
    _
  // Predicated region
  $region22: #{dense_block_forward.1} parent=0 // pred_check
    _
  $region23: #{dense_block_forward.1} parent=0 // pred_check_branch
    %24 = sbr.rel (0) target = $region25
  $region24: #{dense_block_forward.1} parent=0 // pred_region
    _
  $region25: #{dense_block_forward.1} parent=0 // pred_fallthru
    _
  // Predicated region
  $region26: #{dense_block_forward.1} parent=0 // pred_check
    _
  $region27: #{dense_block_forward.1} parent=0 // pred_check_branch
    %26 = sbr.rel (0) target = $region29
  $region28: #{dense_block_forward.1} parent=0 // pred_region
    _
  $region29: #{dense_block_forward.1} parent=0 // pred_fallthru
    _
  // Predicated region
  $region30: #{dense_block_forward.1} parent=0 // pred_check
    _
  $region31: #{dense_block_forward.1} parent=0 // pred_check_branch
    %28 = sbr.rel (0) target = $region33
  $region32: #{dense_block_forward.1} parent=0 // pred_region
    _
  $region33: #{dense_block_forward.1} parent=0 // pred_fallthru
    _
  %v30 = vld [vmem:[%s0] sm:$0xff]
  %v31 = vld [vmem:[%s0 + $0x8] sm:$0xff]
  %v34 = vcombine.high %v30, %v30
  %v35 = vcombine.high %v31, %v31
  %38 = vst [vmem:[%s8 + $0x60] sm:$0xf] %v30
  %39 = vst [vmem:[%s8 + $0x68] sm:$0xf] %v34
  %40 = vst [vmem:[%s8 + $0x70] sm:$0xf] %v31
  %41 = vst [vmem:[%s8 + $0x78] sm:$0xf] %v35
  %v42 = vld [vmem:[%s1] sm:$0xff]
  %v43 = vld [vmem:[%s1 + $0x8] sm:$0xff]
  %v44 = vld [vmem:[%s1 + $0x10] sm:$0xff]
  %v45 = vld [vmem:[%s1 + $0x18] sm:$0xff]
  %v46 = vld [vmem:[%s1 + $0x20] sm:$0x1]
  %v47 = vld [vmem:[%s1 + $0x28] sm:$0x1]
  %v48 = vld [vmem:[%s1 + $0x30] sm:$0x1]
  %v49 = vld [vmem:[%s1 + $0x38] sm:$0x1]
  %v50 = vld [vmem:[%s8 + $0x60] sm:$0xf]
  %v51 = vld [vmem:[%s8 + $0x68] sm:$0xf]
  %v52 = vld [vmem:[%s8 + $0x70] sm:$0xf]
  %v53 = vld [vmem:[%s8 + $0x78] sm:$0xf]
  %vm54 = vcmask 1043456
  %v55 = vsel %vm54, %v50, 0.0
  %v56 = vsel %vm54, %v51, 0.0
  %v57 = vadd.f32 %v55, %v56
  %v58 = vsel %vm54, %v52, 0.0
  %v59 = vadd.f32 %v57, %v58
  %v60 = vsel %vm54, %v53, 0.0
  %v61 = vadd.f32 %v59, %v60
  %62 = vadd.xlane.f32.xlu0 %v61
  %v63 = vpop.xlane.xlu0 %62
  %v64 = vmul.f32 %v50, %v50
  %v65 = vmul.f32 %v51, %v51
  %v66 = vmul.f32 %v52, %v52
  %v67 = vmul.f32 %v53, %v53
  %v68 = vsel %vm54, %v64, 0.0
  %v69 = vsel %vm54, %v65, 0.0
  %v70 = vadd.f32 %v68, %v69
  %v71 = vsel %vm54, %v66, 0.0
  %v72 = vadd.f32 %v70, %v71
  %v73 = vsel %vm54, %v67, 0.0
  %v74 = vadd.f32 %v72, %v73
  %75 = vadd.xlane.f32.xlu0 %v74
  %v76 = vpop.xlane.xlu0 %75
  %v77 = vmul.f32 %v63, 0.001953125
  %v78 = vmul.f32 %v76, 0.001953125
  %v79 = vmul.f32 %v77, %v77
  %v80 = vsub.f32 %v78, %v79
  %v81 = vmax.f32 %v80, 0.0
  %v82 = vld [vmem:[%s3] sm:$0xf]
  %v83 = vadd.f32 %v81, 1e-05
  %v84 = vrsqrt.pop %v83
  %v85 = vmul.f32 %v82, %v84
  %v86 = vld [vmem:[%s4] sm:$0xf]
  %v87 = vmul.f32 %v77, %v85
  %v88 = vsub.f32 %v86, %v87
  %90 = vset.pattern.permute.xlu0 0
  %91 = vperm.xlu0 %90, %v85
  %v92 = vpop.permute.xlu0 %91
  %v94 = vmul.f32 %v50, %v92
  %v95 = vmul.f32 %v51, %v92
  %v96 = vmul.f32 %v52, %v92
  %v97 = vmul.f32 %v53, %v92
  %99 = vset.pattern.permute.xlu0 0
  %100 = vperm.xlu0 %99, %v88
  %v101 = vpop.permute.xlu0 %100
  %v103 = vadd.f32 %v94, %v101
  %v104 = vadd.f32 %v95, %v101
  %v105 = vadd.f32 %v96, %v101
  %v106 = vadd.f32 %v97, %v101
  %v107 = vmax.f32 %v103, 0.0
  %v108 = vmax.f32 %v104, 0.0
  %v109 = vmax.f32 %v105, 0.0
  %v110 = vmax.f32 %v106, 0.0
  %111 = vrot.lane.b32.xlu0 %v107, 17
  %v112 = vpop.permute.xlu0 %111
  %113 = vrot.lane.b32.xlu0 %v108, 17
  %v114 = vpop.permute.xlu0 %113
  %115 = vrot.lane.b32.xlu0 %v109, 17
  %v116 = vpop.permute.xlu0 %115
  %117 = vrot.lane.b32.xlu0 %v110, 17
  %v118 = vpop.permute.xlu0 %117
  %v119 = vlaneseq
  %v120 = vand.u32 %v119, 127
  %vm121 = vcmp.lt.s32.totalorder %v120, 17
  %v122 = vsel %vm121, %v116, %v118
  %v123 = vsel %vm121, %v114, %v116
  %v124 = vsel %vm121, %v112, %v114
  %v125 = vsel %vm121, %v118, %v112
  %v126 = vlaneseq
  %v127 = vshrl.u32 %v126, 7
  %v128 = vsub.s32 0, %v127
  %v129 = vrot.slane %v42, %v128
  %v130 = vlaneseq
  %v131 = vshrl.u32 %v130, 7
  %v132 = vsub.s32 0, %v131
  %v133 = vrot.slane %v43, %v132
  %v134 = vlaneseq
  %v135 = vshrl.u32 %v134, 7
  %v136 = vsub.s32 0, %v135
  %v137 = vrot.slane %v44, %v136
  %v138 = vlaneseq
  %v139 = vshrl.u32 %v138, 7
  %v140 = vsub.s32 0, %v139
  %v141 = vrot.slane %v45, %v140
  %v142 = vmul.f32 %v125, %v129
  %v143 = vmul.f32 %v124, %v133
  %v144 = vmul.f32 %v123, %v137
  %v145 = vmul.f32 %v122, %v141
  %v146 = vpack.c.bf16 %v142, %v142
  %v147 = vpack.c.bf16 %v143, %v143
  %v148 = vpack.c.bf16 %v144, %v144
  %v149 = vpack.c.bf16 %v145, %v145
  %v150 = vld [vmem:[%s2] sm:$0xf]
  %v151 = vld [vmem:[%s2 + $0x4] sm:$0x3]
  %152 = vrot.lane.b32.xlu0 %v107, 16
  %v153 = vpop.permute.xlu0 %152
  %154 = vrot.lane.b32.xlu0 %v108, 16
  %v155 = vpop.permute.xlu0 %154
  %156 = vrot.lane.b32.xlu0 %v109, 16
  %v157 = vpop.permute.xlu0 %156
  %158 = vrot.lane.b32.xlu0 %v110, 16
  %v159 = vpop.permute.xlu0 %158
  %vm160 = vcmp.lt.s32.totalorder %v120, 16
  %v161 = vsel %vm160, %v157, %v159
  %v162 = vsel %vm160, %v155, %v157
  %v163 = vsel %vm160, %v153, %v155
  %v164 = vsel %vm160, %v159, %v153
  %v165 = vlaneseq
  %v166 = vshrl.u32 %v165, 7
  %v167 = vsub.s32 1, %v166
  %v168 = vrot.slane %v42, %v167
  %v169 = vlaneseq
  %v170 = vshrl.u32 %v169, 7
  %v171 = vsub.s32 1, %v170
  %v172 = vrot.slane %v43, %v171
  %v173 = vlaneseq
  %v174 = vshrl.u32 %v173, 7
  %v175 = vsub.s32 1, %v174
  %v176 = vrot.slane %v44, %v175
  %v177 = vlaneseq
  %v178 = vshrl.u32 %v177, 7
  %v179 = vsub.s32 1, %v178
  %v180 = vrot.slane %v45, %v179
  %v181 = vmul.f32 %v164, %v168
  %v182 = vmul.f32 %v163, %v172
  %v183 = vmul.f32 %v162, %v176
  %v184 = vmul.f32 %v161, %v180
  %v185 = vpack.c.bf16 %v181, %v181
  %v186 = vpack.c.bf16 %v182, %v182
  %v187 = vpack.c.bf16 %v183, %v183
  %v188 = vpack.c.bf16 %v184, %v184
  %s189 = scalar_lea.vmem %s2, 8
  %v190 = vld [vmem:[%s189] sm:$0xf]
  %v191 = vld [vmem:[%s189 + $0x4] sm:$0x3]
  %v194 = vunpack.c.l.b16 %v190
  %v195 = vunpack.c.l.b16 %v191
  %v196 = vpack.c.b16 %v195, %v194
  %vm197 = vcmask 31744
  %v199 = vsel %vm197, %v196, 0
  %vm201 = vcmask 1041408
  %v203 = vsel %vm201, %v185, 0
  %v206 = vsel %vm201, %v186, 0
  %v209 = vsel %vm201, %v187, 0
  %v212 = vsel %vm201, %v188, 0
  %214 = vmatprep.subr.bf16.mxu0 %v206
  %215 = vmatpush1.bf16.msra.mxu0 %v203
  %216 = vmatprep.subr.bf16.mxu0 0
  %217 = vmatpush1.bf16.msra.mxu0 0
  %218 = vmatprep.subr.bf16.mxu0 0
  %219 = vmatpush1.bf16.msra.mxu0 0
  %220 = vmatprep.subr.bf16.mxu0 0
  %221 = vmatpush1.bf16.msra.mxu0 0
  %222 = vmatprep.subr.bf16.mxu0 0
  %223 = vmatpush1.bf16.msra.mxu0 0
  %224 = vmatprep.subr.bf16.mxu0 0
  %225 = vmatpush1.bf16.msra.mxu0 0
  %226 = vmatprep.subr.bf16.mxu0 0
  %227 = vmatpush1.bf16.msra.mxu0 0
  %228 = vmatprep.subr.bf16.mxu0 0
  %229 = vmatpush1.bf16.msra.mxu0 0
  %230 = vmatprep.subr.bf16.mxu0 0
  %231 = vmatpush1.bf16.msra.mxu0 0
  %232 = vmatprep.subr.bf16.mxu0 0
  %233 = vmatpush1.bf16.msra.mxu0 0
  %234 = vmatprep.subr.bf16.mxu0 0
  %235 = vmatpush1.bf16.msra.mxu0 0
  %236 = vmatprep.subr.bf16.mxu0 0
  %237 = vmatpush1.bf16.msra.mxu0 0
  %238 = vmatprep.subr.bf16.mxu0 0
  %239 = vmatpush1.bf16.msra.mxu0 0
  %240 = vmatprep.subr.bf16.mxu0 0
  %241 = vmatpush1.bf16.msra.mxu0 0
  %242 = vmatprep.subr.bf16.mxu0 0
  %243 = vmatpush1.bf16.msra.mxu0 0
  %244 = vmatprep.subr.bf16.mxu0 0
  %245 = vmatpush1.bf16.msra.mxu0 0
  %246 = vmatprep.mubr.bf16.mxu0 0
  %247 = vmatmul.mubr.bf16.gmra.mrb[0].mxu0 %v199
  %v248 = vpop.f32.mrb[0].mxu0
  %v249 = vadd.f32 0.0, %v248
  %v250 = vpop.f32.mrb[0].mxu0
  %v251 = vadd.f32 0.0, %v250
  %v252 = vpop.f32.mrb[0].mxu0
  %v253 = vadd.f32 0.0, %v252
  %v254 = vpop.f32.mrb[0].mxu0
  %v255 = vadd.f32 0.0, %v254
  %256 = vdwg.mxu0
  %257 = vmatprep.subr.bf16.mxu0 %v212
  %258 = vmatpush1.bf16.msra.mxu0 %v209
  %259 = vmatprep.subr.bf16.mxu0 0
  %260 = vmatpush1.bf16.msra.mxu0 0
  %261 = vmatprep.subr.bf16.mxu0 0
  %262 = vmatpush1.bf16.msra.mxu0 0
  %263 = vmatprep.subr.bf16.mxu0 0
  %264 = vmatpush1.bf16.msra.mxu0 0
  %265 = vmatprep.subr.bf16.mxu0 0
  %266 = vmatpush1.bf16.msra.mxu0 0
  %267 = vmatprep.subr.bf16.mxu0 0
  %268 = vmatpush1.bf16.msra.mxu0 0
  %269 = vmatprep.subr.bf16.mxu0 0
  %270 = vmatpush1.bf16.msra.mxu0 0
  %271 = vmatprep.subr.bf16.mxu0 0
  %272 = vmatpush1.bf16.msra.mxu0 0
  %273 = vmatprep.subr.bf16.mxu0 0
  %274 = vmatpush1.bf16.msra.mxu0 0
  %275 = vmatprep.subr.bf16.mxu0 0
  %276 = vmatpush1.bf16.msra.mxu0 0
  %277 = vmatprep.subr.bf16.mxu0 0
  %278 = vmatpush1.bf16.msra.mxu0 0
  %279 = vmatprep.subr.bf16.mxu0 0
  %280 = vmatpush1.bf16.msra.mxu0 0
  %281 = vmatprep.subr.bf16.mxu0 0
  %282 = vmatpush1.bf16.msra.mxu0 0
  %283 = vmatprep.subr.bf16.mxu0 0
  %284 = vmatpush1.bf16.msra.mxu0 0
  %285 = vmatprep.subr.bf16.mxu0 0
  %286 = vmatpush1.bf16.msra.mxu0 0
  %287 = vmatprep.subr.bf16.mxu0 0
  %288 = vmatpush1.bf16.msra.mxu0 0
  %289 = vmatprep.mubr.bf16.mxu0 0
  %290 = vmatmul.mubr.bf16.gmra.mrb[0].mxu0 %v199
  %v291 = vpop.f32.mrb[0].mxu0
  %v292 = vadd.f32 0.0, %v291
  %v293 = vpop.f32.mrb[0].mxu0
  %v294 = vadd.f32 0.0, %v293
  %v295 = vpop.f32.mrb[0].mxu0
  %v296 = vadd.f32 0.0, %v295
  %v297 = vpop.f32.mrb[0].mxu0
  %v298 = vadd.f32 0.0, %v297
  %299 = vdwg.mxu0
  %v302 = vunpack.c.l.b16 %v150
  %v303 = vunpack.c.l.b16 %v151
  %v304 = vpack.c.b16 %v303, %v302
  %v306 = vsel %vm197, %v304, 0
  %v309 = vsel %vm201, %v146, 0
  %v312 = vsel %vm201, %v147, 0
  %v315 = vsel %vm201, %v148, 0
  %v318 = vsel %vm201, %v149, 0
  %320 = vmatprep.subr.bf16.mxu0 %v312
  %321 = vmatpush1.bf16.msra.mxu0 %v309
  %322 = vmatprep.subr.bf16.mxu0 0
  %323 = vmatpush1.bf16.msra.mxu0 0
  %324 = vmatprep.subr.bf16.mxu0 0
  %325 = vmatpush1.bf16.msra.mxu0 0
  %326 = vmatprep.subr.bf16.mxu0 0
  %327 = vmatpush1.bf16.msra.mxu0 0
  %328 = vmatprep.subr.bf16.mxu0 0
  %329 = vmatpush1.bf16.msra.mxu0 0
  %330 = vmatprep.subr.bf16.mxu0 0
  %331 = vmatpush1.bf16.msra.mxu0 0
  %332 = vmatprep.subr.bf16.mxu0 0
  %333 = vmatpush1.bf16.msra.mxu0 0
  %334 = vmatprep.subr.bf16.mxu0 0
  %335 = vmatpush1.bf16.msra.mxu0 0
  %336 = vmatprep.subr.bf16.mxu0 0
  %337 = vmatpush1.bf16.msra.mxu0 0
  %338 = vmatprep.subr.bf16.mxu0 0
  %339 = vmatpush1.bf16.msra.mxu0 0
  %340 = vmatprep.subr.bf16.mxu0 0
  %341 = vmatpush1.bf16.msra.mxu0 0
  %342 = vmatprep.subr.bf16.mxu0 0
  %343 = vmatpush1.bf16.msra.mxu0 0
  %344 = vmatprep.subr.bf16.mxu0 0
  %345 = vmatpush1.bf16.msra.mxu0 0
  %346 = vmatprep.subr.bf16.mxu0 0
  %347 = vmatpush1.bf16.msra.mxu0 0
  %348 = vmatprep.subr.bf16.mxu0 0
  %349 = vmatpush1.bf16.msra.mxu0 0
  %350 = vmatprep.subr.bf16.mxu0 0
  %351 = vmatpush1.bf16.msra.mxu0 0
  %352 = vmatprep.mubr.bf16.mxu0 0
  %353 = vmatmul.mubr.bf16.gmra.mrb[0].mxu0 %v306
  %v354 = vpop.f32.mrb[0].mxu0
  %v355 = vadd.f32 %v249, %v354
  %v356 = vpop.f32.mrb[0].mxu0
  %v357 = vadd.f32 %v251, %v356
  %v358 = vpop.f32.mrb[0].mxu0
  %v359 = vadd.f32 %v253, %v358
  %v360 = vpop.f32.mrb[0].mxu0
  %v361 = vadd.f32 %v255, %v360
  %362 = vdwg.mxu0
  %363 = vmatprep.subr.bf16.mxu0 %v318
  %364 = vmatpush1.bf16.msra.mxu0 %v315
  %365 = vmatprep.subr.bf16.mxu0 0
  %366 = vmatpush1.bf16.msra.mxu0 0
  %367 = vmatprep.subr.bf16.mxu0 0
  %368 = vmatpush1.bf16.msra.mxu0 0
  %369 = vmatprep.subr.bf16.mxu0 0
  %370 = vmatpush1.bf16.msra.mxu0 0
  %371 = vmatprep.subr.bf16.mxu0 0
  %372 = vmatpush1.bf16.msra.mxu0 0
  %373 = vmatprep.subr.bf16.mxu0 0
  %374 = vmatpush1.bf16.msra.mxu0 0
  %375 = vmatprep.subr.bf16.mxu0 0
  %376 = vmatpush1.bf16.msra.mxu0 0
  %377 = vmatprep.subr.bf16.mxu0 0
  %378 = vmatpush1.bf16.msra.mxu0 0
  %379 = vmatprep.subr.bf16.mxu0 0
  %380 = vmatpush1.bf16.msra.mxu0 0
  %381 = vmatprep.subr.bf16.mxu0 0
  %382 = vmatpush1.bf16.msra.mxu0 0
  %383 = vmatprep.subr.bf16.mxu0 0
  %384 = vmatpush1.bf16.msra.mxu0 0
  %385 = vmatprep.subr.bf16.mxu0 0
  %386 = vmatpush1.bf16.msra.mxu0 0
  %387 = vmatprep.subr.bf16.mxu0 0
  %388 = vmatpush1.bf16.msra.mxu0 0
  %389 = vmatprep.subr.bf16.mxu0 0
  %390 = vmatpush1.bf16.msra.mxu0 0
  %391 = vmatprep.subr.bf16.mxu0 0
  %392 = vmatpush1.bf16.msra.mxu0 0
  %393 = vmatprep.subr.bf16.mxu0 0
  %394 = vmatpush1.bf16.msra.mxu0 0
  %395 = vmatprep.mubr.bf16.mxu0 0
  %396 = vmatmul.mubr.bf16.gmra.mrb[0].mxu0 %v306
  %v397 = vpop.f32.mrb[0].mxu0
  %v398 = vadd.f32 %v292, %v397
  %v399 = vpop.f32.mrb[0].mxu0
  %v400 = vadd.f32 %v294, %v399
  %v401 = vpop.f32.mrb[0].mxu0
  %v402 = vadd.f32 %v296, %v401
  %v403 = vpop.f32.mrb[0].mxu0
  %v404 = vadd.f32 %v298, %v403
  %405 = vdwg.mxu0
  %406 = vrot.lane.b32.xlu0 %v107, 15
  %v407 = vpop.permute.xlu0 %406
  %408 = vrot.lane.b32.xlu0 %v108, 15
  %v409 = vpop.permute.xlu0 %408
  %410 = vrot.lane.b32.xlu0 %v109, 15
  %v411 = vpop.permute.xlu0 %410
  %412 = vrot.lane.b32.xlu0 %v110, 15
  %v413 = vpop.permute.xlu0 %412
  %vm414 = vcmp.lt.s32.totalorder %v120, 15
  %v415 = vsel %vm414, %v411, %v413
  %v416 = vsel %vm414, %v409, %v411
  %v417 = vsel %vm414, %v407, %v409
  %v418 = vsel %vm414, %v413, %v407
  %v419 = vlaneseq
  %v420 = vshrl.u32 %v419, 7
  %v421 = vsub.s32 2, %v420
  %v422 = vrot.slane %v42, %v421
  %v423 = vlaneseq
  %v424 = vshrl.u32 %v423, 7
  %v425 = vsub.s32 2, %v424
  %v426 = vrot.slane %v43, %v425
  %v427 = vlaneseq
  %v428 = vshrl.u32 %v427, 7
  %v429 = vsub.s32 2, %v428
  %v430 = vrot.slane %v44, %v429
  %v431 = vlaneseq
  %v432 = vshrl.u32 %v431, 7
  %v433 = vsub.s32 2, %v432
  %v434 = vrot.slane %v45, %v433
  %v435 = vmul.f32 %v418, %v422
  %v436 = vmul.f32 %v417, %v426
  %v437 = vmul.f32 %v416, %v430
  %v438 = vmul.f32 %v415, %v434
  %v439 = vpack.c.bf16 %v435, %v435
  %v440 = vpack.c.bf16 %v436, %v436
  %v441 = vpack.c.bf16 %v437, %v437
  %v442 = vpack.c.bf16 %v438, %v438
  %s443 = scalar_lea.vmem %s2, 16
  %v444 = vld [vmem:[%s443] sm:$0xf]
  %v445 = vld [vmem:[%s443 + $0x4] sm:$0x3]
  %v448 = vunpack.c.l.b16 %v444
  %v449 = vunpack.c.l.b16 %v445
  %v450 = vpack.c.b16 %v449, %v448
  %v452 = vsel %vm197, %v450, 0
  %v455 = vsel %vm201, %v439, 0
  %v458 = vsel %vm201, %v440, 0
  %v461 = vsel %vm201, %v441, 0
  %v464 = vsel %vm201, %v442, 0
  %466 = vmatprep.subr.bf16.mxu0 %v458
  %467 = vmatpush1.bf16.msra.mxu0 %v455
  %468 = vmatprep.subr.bf16.mxu0 0
  %469 = vmatpush1.bf16.msra.mxu0 0
  %470 = vmatprep.subr.bf16.mxu0 0
  %471 = vmatpush1.bf16.msra.mxu0 0
  %472 = vmatprep.subr.bf16.mxu0 0
  %473 = vmatpush1.bf16.msra.mxu0 0
  %474 = vmatprep.subr.bf16.mxu0 0
  %475 = vmatpush1.bf16.msra.mxu0 0
  %476 = vmatprep.subr.bf16.mxu0 0
  %477 = vmatpush1.bf16.msra.mxu0 0
  %478 = vmatprep.subr.bf16.mxu0 0
  %479 = vmatpush1.bf16.msra.mxu0 0
  %480 = vmatprep.subr.bf16.mxu0 0
  %481 = vmatpush1.bf16.msra.mxu0 0
  %482 = vmatprep.subr.bf16.mxu0 0
  %483 = vmatpush1.bf16.msra.mxu0 0
  %484 = vmatprep.subr.bf16.mxu0 0
  %485 = vmatpush1.bf16.msra.mxu0 0
  %486 = vmatprep.subr.bf16.mxu0 0
  %487 = vmatpush1.bf16.msra.mxu0 0
  %488 = vmatprep.subr.bf16.mxu0 0
  %489 = vmatpush1.bf16.msra.mxu0 0
  %490 = vmatprep.subr.bf16.mxu0 0
  %491 = vmatpush1.bf16.msra.mxu0 0
  %492 = vmatprep.subr.bf16.mxu0 0
  %493 = vmatpush1.bf16.msra.mxu0 0
  %494 = vmatprep.subr.bf16.mxu0 0
  %495 = vmatpush1.bf16.msra.mxu0 0
  %496 = vmatprep.subr.bf16.mxu0 0
  %497 = vmatpush1.bf16.msra.mxu0 0
  %498 = vmatprep.mubr.bf16.mxu0 0
  %499 = vmatmul.mubr.bf16.gmra.mrb[0].mxu0 %v452
  %v500 = vpop.f32.mrb[0].mxu0
  %v501 = vadd.f32 0.0, %v500
  %v502 = vpop.f32.mrb[0].mxu0
  %v503 = vadd.f32 0.0, %v502
  %v504 = vpop.f32.mrb[0].mxu0
  %v505 = vadd.f32 0.0, %v504
  %v506 = vpop.f32.mrb[0].mxu0
  %v507 = vadd.f32 0.0, %v506
  %508 = vdwg.mxu0
  %509 = vmatprep.subr.bf16.mxu0 %v464
  %510 = vmatpush1.bf16.msra.mxu0 %v461
  %511 = vmatprep.subr.bf16.mxu0 0
  %512 = vmatpush1.bf16.msra.mxu0 0
  %513 = vmatprep.subr.bf16.mxu0 0
  %514 = vmatpush1.bf16.msra.mxu0 0
  %515 = vmatprep.subr.bf16.mxu0 0
  %516 = vmatpush1.bf16.msra.mxu0 0
  %517 = vmatprep.subr.bf16.mxu0 0
  %518 = vmatpush1.bf16.msra.mxu0 0
  %519 = vmatprep.subr.bf16.mxu0 0
  %520 = vmatpush1.bf16.msra.mxu0 0
  %521 = vmatprep.subr.bf16.mxu0 0
  %522 = vmatpush1.bf16.msra.mxu0 0
  %523 = vmatprep.subr.bf16.mxu0 0
  %524 = vmatpush1.bf16.msra.mxu0 0
  %525 = vmatprep.subr.bf16.mxu0 0
  %526 = vmatpush1.bf16.msra.mxu0 0
  %527 = vmatprep.subr.bf16.mxu0 0
  %528 = vmatpush1.bf16.msra.mxu0 0
  %529 = vmatprep.subr.bf16.mxu0 0
  %530 = vmatpush1.bf16.msra.mxu0 0
  %531 = vmatprep.subr.bf16.mxu0 0
  %532 = vmatpush1.bf16.msra.mxu0 0
  %533 = vmatprep.subr.bf16.mxu0 0
  %534 = vmatpush1.bf16.msra.mxu0 0
  %535 = vmatprep.subr.bf16.mxu0 0
  %536 = vmatpush1.bf16.msra.mxu0 0
  %537 = vmatprep.subr.bf16.mxu0 0
  %538 = vmatpush1.bf16.msra.mxu0 0
  %539 = vmatprep.subr.bf16.mxu0 0
  %540 = vmatpush1.bf16.msra.mxu0 0
  %541 = vmatprep.mubr.bf16.mxu0 0
  %542 = vmatmul.mubr.bf16.gmra.mrb[0].mxu0 %v452
  %v543 = vpop.f32.mrb[0].mxu0
  %v544 = vadd.f32 0.0, %v543
  %v545 = vpop.f32.mrb[0].mxu0
  %v546 = vadd.f32 0.0, %v545
  %v547 = vpop.f32.mrb[0].mxu0
  %v548 = vadd.f32 0.0, %v547
  %v549 = vpop.f32.mrb[0].mxu0
  %v550 = vadd.f32 0.0, %v549
  %551 = vdwg.mxu0
  %v552 = vadd.f32 %v355, %v501
  %v553 = vadd.f32 %v357, %v503
  %v554 = vadd.f32 %v398, %v544
  %v555 = vadd.f32 %v400, %v546
  %v556 = vadd.f32 %v359, %v505
  %v557 = vadd.f32 %v361, %v507
  %v558 = vadd.f32 %v402, %v548
  %v559 = vadd.f32 %v404, %v550
  %560 = vrot.lane.b32.xlu0 %v107, 1
  %v561 = vpop.permute.xlu0 %560
  %562 = vrot.lane.b32.xlu0 %v108, 1
  %v563 = vpop.permute.xlu0 %562
  %564 = vrot.lane.b32.xlu0 %v109, 1
  %v565 = vpop.permute.xlu0 %564
  %566 = vrot.lane.b32.xlu0 %v110, 1
  %v567 = vpop.permute.xlu0 %566
  %vm568 = vcmp.lt.s32.totalorder %v120, 1
  %v569 = vsel %vm568, %v565, %v567
  %v570 = vsel %vm568, %v563, %v565
  %v571 = vsel %vm568, %v561, %v563
  %v572 = vsel %vm568, %v567, %v561
  %v573 = vlaneseq
  %v574 = vshrl.u32 %v573, 7
  %v575 = vsub.s32 3, %v574
  %v576 = vrot.slane %v42, %v575
  %v577 = vlaneseq
  %v578 = vshrl.u32 %v577, 7
  %v579 = vsub.s32 3, %v578
  %v580 = vrot.slane %v43, %v579
  %v581 = vlaneseq
  %v582 = vshrl.u32 %v581, 7
  %v583 = vsub.s32 3, %v582
  %v584 = vrot.slane %v44, %v583
  %v585 = vlaneseq
  %v586 = vshrl.u32 %v585, 7
  %v587 = vsub.s32 3, %v586
  %v588 = vrot.slane %v45, %v587
  %v589 = vmul.f32 %v572, %v576
  %v590 = vmul.f32 %v571, %v580
  %v591 = vmul.f32 %v570, %v584
  %v592 = vmul.f32 %v569, %v588
  %v593 = vpack.c.bf16 %v589, %v589
  %v594 = vpack.c.bf16 %v590, %v590
  %v595 = vpack.c.bf16 %v591, %v591
  %v596 = vpack.c.bf16 %v592, %v592
  %s597 = scalar_lea.vmem %s2, 24
  %v598 = vld [vmem:[%s597] sm:$0xf]
  %v599 = vld [vmem:[%s597 + $0x4] sm:$0x3]
  %v602 = vunpack.c.l.b16 %v598
  %v603 = vunpack.c.l.b16 %v599
  %v604 = vpack.c.b16 %v603, %v602
  %v606 = vsel %vm197, %v604, 0
  %v609 = vsel %vm201, %v593, 0
  %v612 = vsel %vm201, %v594, 0
  %v615 = vsel %vm201, %v595, 0
  %v618 = vsel %vm201, %v596, 0
  %620 = vmatprep.subr.bf16.mxu0 %v612
  %621 = vmatpush1.bf16.msra.mxu0 %v609
  %622 = vmatprep.subr.bf16.mxu0 0
  %623 = vmatpush1.bf16.msra.mxu0 0
  %624 = vmatprep.subr.bf16.mxu0 0
  %625 = vmatpush1.bf16.msra.mxu0 0
  %626 = vmatprep.subr.bf16.mxu0 0
  %627 = vmatpush1.bf16.msra.mxu0 0
  %628 = vmatprep.subr.bf16.mxu0 0
  %629 = vmatpush1.bf16.msra.mxu0 0
  %630 = vmatprep.subr.bf16.mxu0 0
  %631 = vmatpush1.bf16.msra.mxu0 0
  %632 = vmatprep.subr.bf16.mxu0 0
  %633 = vmatpush1.bf16.msra.mxu0 0
  %634 = vmatprep.subr.bf16.mxu0 0
  %635 = vmatpush1.bf16.msra.mxu0 0
  %636 = vmatprep.subr.bf16.mxu0 0
  %637 = vmatpush1.bf16.msra.mxu0 0
  %638 = vmatprep.subr.bf16.mxu0 0
  %639 = vmatpush1.bf16.msra.mxu0 0
  %640 = vmatprep.subr.bf16.mxu0 0
  %641 = vmatpush1.bf16.msra.mxu0 0
  %642 = vmatprep.subr.bf16.mxu0 0
  %643 = vmatpush1.bf16.msra.mxu0 0
  %644 = vmatprep.subr.bf16.mxu0 0
  %645 = vmatpush1.bf16.msra.mxu0 0
  %646 = vmatprep.subr.bf16.mxu0 0
  %647 = vmatpush1.bf16.msra.mxu0 0
  %648 = vmatprep.subr.bf16.mxu0 0
  %649 = vmatpush1.bf16.msra.mxu0 0
  %650 = vmatprep.subr.bf16.mxu0 0
  %651 = vmatpush1.bf16.msra.mxu0 0
  %652 = vmatprep.mubr.bf16.mxu0 0
  %653 = vmatmul.mubr.bf16.gmra.mrb[0].mxu0 %v606
  %v654 = vpop.f32.mrb[0].mxu0
  %v655 = vadd.f32 0.0, %v654
  %v656 = vpop.f32.mrb[0].mxu0
  %v657 = vadd.f32 0.0, %v656
  %v658 = vpop.f32.mrb[0].mxu0
  %v659 = vadd.f32 0.0, %v658
  %v660 = vpop.f32.mrb[0].mxu0
  %v661 = vadd.f32 0.0, %v660
  %662 = vdwg.mxu0
  %663 = vmatprep.subr.bf16.mxu0 %v618
  %664 = vmatpush1.bf16.msra.mxu0 %v615
  %665 = vmatprep.subr.bf16.mxu0 0
  %666 = vmatpush1.bf16.msra.mxu0 0
  %667 = vmatprep.subr.bf16.mxu0 0
  %668 = vmatpush1.bf16.msra.mxu0 0
  %669 = vmatprep.subr.bf16.mxu0 0
  %670 = vmatpush1.bf16.msra.mxu0 0
  %671 = vmatprep.subr.bf16.mxu0 0
  %672 = vmatpush1.bf16.msra.mxu0 0
  %673 = vmatprep.subr.bf16.mxu0 0
  %674 = vmatpush1.bf16.msra.mxu0 0
  %675 = vmatprep.subr.bf16.mxu0 0
  %676 = vmatpush1.bf16.msra.mxu0 0
  %677 = vmatprep.subr.bf16.mxu0 0
  %678 = vmatpush1.bf16.msra.mxu0 0
  %679 = vmatprep.subr.bf16.mxu0 0
  %680 = vmatpush1.bf16.msra.mxu0 0
  %681 = vmatprep.subr.bf16.mxu0 0
  %682 = vmatpush1.bf16.msra.mxu0 0
  %683 = vmatprep.subr.bf16.mxu0 0
  %684 = vmatpush1.bf16.msra.mxu0 0
  %685 = vmatprep.subr.bf16.mxu0 0
  %686 = vmatpush1.bf16.msra.mxu0 0
  %687 = vmatprep.subr.bf16.mxu0 0
  %688 = vmatpush1.bf16.msra.mxu0 0
  %689 = vmatprep.subr.bf16.mxu0 0
  %690 = vmatpush1.bf16.msra.mxu0 0
  %691 = vmatprep.subr.bf16.mxu0 0
  %692 = vmatpush1.bf16.msra.mxu0 0
  %693 = vmatprep.subr.bf16.mxu0 0
  %694 = vmatpush1.bf16.msra.mxu0 0
  %695 = vmatprep.mubr.bf16.mxu0 0
  %696 = vmatmul.mubr.bf16.gmra.mrb[0].mxu0 %v606
  %v697 = vpop.f32.mrb[0].mxu0
  %v698 = vadd.f32 0.0, %v697
  %v699 = vpop.f32.mrb[0].mxu0
  %v700 = vadd.f32 0.0, %v699
  %v701 = vpop.f32.mrb[0].mxu0
  %v702 = vadd.f32 0.0, %v701
  %v703 = vpop.f32.mrb[0].mxu0
  %v704 = vadd.f32 0.0, %v703
  %705 = vdwg.mxu0
  %v706 = vadd.f32 %v552, %v655
  %v707 = vadd.f32 %v553, %v657
  %v708 = vadd.f32 %v554, %v698
  %v709 = vadd.f32 %v555, %v700
  %v710 = vadd.f32 %v556, %v659
  %v711 = vadd.f32 %v557, %v661
  %v712 = vadd.f32 %v558, %v702
  %v713 = vadd.f32 %v559, %v704
  %v714 = vlaneseq
  %v715 = vshrl.u32 %v714, 7
  %v716 = vsub.s32 4, %v715
  %v717 = vrot.slane %v42, %v716
  %v718 = vlaneseq
  %v719 = vshrl.u32 %v718, 7
  %v720 = vsub.s32 4, %v719
  %v721 = vrot.slane %v43, %v720
  %v722 = vlaneseq
  %v723 = vshrl.u32 %v722, 7
  %v724 = vsub.s32 4, %v723
  %v725 = vrot.slane %v44, %v724
  %v726 = vlaneseq
  %v727 = vshrl.u32 %v726, 7
  %v728 = vsub.s32 4, %v727
  %v729 = vrot.slane %v45, %v728
  %v730 = vmul.f32 %v107, %v717
  %v731 = vmul.f32 %v108, %v721
  %v732 = vmul.f32 %v109, %v725
  %v733 = vmul.f32 %v110, %v729
  %v734 = vpack.c.bf16 %v730, %v730
  %v735 = vpack.c.bf16 %v731, %v731
  %v736 = vpack.c.bf16 %v732, %v732
  %v737 = vpack.c.bf16 %v733, %v733
  %s738 = scalar_lea.vmem %s2, 32
  %v739 = vld [vmem:[%s738] sm:$0xf]
  %v740 = vld [vmem:[%s738 + $0x4] sm:$0x3]
  %v743 = vunpack.c.l.b16 %v739
  %v744 = vunpack.c.l.b16 %v740
  %v745 = vpack.c.b16 %v744, %v743
  %v747 = vsel %vm197, %v745, 0
  %v750 = vsel %vm201, %v734, 0
  %v753 = vsel %vm201, %v735, 0
  %v756 = vsel %vm201, %v736, 0
  %v759 = vsel %vm201, %v737, 0
  %761 = vmatprep.subr.bf16.mxu0 %v753
  %762 = vmatpush1.bf16.msra.mxu0 %v750
  %763 = vmatprep.subr.bf16.mxu0 0
  %764 = vmatpush1.bf16.msra.mxu0 0
  %765 = vmatprep.subr.bf16.mxu0 0
  %766 = vmatpush1.bf16.msra.mxu0 0
  %767 = vmatprep.subr.bf16.mxu0 0
  %768 = vmatpush1.bf16.msra.mxu0 0
  %769 = vmatprep.subr.bf16.mxu0 0
  %770 = vmatpush1.bf16.msra.mxu0 0
  %771 = vmatprep.subr.bf16.mxu0 0
  %772 = vmatpush1.bf16.msra.mxu0 0
  %773 = vmatprep.subr.bf16.mxu0 0
  %774 = vmatpush1.bf16.msra.mxu0 0
  %775 = vmatprep.subr.bf16.mxu0 0
  %776 = vmatpush1.bf16.msra.mxu0 0
  %777 = vmatprep.subr.bf16.mxu0 0
  %778 = vmatpush1.bf16.msra.mxu0 0
  %779 = vmatprep.subr.bf16.mxu0 0
  %780 = vmatpush1.bf16.msra.mxu0 0
  %781 = vmatprep.subr.bf16.mxu0 0
  %782 = vmatpush1.bf16.msra.mxu0 0
  %783 = vmatprep.subr.bf16.mxu0 0
  %784 = vmatpush1.bf16.msra.mxu0 0
  %785 = vmatprep.subr.bf16.mxu0 0
  %786 = vmatpush1.bf16.msra.mxu0 0
  %787 = vmatprep.subr.bf16.mxu0 0
  %788 = vmatpush1.bf16.msra.mxu0 0
  %789 = vmatprep.subr.bf16.mxu0 0
  %790 = vmatpush1.bf16.msra.mxu0 0
  %791 = vmatprep.subr.bf16.mxu0 0
  %792 = vmatpush1.bf16.msra.mxu0 0
  %793 = vmatprep.mubr.bf16.mxu0 0
  %794 = vmatmul.mubr.bf16.gmra.mrb[0].mxu0 %v747
  %v795 = vpop.f32.mrb[0].mxu0
  %v796 = vadd.f32 0.0, %v795
  %v797 = vpop.f32.mrb[0].mxu0
  %v798 = vadd.f32 0.0, %v797
  %v799 = vpop.f32.mrb[0].mxu0
  %v800 = vadd.f32 0.0, %v799
  %v801 = vpop.f32.mrb[0].mxu0
  %v802 = vadd.f32 0.0, %v801
  %803 = vdwg.mxu0
  %804 = vmatprep.subr.bf16.mxu0 %v759
  %805 = vmatpush1.bf16.msra.mxu0 %v756
  %806 = vmatprep.subr.bf16.mxu0 0
  %807 = vmatpush1.bf16.msra.mxu0 0
  %808 = vmatprep.subr.bf16.mxu0 0
  %809 = vmatpush1.bf16.msra.mxu0 0
  %810 = vmatprep.subr.bf16.mxu0 0
  %811 = vmatpush1.bf16.msra.mxu0 0
  %812 = vmatprep.subr.bf16.mxu0 0
  %813 = vmatpush1.bf16.msra.mxu0 0
  %814 = vmatprep.subr.bf16.mxu0 0
  %815 = vmatpush1.bf16.msra.mxu0 0
  %816 = vmatprep.subr.bf16.mxu0 0
  %817 = vmatpush1.bf16.msra.mxu0 0
  %818 = vmatprep.subr.bf16.mxu0 0
  %819 = vmatpush1.bf16.msra.mxu0 0
  %820 = vmatprep.subr.bf16.mxu0 0
  %821 = vmatpush1.bf16.msra.mxu0 0
  %822 = vmatprep.subr.bf16.mxu0 0
  %823 = vmatpush1.bf16.msra.mxu0 0
  %824 = vmatprep.subr.bf16.mxu0 0
  %825 = vmatpush1.bf16.msra.mxu0 0
  %826 = vmatprep.subr.bf16.mxu0 0
  %827 = vmatpush1.bf16.msra.mxu0 0
  %828 = vmatprep.subr.bf16.mxu0 0
  %829 = vmatpush1.bf16.msra.mxu0 0
  %830 = vmatprep.subr.bf16.mxu0 0
  %831 = vmatpush1.bf16.msra.mxu0 0
  %832 = vmatprep.subr.bf16.mxu0 0
  %833 = vmatpush1.bf16.msra.mxu0 0
  %834 = vmatprep.subr.bf16.mxu0 0
  %835 = vmatpush1.bf16.msra.mxu0 0
  %836 = vmatprep.mubr.bf16.mxu0 0
  %837 = vmatmul.mubr.bf16.gmra.mrb[0].mxu0 %v747
  %v838 = vpop.f32.mrb[0].mxu0
  %v839 = vadd.f32 0.0, %v838
  %v840 = vpop.f32.mrb[0].mxu0
  %v841 = vadd.f32 0.0, %v840
  %v842 = vpop.f32.mrb[0].mxu0
  %v843 = vadd.f32 0.0, %v842
  %v844 = vpop.f32.mrb[0].mxu0
  %v845 = vadd.f32 0.0, %v844
  %846 = vdwg.mxu0
  %v847 = vadd.f32 %v706, %v796
  %v848 = vadd.f32 %v707, %v798
  %v849 = vadd.f32 %v708, %v839
  %v850 = vadd.f32 %v709, %v841
  %v851 = vadd.f32 %v710, %v800
  %v852 = vadd.f32 %v711, %v802
  %v853 = vadd.f32 %v712, %v843
  %v854 = vadd.f32 %v713, %v845
  %855 = vrot.lane.b32.xlu0 %v107, 127
  %v856 = vpop.permute.xlu0 %855
  %857 = vrot.lane.b32.xlu0 %v108, 127
  %v858 = vpop.permute.xlu0 %857
  %859 = vrot.lane.b32.xlu0 %v109, 127
  %v860 = vpop.permute.xlu0 %859
  %861 = vrot.lane.b32.xlu0 %v110, 127
  %v862 = vpop.permute.xlu0 %861
  %vm863 = vcmp.lt.s32.totalorder %v120, 127
  %v864 = vsel %vm863, %v860, %v862
  %v865 = vsel %vm863, %v858, %v860
  %v866 = vsel %vm863, %v856, %v858
  %v867 = vsel %vm863, %v862, %v856
  %v868 = vlaneseq
  %v869 = vshrl.u32 %v868, 7
  %v870 = vsub.s32 5, %v869
  %v871 = vrot.slane %v42, %v870
  %v872 = vlaneseq
  %v873 = vshrl.u32 %v872, 7
  %v874 = vsub.s32 5, %v873
  %v875 = vrot.slane %v43, %v874
  %v876 = vlaneseq
  %v877 = vshrl.u32 %v876, 7
  %v878 = vsub.s32 5, %v877
  %v879 = vrot.slane %v44, %v878
  %v880 = vlaneseq
  %v881 = vshrl.u32 %v880, 7
  %v882 = vsub.s32 5, %v881
  %v883 = vrot.slane %v45, %v882
  %v884 = vmul.f32 %v866, %v871
  %v885 = vmul.f32 %v865, %v875
  %v886 = vmul.f32 %v864, %v879
  %v887 = vmul.f32 %v867, %v883
  %v888 = vpack.c.bf16 %v884, %v884
  %v889 = vpack.c.bf16 %v885, %v885
  %v890 = vpack.c.bf16 %v886, %v886
  %v891 = vpack.c.bf16 %v887, %v887
  %s892 = scalar_lea.vmem %s2, 40
  %v893 = vld [vmem:[%s892] sm:$0xf]
  %v894 = vld [vmem:[%s892 + $0x4] sm:$0x3]
  %v897 = vunpack.c.l.b16 %v893
  %v898 = vunpack.c.l.b16 %v894
  %v899 = vpack.c.b16 %v898, %v897
  %v901 = vsel %vm197, %v899, 0
  %v904 = vsel %vm201, %v888, 0
  %v907 = vsel %vm201, %v889, 0
  %v910 = vsel %vm201, %v890, 0
  %v913 = vsel %vm201, %v891, 0
  %915 = vmatprep.subr.bf16.mxu0 %v907
  %916 = vmatpush1.bf16.msra.mxu0 %v904
  %917 = vmatprep.subr.bf16.mxu0 0
  %918 = vmatpush1.bf16.msra.mxu0 0
  %919 = vmatprep.subr.bf16.mxu0 0
  %920 = vmatpush1.bf16.msra.mxu0 0
  %921 = vmatprep.subr.bf16.mxu0 0
  %922 = vmatpush1.bf16.msra.mxu0 0
  %923 = vmatprep.subr.bf16.mxu0 0
  %924 = vmatpush1.bf16.msra.mxu0 0
  %925 = vmatprep.subr.bf16.mxu0 0
  %926 = vmatpush1.bf16.msra.mxu0 0
  %927 = vmatprep.subr.bf16.mxu0 0
  %928 = vmatpush1.bf16.msra.mxu0 0
  %929 = vmatprep.subr.bf16.mxu0 0
  %930 = vmatpush1.bf16.msra.mxu0 0
  %931 = vmatprep.subr.bf16.mxu0 0
  %932 = vmatpush1.bf16.msra.mxu0 0
  %933 = vmatprep.subr.bf16.mxu0 0
  %934 = vmatpush1.bf16.msra.mxu0 0
  %935 = vmatprep.subr.bf16.mxu0 0
  %936 = vmatpush1.bf16.msra.mxu0 0
  %937 = vmatprep.subr.bf16.mxu0 0
  %938 = vmatpush1.bf16.msra.mxu0 0
  %939 = vmatprep.subr.bf16.mxu0 0
  %940 = vmatpush1.bf16.msra.mxu0 0
  %941 = vmatprep.subr.bf16.mxu0 0
  %942 = vmatpush1.bf16.msra.mxu0 0
  %943 = vmatprep.subr.bf16.mxu0 0
  %944 = vmatpush1.bf16.msra.mxu0 0
  %945 = vmatprep.subr.bf16.mxu0 0
  %946 = vmatpush1.bf16.msra.mxu0 0
  %947 = vmatprep.mubr.bf16.mxu0 0
  %948 = vmatmul.mubr.bf16.gmra.mrb[0].mxu0 %v901
  %v949 = vpop.f32.mrb[0].mxu0
  %v950 = vadd.f32 0.0, %v949
  %v951 = vpop.f32.mrb[0].mxu0
  %v952 = vadd.f32 0.0, %v951
  %v953 = vpop.f32.mrb[0].mxu0
  %v954 = vadd.f32 0.0, %v953
  %v955 = vpop.f32.mrb[0].mxu0
  %v956 = vadd.f32 0.0, %v955
  %957 = vdwg.mxu0
  %958 = vmatprep.subr.bf16.mxu0 %v913
  %959 = vmatpush1.bf16.msra.mxu0 %v910
  %960 = vmatprep.subr.bf16.mxu0 0
  %961 = vmatpush1.bf16.msra.mxu0 0
  %962 = vmatprep.subr.bf16.mxu0 0
  %963 = vmatpush1.bf16.msra.mxu0 0
  %964 = vmatprep.subr.bf16.mxu0 0
  %965 = vmatpush1.bf16.msra.mxu0 0
  %966 = vmatprep.subr.bf16.mxu0 0
  %967 = vmatpush1.bf16.msra.mxu0 0
  %968 = vmatprep.subr.bf16.mxu0 0
  %969 = vmatpush1.bf16.msra.mxu0 0
  %970 = vmatprep.subr.bf16.mxu0 0
  %971 = vmatpush1.bf16.msra.mxu0 0
  %972 = vmatprep.subr.bf16.mxu0 0
  %973 = vmatpush1.bf16.msra.mxu0 0
  %974 = vmatprep.subr.bf16.mxu0 0
  %975 = vmatpush1.bf16.msra.mxu0 0
  %976 = vmatprep.subr.bf16.mxu0 0
  %977 = vmatpush1.bf16.msra.mxu0 0
  %978 = vmatprep.subr.bf16.mxu0 0
  %979 = vmatpush1.bf16.msra.mxu0 0
  %980 = vmatprep.subr.bf16.mxu0 0
  %981 = vmatpush1.bf16.msra.mxu0 0
  %982 = vmatprep.subr.bf16.mxu0 0
  %983 = vmatpush1.bf16.msra.mxu0 0
  %984 = vmatprep.subr.bf16.mxu0 0
  %985 = vmatpush1.bf16.msra.mxu0 0
  %986 = vmatprep.subr.bf16.mxu0 0
  %987 = vmatpush1.bf16.msra.mxu0 0
  %988 = vmatprep.subr.bf16.mxu0 0
  %989 = vmatpush1.bf16.msra.mxu0 0
  %990 = vmatprep.mubr.bf16.mxu0 0
  %991 = vmatmul.mubr.bf16.gmra.mrb[0].mxu0 %v901
  %v992 = vpop.f32.mrb[0].mxu0
  %v993 = vadd.f32 0.0, %v992
  %v994 = vpop.f32.mrb[0].mxu0
  %v995 = vadd.f32 0.0, %v994
  %v996 = vpop.f32.mrb[0].mxu0
  %v997 = vadd.f32 0.0, %v996
  %v998 = vpop.f32.mrb[0].mxu0
  %v999 = vadd.f32 0.0, %v998
  %1000 = vdwg.mxu0
  %v1001 = vadd.f32 %v847, %v950
  %v1002 = vadd.f32 %v848, %v952
  %v1003 = vadd.f32 %v849, %v993
  %v1004 = vadd.f32 %v850, %v995
  %v1005 = vadd.f32 %v851, %v954
  %v1006 = vadd.f32 %v852, %v956
  %v1007 = vadd.f32 %v853, %v997
  %v1008 = vadd.f32 %v854, %v999
  %1009 = vrot.lane.b32.xlu0 %v107, 113
  %v1010 = vpop.permute.xlu0 %1009
  %1011 = vrot.lane.b32.xlu0 %v108, 113
  %v1012 = vpop.permute.xlu0 %1011
  %1013 = vrot.lane.b32.xlu0 %v109, 113
  %v1014 = vpop.permute.xlu0 %1013
  %1015 = vrot.lane.b32.xlu0 %v110, 113
  %v1016 = vpop.permute.xlu0 %1015
  %vm1017 = vcmp.lt.s32.totalorder %v120, 113
  %v1018 = vsel %vm1017, %v1014, %v1016
  %v1019 = vsel %vm1017, %v1012, %v1014
  %v1020 = vsel %vm1017, %v1010, %v1012
  %v1021 = vsel %vm1017, %v1016, %v1010
  %v1022 = vlaneseq
  %v1023 = vshrl.u32 %v1022, 7
  %v1024 = vsub.s32 6, %v1023
  %v1025 = vrot.slane %v42, %v1024
  %v1026 = vlaneseq
  %v1027 = vshrl.u32 %v1026, 7
  %v1028 = vsub.s32 6, %v1027
  %v1029 = vrot.slane %v43, %v1028
  %v1030 = vlaneseq
  %v1031 = vshrl.u32 %v1030, 7
  %v1032 = vsub.s32 6, %v1031
  %v1033 = vrot.slane %v44, %v1032
  %v1034 = vlaneseq
  %v1035 = vshrl.u32 %v1034, 7
  %v1036 = vsub.s32 6, %v1035
  %v1037 = vrot.slane %v45, %v1036
  %v1038 = vmul.f32 %v1020, %v1025
  %v1039 = vmul.f32 %v1019, %v1029
  %v1040 = vmul.f32 %v1018, %v1033
  %v1041 = vmul.f32 %v1021, %v1037
  %v1042 = vpack.c.bf16 %v1038, %v1038
  %v1043 = vpack.c.bf16 %v1039, %v1039
  %v1044 = vpack.c.bf16 %v1040, %v1040
  %v1045 = vpack.c.bf16 %v1041, %v1041
  %s1046 = scalar_lea.vmem %s2, 48
  %v1047 = vld [vmem:[%s1046] sm:$0xf]
  %v1048 = vld [vmem:[%s1046 + $0x4] sm:$0x3]
  %v1051 = vunpack.c.l.b16 %v1047
  %v1052 = vunpack.c.l.b16 %v1048
  %v1053 = vpack.c.b16 %v1052, %v1051
  %v1055 = vsel %vm197, %v1053, 0
  %v1058 = vsel %vm201, %v1042, 0
  %v1061 = vsel %vm201, %v1043, 0
  %v1064 = vsel %vm201, %v1044, 0
  %v1067 = vsel %vm201, %v1045, 0
  %1069 = vmatprep.subr.bf16.mxu0 %v1061
  %1070 = vmatpush1.bf16.msra.mxu0 %v1058
  %1071 = vmatprep.subr.bf16.mxu0 0
  %1072 = vmatpush1.bf16.msra.mxu0 0
  %1073 = vmatprep.subr.bf16.mxu0 0
  %1074 = vmatpush1.bf16.msra.mxu0 0
  %1075 = vmatprep.subr.bf16.mxu0 0
  %1076 = vmatpush1.bf16.msra.mxu0 0
  %1077 = vmatprep.subr.bf16.mxu0 0
  %1078 = vmatpush1.bf16.msra.mxu0 0
  %1079 = vmatprep.subr.bf16.mxu0 0
  %1080 = vmatpush1.bf16.msra.mxu0 0
  %1081 = vmatprep.subr.bf16.mxu0 0
  %1082 = vmatpush1.bf16.msra.mxu0 0
  %1083 = vmatprep.subr.bf16.mxu0 0
  %1084 = vmatpush1.bf16.msra.mxu0 0
  %1085 = vmatprep.subr.bf16.mxu0 0
  %1086 = vmatpush1.bf16.msra.mxu0 0
  %1087 = vmatprep.subr.bf16.mxu0 0
  %1088 = vmatpush1.bf16.msra.mxu0 0
  %1089 = vmatprep.subr.bf16.mxu0 0
  %1090 = vmatpush1.bf16.msra.mxu0 0
  %1091 = vmatprep.subr.bf16.mxu0 0
  %1092 = vmatpush1.bf16.msra.mxu0 0
  %1093 = vmatprep.subr.bf16.mxu0 0
  %1094 = vmatpush1.bf16.msra.mxu0 0
  %1095 = vmatprep.subr.bf16.mxu0 0
  %1096 = vmatpush1.bf16.msra.mxu0 0
  %1097 = vmatprep.subr.bf16.mxu0 0
  %1098 = vmatpush1.bf16.msra.mxu0 0
  %1099 = vmatprep.subr.bf16.mxu0 0
  %1100 = vmatpush1.bf16.msra.mxu0 0
  %1101 = vmatprep.mubr.bf16.mxu0 0
  %1102 = vmatmul.mubr.bf16.gmra.mrb[0].mxu0 %v1055
  %v1103 = vpop.f32.mrb[0].mxu0
  %v1104 = vadd.f32 0.0, %v1103
  %v1105 = vpop.f32.mrb[0].mxu0
  %v1106 = vadd.f32 0.0, %v1105
  %v1107 = vpop.f32.mrb[0].mxu0
  %v1108 = vadd.f32 0.0, %v1107
  %v1109 = vpop.f32.mrb[0].mxu0
  %v1110 = vadd.f32 0.0, %v1109
  %1111 = vdwg.mxu0
  %1112 = vmatprep.subr.bf16.mxu0 %v1067
  %1113 = vmatpush1.bf16.msra.mxu0 %v1064
  %1114 = vmatprep.subr.bf16.mxu0 0
  %1115 = vmatpush1.bf16.msra.mxu0 0
  %1116 = vmatprep.subr.bf16.mxu0 0
  %1117 = vmatpush1.bf16.msra.mxu0 0
  %1118 = vmatprep.subr.bf16.mxu0 0
  %1119 = vmatpush1.bf16.msra.mxu0 0
  %1120 = vmatprep.subr.bf16.mxu0 0
  %1121 = vmatpush1.bf16.msra.mxu0 0
  %1122 = vmatprep.subr.bf16.mxu0 0
  %1123 = vmatpush1.bf16.msra.mxu0 0
  %1124 = vmatprep.subr.bf16.mxu0 0
  %1125 = vmatpush1.bf16.msra.mxu0 0
  %1126 = vmatprep.subr.bf16.mxu0 0
  %1127 = vmatpush1.bf16.msra.mxu0 0
  %1128 = vmatprep.subr.bf16.mxu0 0
  %1129 = vmatpush1.bf16.msra.mxu0 0
  %1130 = vmatprep.subr.bf16.mxu0 0
  %1131 = vmatpush1.bf16.msra.mxu0 0
  %1132 = vmatprep.subr.bf16.mxu0 0
  %1133 = vmatpush1.bf16.msra.mxu0 0
  %1134 = vmatprep.subr.bf16.mxu0 0
  %1135 = vmatpush1.bf16.msra.mxu0 0
  %1136 = vmatprep.subr.bf16.mxu0 0
  %1137 = vmatpush1.bf16.msra.mxu0 0
  %1138 = vmatprep.subr.bf16.mxu0 0
  %1139 = vmatpush1.bf16.msra.mxu0 0
  %1140 = vmatprep.subr.bf16.mxu0 0
  %1141 = vmatpush1.bf16.msra.mxu0 0
  %1142 = vmatprep.subr.bf16.mxu0 0
  %1143 = vmatpush1.bf16.msra.mxu0 0
  %1144 = vmatprep.mubr.bf16.mxu0 0
  %1145 = vmatmul.mubr.bf16.gmra.mrb[0].mxu0 %v1055
  %v1146 = vpop.f32.mrb[0].mxu0
  %v1147 = vadd.f32 0.0, %v1146
  %v1148 = vpop.f32.mrb[0].mxu0
  %v1149 = vadd.f32 0.0, %v1148
  %v1150 = vpop.f32.mrb[0].mxu0
  %v1151 = vadd.f32 0.0, %v1150
  %v1152 = vpop.f32.mrb[0].mxu0
  %v1153 = vadd.f32 0.0, %v1152
  %1154 = vdwg.mxu0
  %v1155 = vadd.f32 %v1001, %v1104
  %v1156 = vadd.f32 %v1002, %v1106
  %v1157 = vadd.f32 %v1003, %v1147
  %v1158 = vadd.f32 %v1004, %v1149
  %v1159 = vadd.f32 %v1005, %v1108
  %v1160 = vadd.f32 %v1006, %v1110
  %v1161 = vadd.f32 %v1007, %v1151
  %v1162 = vadd.f32 %v1008, %v1153
  %1163 = vrot.lane.b32.xlu0 %v107, 112
  %v1164 = vpop.permute.xlu0 %1163
  %1165 = vrot.lane.b32.xlu0 %v108, 112
  %v1166 = vpop.permute.xlu0 %1165
  %1167 = vrot.lane.b32.xlu0 %v109, 112
  %v1168 = vpop.permute.xlu0 %1167
  %1169 = vrot.lane.b32.xlu0 %v110, 112
  %v1170 = vpop.permute.xlu0 %1169
  %vm1171 = vcmp.lt.s32.totalorder %v120, 112
  %v1172 = vsel %vm1171, %v1168, %v1170
  %v1173 = vsel %vm1171, %v1166, %v1168
  %v1174 = vsel %vm1171, %v1164, %v1166
  %v1175 = vsel %vm1171, %v1170, %v1164
  %v1176 = vlaneseq
  %v1177 = vshrl.u32 %v1176, 7
  %v1178 = vsub.s32 7, %v1177
  %v1179 = vrot.slane %v42, %v1178
  %v1180 = vlaneseq
  %v1181 = vshrl.u32 %v1180, 7
  %v1182 = vsub.s32 7, %v1181
  %v1183 = vrot.slane %v43, %v1182
  %v1184 = vlaneseq
  %v1185 = vshrl.u32 %v1184, 7
  %v1186 = vsub.s32 7, %v1185
  %v1187 = vrot.slane %v44, %v1186
  %v1188 = vlaneseq
  %v1189 = vshrl.u32 %v1188, 7
  %v1190 = vsub.s32 7, %v1189
  %v1191 = vrot.slane %v45, %v1190
  %v1192 = vmul.f32 %v1174, %v1179
  %v1193 = vmul.f32 %v1173, %v1183
  %v1194 = vmul.f32 %v1172, %v1187
  %v1195 = vmul.f32 %v1175, %v1191
  %v1196 = vpack.c.bf16 %v1192, %v1192
  %v1197 = vpack.c.bf16 %v1193, %v1193
  %v1198 = vpack.c.bf16 %v1194, %v1194
  %v1199 = vpack.c.bf16 %v1195, %v1195
  %s1200 = scalar_lea.vmem %s2, 56
  %v1201 = vld [vmem:[%s1200] sm:$0xf]
  %v1202 = vld [vmem:[%s1200 + $0x4] sm:$0x3]
  %v1205 = vunpack.c.l.b16 %v1201
  %v1206 = vunpack.c.l.b16 %v1202
  %v1207 = vpack.c.b16 %v1206, %v1205
  %v1209 = vsel %vm197, %v1207, 0
  %v1212 = vsel %vm201, %v1196, 0
  %v1215 = vsel %vm201, %v1197, 0
  %v1218 = vsel %vm201, %v1198, 0
  %v1221 = vsel %vm201, %v1199, 0
  %1223 = vmatprep.subr.bf16.mxu0 %v1215
  %1224 = vmatpush1.bf16.msra.mxu0 %v1212
  %1225 = vmatprep.subr.bf16.mxu0 0
  %1226 = vmatpush1.bf16.msra.mxu0 0
  %1227 = vmatprep.subr.bf16.mxu0 0
  %1228 = vmatpush1.bf16.msra.mxu0 0
  %1229 = vmatprep.subr.bf16.mxu0 0
  %1230 = vmatpush1.bf16.msra.mxu0 0
  %1231 = vmatprep.subr.bf16.mxu0 0
  %1232 = vmatpush1.bf16.msra.mxu0 0
  %1233 = vmatprep.subr.bf16.mxu0 0
  %1234 = vmatpush1.bf16.msra.mxu0 0
  %1235 = vmatprep.subr.bf16.mxu0 0
  %1236 = vmatpush1.bf16.msra.mxu0 0
  %1237 = vmatprep.subr.bf16.mxu0 0
  %1238 = vmatpush1.bf16.msra.mxu0 0
  %1239 = vmatprep.subr.bf16.mxu0 0
  %1240 = vmatpush1.bf16.msra.mxu0 0
  %1241 = vmatprep.subr.bf16.mxu0 0
  %1242 = vmatpush1.bf16.msra.mxu0 0
  %1243 = vmatprep.subr.bf16.mxu0 0
  %1244 = vmatpush1.bf16.msra.mxu0 0
  %1245 = vmatprep.subr.bf16.mxu0 0
  %1246 = vmatpush1.bf16.msra.mxu0 0
  %1247 = vmatprep.subr.bf16.mxu0 0
  %1248 = vmatpush1.bf16.msra.mxu0 0
  %1249 = vmatprep.subr.bf16.mxu0 0
  %1250 = vmatpush1.bf16.msra.mxu0 0
  %1251 = vmatprep.subr.bf16.mxu0 0
  %1252 = vmatpush1.bf16.msra.mxu0 0
  %1253 = vmatprep.subr.bf16.mxu0 0
  %1254 = vmatpush1.bf16.msra.mxu0 0
  %1255 = vmatprep.mubr.bf16.mxu0 0
  %1256 = vmatmul.mubr.bf16.gmra.mrb[0].mxu0 %v1209
  %v1257 = vpop.f32.mrb[0].mxu0
  %v1258 = vadd.f32 0.0, %v1257
  %v1259 = vpop.f32.mrb[0].mxu0
  %v1260 = vadd.f32 0.0, %v1259
  %v1261 = vpop.f32.mrb[0].mxu0
  %v1262 = vadd.f32 0.0, %v1261
  %v1263 = vpop.f32.mrb[0].mxu0
  %v1264 = vadd.f32 0.0, %v1263
  %1265 = vdwg.mxu0
  %1266 = vmatprep.subr.bf16.mxu0 %v1221
  %1267 = vmatpush1.bf16.msra.mxu0 %v1218
  %1268 = vmatprep.subr.bf16.mxu0 0
  %1269 = vmatpush1.bf16.msra.mxu0 0
  %1270 = vmatprep.subr.bf16.mxu0 0
  %1271 = vmatpush1.bf16.msra.mxu0 0
  %1272 = vmatprep.subr.bf16.mxu0 0
  %1273 = vmatpush1.bf16.msra.mxu0 0
  %1274 = vmatprep.subr.bf16.mxu0 0
  %1275 = vmatpush1.bf16.msra.mxu0 0
  %1276 = vmatprep.subr.bf16.mxu0 0
  %1277 = vmatpush1.bf16.msra.mxu0 0
  %1278 = vmatprep.subr.bf16.mxu0 0
  %1279 = vmatpush1.bf16.msra.mxu0 0
  %1280 = vmatprep.subr.bf16.mxu0 0
  %1281 = vmatpush1.bf16.msra.mxu0 0
  %1282 = vmatprep.subr.bf16.mxu0 0
  %1283 = vmatpush1.bf16.msra.mxu0 0
  %1284 = vmatprep.subr.bf16.mxu0 0
  %1285 = vmatpush1.bf16.msra.mxu0 0
  %1286 = vmatprep.subr.bf16.mxu0 0
  %1287 = vmatpush1.bf16.msra.mxu0 0
  %1288 = vmatprep.subr.bf16.mxu0 0
  %1289 = vmatpush1.bf16.msra.mxu0 0
  %1290 = vmatprep.subr.bf16.mxu0 0
  %1291 = vmatpush1.bf16.msra.mxu0 0
  %1292 = vmatprep.subr.bf16.mxu0 0
  %1293 = vmatpush1.bf16.msra.mxu0 0
  %1294 = vmatprep.subr.bf16.mxu0 0
  %1295 = vmatpush1.bf16.msra.mxu0 0
  %1296 = vmatprep.subr.bf16.mxu0 0
  %1297 = vmatpush1.bf16.msra.mxu0 0
  %1298 = vmatprep.mubr.bf16.mxu0 0
  %1299 = vmatmul.mubr.bf16.gmra.mrb[0].mxu0 %v1209
  %v1300 = vpop.f32.mrb[0].mxu0
  %v1301 = vadd.f32 0.0, %v1300
  %v1302 = vpop.f32.mrb[0].mxu0
  %v1303 = vadd.f32 0.0, %v1302
  %v1304 = vpop.f32.mrb[0].mxu0
  %v1305 = vadd.f32 0.0, %v1304
  %v1306 = vpop.f32.mrb[0].mxu0
  %v1307 = vadd.f32 0.0, %v1306
  %1308 = vdwg.mxu0
  %v1309 = vadd.f32 %v1155, %v1258
  %v1310 = vadd.f32 %v1156, %v1260
  %v1311 = vadd.f32 %v1157, %v1301
  %v1312 = vadd.f32 %v1158, %v1303
  %v1313 = vadd.f32 %v1159, %v1262
  %v1314 = vadd.f32 %v1160, %v1264
  %v1315 = vadd.f32 %v1161, %v1305
  %v1316 = vadd.f32 %v1162, %v1307
  %1317 = vrot.lane.b32.xlu0 %v107, 111
  %v1318 = vpop.permute.xlu0 %1317
  %1319 = vrot.lane.b32.xlu0 %v108, 111
  %v1320 = vpop.permute.xlu0 %1319
  %1321 = vrot.lane.b32.xlu0 %v109, 111
  %v1322 = vpop.permute.xlu0 %1321
  %1323 = vrot.lane.b32.xlu0 %v110, 111
  %v1324 = vpop.permute.xlu0 %1323
  %vm1325 = vcmp.lt.s32.totalorder %v120, 111
  %v1326 = vsel %vm1325, %v1322, %v1324
  %v1327 = vsel %vm1325, %v1320, %v1322
  %v1328 = vsel %vm1325, %v1318, %v1320
  %v1329 = vsel %vm1325, %v1324, %v1318
  %v1330 = vlaneseq
  %v1331 = vshrl.u32 %v1330, 7
  %v1332 = vsub.s32 0, %v1331
  %v1333 = vrot.slane %v46, %v1332
  %v1334 = vlaneseq
  %v1335 = vshrl.u32 %v1334, 7
  %v1336 = vsub.s32 0, %v1335
  %v1337 = vrot.slane %v47, %v1336
  %v1338 = vlaneseq
  %v1339 = vshrl.u32 %v1338, 7
  %v1340 = vsub.s32 0, %v1339
  %v1341 = vrot.slane %v48, %v1340
  %v1342 = vlaneseq
  %v1343 = vshrl.u32 %v1342, 7
  %v1344 = vsub.s32 0, %v1343
  %v1345 = vrot.slane %v49, %v1344
  %v1346 = vmul.f32 %v1328, %v1333
  %v1347 = vmul.f32 %v1327, %v1337
  %v1348 = vmul.f32 %v1326, %v1341
  %v1349 = vmul.f32 %v1329, %v1345
  %v1350 = vpack.c.bf16 %v1346, %v1346
  %v1351 = vpack.c.bf16 %v1347, %v1347
  %v1352 = vpack.c.bf16 %v1348, %v1348
  %v1353 = vpack.c.bf16 %v1349, %v1349
  %s1354 = scalar_lea.vmem %s2, 64
  %v1355 = vld [vmem:[%s1354] sm:$0xf]
  %v1356 = vld [vmem:[%s1354 + $0x4] sm:$0x3]
  %v1359 = vunpack.c.l.b16 %v1355
  %v1360 = vunpack.c.l.b16 %v1356
  %v1361 = vpack.c.b16 %v1360, %v1359
  %v1363 = vsel %vm197, %v1361, 0
  %v1366 = vsel %vm201, %v1350, 0
  %v1369 = vsel %vm201, %v1351, 0
  %v1372 = vsel %vm201, %v1352, 0
  %v1375 = vsel %vm201, %v1353, 0
  %1377 = vmatprep.subr.bf16.mxu0 %v1369
  %1378 = vmatpush1.bf16.msra.mxu0 %v1366
  %1379 = vmatprep.subr.bf16.mxu0 0
  %1380 = vmatpush1.bf16.msra.mxu0 0
  %1381 = vmatprep.subr.bf16.mxu0 0
  %1382 = vmatpush1.bf16.msra.mxu0 0
  %1383 = vmatprep.subr.bf16.mxu0 0
  %1384 = vmatpush1.bf16.msra.mxu0 0
  %1385 = vmatprep.subr.bf16.mxu0 0
  %1386 = vmatpush1.bf16.msra.mxu0 0
  %1387 = vmatprep.subr.bf16.mxu0 0
  %1388 = vmatpush1.bf16.msra.mxu0 0
  %1389 = vmatprep.subr.bf16.mxu0 0
  %1390 = vmatpush1.bf16.msra.mxu0 0
  %1391 = vmatprep.subr.bf16.mxu0 0
  %1392 = vmatpush1.bf16.msra.mxu0 0
  %1393 = vmatprep.subr.bf16.mxu0 0
  %1394 = vmatpush1.bf16.msra.mxu0 0
  %1395 = vmatprep.subr.bf16.mxu0 0
  %1396 = vmatpush1.bf16.msra.mxu0 0
  %1397 = vmatprep.subr.bf16.mxu0 0
  %1398 = vmatpush1.bf16.msra.mxu0 0
  %1399 = vmatprep.subr.bf16.mxu0 0
  %1400 = vmatpush1.bf16.msra.mxu0 0
  %1401 = vmatprep.subr.bf16.mxu0 0
  %1402 = vmatpush1.bf16.msra.mxu0 0
  %1403 = vmatprep.subr.bf16.mxu0 0
  %1404 = vmatpush1.bf16.msra.mxu0 0
  %1405 = vmatprep.subr.bf16.mxu0 0
  %1406 = vmatpush1.bf16.msra.mxu0 0
  %1407 = vmatprep.subr.bf16.mxu0 0
  %1408 = vmatpush1.bf16.msra.mxu0 0
  %1409 = vmatprep.mubr.bf16.mxu0 0
  %1410 = vmatmul.mubr.bf16.gmra.mrb[0].mxu0 %v1363
  %v1411 = vpop.f32.mrb[0].mxu0
  %v1412 = vadd.f32 0.0, %v1411
  %v1413 = vpop.f32.mrb[0].mxu0
  %v1414 = vadd.f32 0.0, %v1413
  %v1415 = vpop.f32.mrb[0].mxu0
  %v1416 = vadd.f32 0.0, %v1415
  %v1417 = vpop.f32.mrb[0].mxu0
  %v1418 = vadd.f32 0.0, %v1417
  %1419 = vdwg.mxu0
  %1420 = vmatprep.subr.bf16.mxu0 %v1375
  %1421 = vmatpush1.bf16.msra.mxu0 %v1372
  %1422 = vmatprep.subr.bf16.mxu0 0
  %1423 = vmatpush1.bf16.msra.mxu0 0
  %1424 = vmatprep.subr.bf16.mxu0 0
  %1425 = vmatpush1.bf16.msra.mxu0 0
  %1426 = vmatprep.subr.bf16.mxu0 0
  %1427 = vmatpush1.bf16.msra.mxu0 0
  %1428 = vmatprep.subr.bf16.mxu0 0
  %1429 = vmatpush1.bf16.msra.mxu0 0
  %1430 = vmatprep.subr.bf16.mxu0 0
  %1431 = vmatpush1.bf16.msra.mxu0 0
  %1432 = vmatprep.subr.bf16.mxu0 0
  %1433 = vmatpush1.bf16.msra.mxu0 0
  %1434 = vmatprep.subr.bf16.mxu0 0
  %1435 = vmatpush1.bf16.msra.mxu0 0
  %1436 = vmatprep.subr.bf16.mxu0 0
  %1437 = vmatpush1.bf16.msra.mxu0 0
  %1438 = vmatprep.subr.bf16.mxu0 0
  %1439 = vmatpush1.bf16.msra.mxu0 0
  %1440 = vmatprep.subr.bf16.mxu0 0
  %1441 = vmatpush1.bf16.msra.mxu0 0
  %1442 = vmatprep.subr.bf16.mxu0 0
  %1443 = vmatpush1.bf16.msra.mxu0 0
  %1444 = vmatprep.subr.bf16.mxu0 0
  %1445 = vmatpush1.bf16.msra.mxu0 0
  %1446 = vmatprep.subr.bf16.mxu0 0
  %1447 = vmatpush1.bf16.msra.mxu0 0
  %1448 = vmatprep.subr.bf16.mxu0 0
  %1449 = vmatpush1.bf16.msra.mxu0 0
  %1450 = vmatprep.subr.bf16.mxu0 0
  %1451 = vmatpush1.bf16.msra.mxu0 0
  %1452 = vmatprep.mubr.bf16.mxu0 0
  %1453 = vmatmul.mubr.bf16.gmra.mrb[0].mxu0 %v1363
  %v1454 = vpop.f32.mrb[0].mxu0
  %v1455 = vadd.f32 0.0, %v1454
  %v1456 = vpop.f32.mrb[0].mxu0
  %v1457 = vadd.f32 0.0, %v1456
  %v1458 = vpop.f32.mrb[0].mxu0
  %v1459 = vadd.f32 0.0, %v1458
  %v1460 = vpop.f32.mrb[0].mxu0
  %v1461 = vadd.f32 0.0, %v1460
  %1462 = vdwg.mxu0
  %v1463 = vadd.f32 %v1309, %v1412
  %v1464 = vadd.f32 %v1310, %v1414
  %v1465 = vadd.f32 %v1311, %v1455
  %v1466 = vadd.f32 %v1312, %v1457
  %v1467 = vadd.f32 %v1313, %v1416
  %v1468 = vadd.f32 %v1314, %v1418
  %v1469 = vadd.f32 %v1315, %v1459
  %v1470 = vadd.f32 %v1316, %v1461
  %v1479 = vrot.slane %v1463, 4
  %v1480 = vrot.slane %v1464, 4
  %v1481 = vrot.slane %v1465, 4
  %v1482 = vrot.slane %v1466, 4
  %v1483 = vrot.slane %v1467, 4
  %v1484 = vsel %vm54, %v1479, %v1483
  %v1485 = vrot.slane %v1468, 4
  %v1486 = vsel %vm54, %v1480, %v1485
  %v1487 = vrot.slane %v1469, 4
  %v1488 = vsel %vm54, %v1481, %v1487
  %v1489 = vrot.slane %v1470, 4
  %v1490 = vsel %vm54, %v1482, %v1489
  %1499 = vst [vmem:[%s8 + $0x20] sm:$0xf0] %v1479
  %1500 = vst [vmem:[%s8 + $0x28] sm:$0xf0] %v1480
  %1501 = vst [vmem:[%s8 + $0x30] sm:$0xf0] %v1481
  %1502 = vst [vmem:[%s8 + $0x38] sm:$0xf0] %v1482
  %1503 = vst [vmem:[%s8 + $0x40] sm:$0xff] %v1484
  %1504 = vst [vmem:[%s8 + $0x48] sm:$0xff] %v1486
  %1505 = vst [vmem:[%s8 + $0x50] sm:$0xff] %v1488
  %1506 = vst [vmem:[%s8 + $0x58] sm:$0xff] %v1490
  %v1507 = vld [vmem:[%s8 + $0x20] sm:$0xf0]
  %v1508 = vld [vmem:[%s8 + $0x28] sm:$0xf0]
  %v1509 = vld [vmem:[%s8 + $0x30] sm:$0xf0]
  %v1510 = vld [vmem:[%s8 + $0x38] sm:$0xf0]
  %v1511 = vld [vmem:[%s8 + $0x40] sm:$0xff]
  %v1512 = vld [vmem:[%s8 + $0x48] sm:$0xff]
  %v1513 = vld [vmem:[%s8 + $0x50] sm:$0xff]
  %v1514 = vld [vmem:[%s8 + $0x58] sm:$0xff]
  %v1515 = vld [vmem:[%s8 + $0x60] sm:$0xf]
  %v1516 = vld [vmem:[%s8 + $0x68] sm:$0xf]
  %v1517 = vld [vmem:[%s8 + $0x70] sm:$0xf]
  %v1518 = vld [vmem:[%s8 + $0x78] sm:$0xf]
  %vm1519 = vcmask 1047556
  %v1520 = vsel %vm1519, %v1507, 0.0
  %v1521 = vsel %vm1519, %v1508, 0.0
  %v1522 = vadd.f32 %v1520, %v1521
  %v1523 = vsel %vm1519, %v1509, 0.0
  %v1524 = vadd.f32 %v1522, %v1523
  %v1525 = vsel %vm1519, %v1510, 0.0
  %v1526 = vadd.f32 %v1524, %v1525
  %1527 = vadd.xlane.f32.xlu0 %v1526
  %v1528 = vpop.xlane.xlu0 %1527
  %v1529 = vadd.f32 %v1511, %v1512
  %v1530 = vadd.f32 %v1529, %v1513
  %v1531 = vadd.f32 %v1530, %v1514
  %1532 = vadd.xlane.f32.xlu0 %v1531
  %v1533 = vpop.xlane.xlu0 %1532
  %v1534 = vsel %vm54, %v1515, 0.0
  %v1535 = vsel %vm54, %v1516, 0.0
  %v1536 = vadd.f32 %v1534, %v1535
  %v1537 = vsel %vm54, %v1517, 0.0
  %v1538 = vadd.f32 %v1536, %v1537
  %v1539 = vsel %vm54, %v1518, 0.0
  %v1540 = vadd.f32 %v1538, %v1539
  %1541 = vadd.xlane.f32.xlu0 %v1540
  %v1542 = vpop.xlane.xlu0 %1541
  %v1543 = vmul.f32 %v1507, %v1507
  %v1544 = vmul.f32 %v1508, %v1508
  %v1545 = vmul.f32 %v1509, %v1509
  %v1546 = vmul.f32 %v1510, %v1510
  %v1547 = vmul.f32 %v1511, %v1511
  %v1548 = vmul.f32 %v1512, %v1512
  %v1549 = vmul.f32 %v1513, %v1513
  %v1550 = vmul.f32 %v1514, %v1514
  %v1551 = vmul.f32 %v1515, %v1515
  %v1552 = vmul.f32 %v1516, %v1516
  %v1553 = vmul.f32 %v1517, %v1517
  %v1554 = vmul.f32 %v1518, %v1518
  %v1555 = vsel %vm1519, %v1543, 0.0
  %v1556 = vsel %vm1519, %v1544, 0.0
  %v1557 = vadd.f32 %v1555, %v1556
  %v1558 = vsel %vm1519, %v1545, 0.0
  %v1559 = vadd.f32 %v1557, %v1558
  %v1560 = vsel %vm1519, %v1546, 0.0
  %v1561 = vadd.f32 %v1559, %v1560
  %1562 = vadd.xlane.f32.xlu0 %v1561
  %v1563 = vpop.xlane.xlu0 %1562
  %v1564 = vadd.f32 %v1547, %v1548
  %v1565 = vadd.f32 %v1564, %v1549
  %v1566 = vadd.f32 %v1565, %v1550
  %1567 = vadd.xlane.f32.xlu0 %v1566
  %v1568 = vpop.xlane.xlu0 %1567
  %v1569 = vsel %vm54, %v1551, 0.0
  %v1570 = vsel %vm54, %v1552, 0.0
  %v1571 = vadd.f32 %v1569, %v1570
  %v1572 = vsel %vm54, %v1553, 0.0
  %v1573 = vadd.f32 %v1571, %v1572
  %v1574 = vsel %vm54, %v1554, 0.0
  %v1575 = vadd.f32 %v1573, %v1574
  %1576 = vadd.xlane.f32.xlu0 %v1575
  %v1577 = vpop.xlane.xlu0 %1576
  %v1578 = vmul.f32 %v1528, 0.001953125
  %v1579 = vmul.f32 %v1533, 0.001953125
  %v1580 = vmul.f32 %v1542, 0.001953125
  %v1581 = vmul.f32 %v1563, 0.001953125
  %v1582 = vmul.f32 %v1568, 0.001953125
  %v1583 = vmul.f32 %v1577, 0.001953125
  %v1584 = vmul.f32 %v1578, %v1578
  %v1585 = vmul.f32 %v1579, %v1579
  %v1586 = vmul.f32 %v1580, %v1580
  %v1587 = vsub.f32 %v1581, %v1584
  %v1588 = vsub.f32 %v1582, %v1585
  %v1589 = vsub.f32 %v1583, %v1586
  %v1590 = vmax.f32 %v1587, 0.0
  %v1591 = vmax.f32 %v1588, 0.0
  %v1592 = vmax.f32 %v1589, 0.0
  %v1593 = vld [vmem:[%s6] sm:$0xff]
  %v1594 = vld [vmem:[%s6 + $0x8] sm:$0xff]
  %v1595 = vadd.f32 %v1590, 1e-05
  %v1596 = vadd.f32 %v1591, 1e-05
  %v1597 = vadd.f32 %v1592, 1e-05
  %v1598 = vrsqrt.pop %v1595
  %v1599 = vrsqrt.pop %v1596
  %v1600 = vrsqrt.pop %v1597
  %v1604 = vrot.slane %v1598, 4
  %v1605 = vrot.slane %v1599, 4
  %v1606 = vsel %vm54, %v1604, %v1605
  %v1607 = vrot.slane %v1600, 4
  %v1608 = vsel %vm54, %v1605, %v1607
  %v1611 = vmul.f32 %v1593, %v1606
  %v1612 = vmul.f32 %v1594, %v1608
  %v1613 = vld [vmem:[%s7] sm:$0xff]
  %v1614 = vld [vmem:[%s7 + $0x8] sm:$0xff]
  %v1617 = vrot.slane %v1611, 4
  %v1618 = vrot.slane %v1612, 4
  %v1619 = vsel %vm54, %v1617, %v1618
  %v1623 = vmul.f32 %v1578, %v1617
  %v1624 = vmul.f32 %v1579, %v1619
  %v1625 = vmul.f32 %v1580, %v1618
  %v1629 = vrot.slane %v1623, 4
  %v1630 = vrot.slane %v1624, 4
  %v1631 = vsel %vm54, %v1629, %v1630
  %v1632 = vrot.slane %v1625, 4
  %v1633 = vsel %vm54, %v1630, %v1632
  %v1636 = vsub.f32 %v1613, %v1631
  %v1637 = vsub.f32 %v1614, %v1633
  %1638 = vset.pattern.permute.xlu0 0
  %1639 = vperm.xlu0 %1638, %v1611
  %v1640 = vpop.permute.xlu0 %1639
  %1641 = vset.pattern.permute.xlu0 0
  %1642 = vperm.xlu0 %1641, %v1612
  %v1643 = vpop.permute.xlu0 %1642
  %v1644 = vrot.slane %v1640, 4
  %v1645 = vrot.slane %v1643, 4
  %v1646 = vsel %vm54, %v1644, %v1645
  %v1650 = vmul.f32 %v1507, %v1644
  %v1651 = vmul.f32 %v1508, %v1644
  %v1652 = vmul.f32 %v1509, %v1644
  %v1653 = vmul.f32 %v1510, %v1644
  %v1654 = vmul.f32 %v1511, %v1646
  %v1655 = vmul.f32 %v1512, %v1646
  %v1656 = vmul.f32 %v1513, %v1646
  %v1657 = vmul.f32 %v1514, %v1646
  %v1658 = vmul.f32 %v1515, %v1645
  %v1659 = vmul.f32 %v1516, %v1645
  %v1660 = vmul.f32 %v1517, %v1645
  %v1661 = vmul.f32 %v1518, %v1645
  %1663 = vset.pattern.permute.xlu0 0
  %1664 = vperm.xlu0 %1663, %v1636
  %v1665 = vpop.permute.xlu0 %1664
  %1667 = vset.pattern.permute.xlu0 0
  %1668 = vperm.xlu0 %1667, %v1637
  %v1669 = vpop.permute.xlu0 %1668
  %v1670 = vrot.slane %v1665, 4
  %v1671 = vrot.slane %v1669, 4
  %v1672 = vsel %vm54, %v1670, %v1671
  %v1676 = vadd.f32 %v1650, %v1670
  %v1677 = vadd.f32 %v1651, %v1670
  %v1678 = vadd.f32 %v1652, %v1670
  %v1679 = vadd.f32 %v1653, %v1670
  %v1680 = vadd.f32 %v1654, %v1672
  %v1681 = vadd.f32 %v1655, %v1672
  %v1682 = vadd.f32 %v1656, %v1672
  %v1683 = vadd.f32 %v1657, %v1672
  %v1684 = vadd.f32 %v1658, %v1671
  %v1685 = vadd.f32 %v1659, %v1671
  %v1686 = vadd.f32 %v1660, %v1671
  %v1687 = vadd.f32 %v1661, %v1671
  %v1688 = vmax.f32 %v1676, 0.0
  %v1689 = vmax.f32 %v1677, 0.0
  %v1690 = vmax.f32 %v1678, 0.0
  %v1691 = vmax.f32 %v1679, 0.0
  %v1692 = vmax.f32 %v1680, 0.0
  %v1693 = vmax.f32 %v1681, 0.0
  %v1694 = vmax.f32 %v1682, 0.0
  %v1695 = vmax.f32 %v1683, 0.0
  %v1696 = vmax.f32 %v1684, 0.0
  %v1697 = vmax.f32 %v1685, 0.0
  %v1698 = vmax.f32 %v1686, 0.0
  %v1699 = vmax.f32 %v1687, 0.0
  %v1712 = vrot.slane %v1688, 4
  %v1713 = vrot.slane %v1692, 4
  %v1714 = vsel %vm54, %v1712, %v1713
  %v1715 = vrot.slane %v1689, 4
  %v1716 = vrot.slane %v1693, 4
  %v1717 = vsel %vm54, %v1715, %v1716
  %v1718 = vrot.slane %v1690, 4
  %v1719 = vrot.slane %v1694, 4
  %v1720 = vsel %vm54, %v1718, %v1719
  %v1721 = vrot.slane %v1691, 4
  %v1722 = vrot.slane %v1695, 4
  %v1723 = vsel %vm54, %v1721, %v1722
  %v1724 = vrot.slane %v1696, 4
  %v1725 = vsel %vm54, %v1713, %v1724
  %v1726 = vrot.slane %v1697, 4
  %v1727 = vsel %vm54, %v1716, %v1726
  %v1728 = vrot.slane %v1698, 4
  %v1729 = vsel %vm54, %v1719, %v1728
  %v1730 = vrot.slane %v1699, 4
  %v1731 = vsel %vm54, %v1722, %v1730
  %1740 = vrot.lane.b32.xlu0 %v1714, 17
  %v1741 = vpop.permute.xlu0 %1740
  %1742 = vrot.lane.b32.xlu0 %v1725, 17
  %v1743 = vpop.permute.xlu0 %1742
  %1744 = vrot.lane.b32.xlu0 %v1717, 17
  %v1745 = vpop.permute.xlu0 %1744
  %1746 = vrot.lane.b32.xlu0 %v1727, 17
  %v1747 = vpop.permute.xlu0 %1746
  %1748 = vrot.lane.b32.xlu0 %v1720, 17
  %v1749 = vpop.permute.xlu0 %1748
  %1750 = vrot.lane.b32.xlu0 %v1729, 17
  %v1751 = vpop.permute.xlu0 %1750
  %1752 = vrot.lane.b32.xlu0 %v1723, 17
  %v1753 = vpop.permute.xlu0 %1752
  %1754 = vrot.lane.b32.xlu0 %v1731, 17
  %v1755 = vpop.permute.xlu0 %1754
  %v1756 = vsel %vm121, %v1749, %v1753
  %v1757 = vsel %vm121, %v1751, %v1755
  %v1758 = vsel %vm121, %v1745, %v1749
  %v1759 = vsel %vm121, %v1747, %v1751
  %v1760 = vsel %vm121, %v1741, %v1745
  %v1761 = vsel %vm121, %v1743, %v1747
  %v1762 = vsel %vm121, %v1753, %v1741
  %v1763 = vsel %vm121, %v1755, %v1743
  %v1764 = vmul.f32 %v1762, %v129
  %v1765 = vmul.f32 %v1760, %v133
  %v1766 = vmul.f32 %v1758, %v137
  %v1767 = vmul.f32 %v1756, %v141
  %v1768 = vmul.f32 %v1763, %v129
  %v1769 = vmul.f32 %v1761, %v133
  %v1770 = vmul.f32 %v1759, %v137
  %v1771 = vmul.f32 %v1757, %v141
  %v1772 = vpack.c.bf16 %v1768, %v1764
  %v1773 = vpack.c.bf16 %v1769, %v1765
  %v1774 = vpack.c.bf16 %v1770, %v1766
  %v1775 = vpack.c.bf16 %v1771, %v1767
  %v1776 = vld [vmem:[%s5] sm:$0xf]
  %v1777 = vld [vmem:[%s5 + $0x4] sm:$0x3]
  %1778 = vrot.lane.b32.xlu0 %v1714, 16
  %v1779 = vpop.permute.xlu0 %1778
  %1780 = vrot.lane.b32.xlu0 %v1725, 16
  %v1781 = vpop.permute.xlu0 %1780
  %1782 = vrot.lane.b32.xlu0 %v1717, 16
  %v1783 = vpop.permute.xlu0 %1782
  %1784 = vrot.lane.b32.xlu0 %v1727, 16
  %v1785 = vpop.permute.xlu0 %1784
  %1786 = vrot.lane.b32.xlu0 %v1720, 16
  %v1787 = vpop.permute.xlu0 %1786
  %1788 = vrot.lane.b32.xlu0 %v1729, 16
  %v1789 = vpop.permute.xlu0 %1788
  %1790 = vrot.lane.b32.xlu0 %v1723, 16
  %v1791 = vpop.permute.xlu0 %1790
  %1792 = vrot.lane.b32.xlu0 %v1731, 16
  %v1793 = vpop.permute.xlu0 %1792
  %v1794 = vsel %vm160, %v1787, %v1791
  %v1795 = vsel %vm160, %v1789, %v1793
  %v1796 = vsel %vm160, %v1783, %v1787
  %v1797 = vsel %vm160, %v1785, %v1789
  %v1798 = vsel %vm160, %v1779, %v1783
  %v1799 = vsel %vm160, %v1781, %v1785
  %v1800 = vsel %vm160, %v1791, %v1779
  %v1801 = vsel %vm160, %v1793, %v1781
  %v1802 = vmul.f32 %v1800, %v168
  %v1803 = vmul.f32 %v1798, %v172
  %v1804 = vmul.f32 %v1796, %v176
  %v1805 = vmul.f32 %v1794, %v180
  %v1806 = vmul.f32 %v1801, %v168
  %v1807 = vmul.f32 %v1799, %v172
  %v1808 = vmul.f32 %v1797, %v176
  %v1809 = vmul.f32 %v1795, %v180
  %v1810 = vpack.c.bf16 %v1806, %v1802
  %v1811 = vpack.c.bf16 %v1807, %v1803
  %v1812 = vpack.c.bf16 %v1808, %v1804
  %v1813 = vpack.c.bf16 %v1809, %v1805
  %s1814 = scalar_lea.vmem %s5, 8
  %v1815 = vld [vmem:[%s1814] sm:$0xf]
  %v1816 = vld [vmem:[%s1814 + $0x4] sm:$0x3]
  %v1819 = vunpack.c.l.b16 %v1815
  %v1820 = vunpack.c.l.b16 %v1816
  %v1821 = vpack.c.b16 %v1820, %v1819
  %vm1822 = vcmask 130048
  %v1824 = vsel %vm1822, %v1821, 0
  %1826 = vmatprep.subr.bf16.mxu0 %v1811
  %1827 = vmatpush1.bf16.msra.mxu0 %v1810
  %1828 = vmatprep.subr.bf16.mxu0 0
  %1829 = vmatpush1.bf16.msra.mxu0 0
  %1830 = vmatprep.subr.bf16.mxu0 0
  %1831 = vmatpush1.bf16.msra.mxu0 0
  %1832 = vmatprep.subr.bf16.mxu0 0
  %1833 = vmatpush1.bf16.msra.mxu0 0
  %1834 = vmatprep.subr.bf16.mxu0 0
  %1835 = vmatpush1.bf16.msra.mxu0 0
  %1836 = vmatprep.subr.bf16.mxu0 0
  %1837 = vmatpush1.bf16.msra.mxu0 0
  %1838 = vmatprep.subr.bf16.mxu0 0
  %1839 = vmatpush1.bf16.msra.mxu0 0
  %1840 = vmatprep.subr.bf16.mxu0 0
  %1841 = vmatpush1.bf16.msra.mxu0 0
  %1842 = vmatprep.subr.bf16.mxu0 0
  %1843 = vmatpush1.bf16.msra.mxu0 0
  %1844 = vmatprep.subr.bf16.mxu0 0
  %1845 = vmatpush1.bf16.msra.mxu0 0
  %1846 = vmatprep.subr.bf16.mxu0 0
  %1847 = vmatpush1.bf16.msra.mxu0 0
  %1848 = vmatprep.subr.bf16.mxu0 0
  %1849 = vmatpush1.bf16.msra.mxu0 0
  %1850 = vmatprep.subr.bf16.mxu0 0
  %1851 = vmatpush1.bf16.msra.mxu0 0
  %1852 = vmatprep.subr.bf16.mxu0 0
  %1853 = vmatpush1.bf16.msra.mxu0 0
  %1854 = vmatprep.subr.bf16.mxu0 0
  %1855 = vmatpush1.bf16.msra.mxu0 0
  %1856 = vmatprep.subr.bf16.mxu0 0
  %1857 = vmatpush1.bf16.msra.mxu0 0
  %1858 = vmatprep.mubr.bf16.mxu0 0
  %1859 = vmatmul.mubr.bf16.gmra.mrb[0].mxu0 %v1824
  %v1860 = vpop.f32.mrb[0].mxu0
  %v1861 = vadd.f32 0.0, %v1860
  %v1862 = vpop.f32.mrb[0].mxu0
  %v1863 = vadd.f32 0.0, %v1862
  %v1864 = vpop.f32.mrb[0].mxu0
  %v1865 = vadd.f32 0.0, %v1864
  %v1866 = vpop.f32.mrb[0].mxu0
  %v1867 = vadd.f32 0.0, %v1866
  %1868 = vdwg.mxu0
  %1869 = vmatprep.subr.bf16.mxu0 %v1813
  %1870 = vmatpush1.bf16.msra.mxu0 %v1812
  %1871 = vmatprep.subr.bf16.mxu0 0
  %1872 = vmatpush1.bf16.msra.mxu0 0
  %1873 = vmatprep.subr.bf16.mxu0 0
  %1874 = vmatpush1.bf16.msra.mxu0 0
  %1875 = vmatprep.subr.bf16.mxu0 0
  %1876 = vmatpush1.bf16.msra.mxu0 0
  %1877 = vmatprep.subr.bf16.mxu0 0
  %1878 = vmatpush1.bf16.msra.mxu0 0
  %1879 = vmatprep.subr.bf16.mxu0 0
  %1880 = vmatpush1.bf16.msra.mxu0 0
  %1881 = vmatprep.subr.bf16.mxu0 0
  %1882 = vmatpush1.bf16.msra.mxu0 0
  %1883 = vmatprep.subr.bf16.mxu0 0
  %1884 = vmatpush1.bf16.msra.mxu0 0
  %1885 = vmatprep.subr.bf16.mxu0 0
  %1886 = vmatpush1.bf16.msra.mxu0 0
  %1887 = vmatprep.subr.bf16.mxu0 0
  %1888 = vmatpush1.bf16.msra.mxu0 0
  %1889 = vmatprep.subr.bf16.mxu0 0
  %1890 = vmatpush1.bf16.msra.mxu0 0
  %1891 = vmatprep.subr.bf16.mxu0 0
  %1892 = vmatpush1.bf16.msra.mxu0 0
  %1893 = vmatprep.subr.bf16.mxu0 0
  %1894 = vmatpush1.bf16.msra.mxu0 0
  %1895 = vmatprep.subr.bf16.mxu0 0
  %1896 = vmatpush1.bf16.msra.mxu0 0
  %1897 = vmatprep.subr.bf16.mxu0 0
  %1898 = vmatpush1.bf16.msra.mxu0 0
  %1899 = vmatprep.subr.bf16.mxu0 0
  %1900 = vmatpush1.bf16.msra.mxu0 0
  %1901 = vmatprep.mubr.bf16.mxu0 0
  %1902 = vmatmul.mubr.bf16.gmra.mrb[0].mxu0 %v1824
  %v1903 = vpop.f32.mrb[0].mxu0
  %v1904 = vadd.f32 0.0, %v1903
  %v1905 = vpop.f32.mrb[0].mxu0
  %v1906 = vadd.f32 0.0, %v1905
  %v1907 = vpop.f32.mrb[0].mxu0
  %v1908 = vadd.f32 0.0, %v1907
  %v1909 = vpop.f32.mrb[0].mxu0
  %v1910 = vadd.f32 0.0, %v1909
  %1911 = vdwg.mxu0
  %v1914 = vunpack.c.l.b16 %v1776
  %v1915 = vunpack.c.l.b16 %v1777
  %v1916 = vpack.c.b16 %v1915, %v1914
  %v1918 = vsel %vm1822, %v1916, 0
  %1920 = vmatprep.subr.bf16.mxu0 %v1773
  %1921 = vmatpush1.bf16.msra.mxu0 %v1772
  %1922 = vmatprep.subr.bf16.mxu0 0
  %1923 = vmatpush1.bf16.msra.mxu0 0
  %1924 = vmatprep.subr.bf16.mxu0 0
  %1925 = vmatpush1.bf16.msra.mxu0 0
  %1926 = vmatprep.subr.bf16.mxu0 0
  %1927 = vmatpush1.bf16.msra.mxu0 0
  %1928 = vmatprep.subr.bf16.mxu0 0
  %1929 = vmatpush1.bf16.msra.mxu0 0
  %1930 = vmatprep.subr.bf16.mxu0 0
  %1931 = vmatpush1.bf16.msra.mxu0 0
  %1932 = vmatprep.subr.bf16.mxu0 0
  %1933 = vmatpush1.bf16.msra.mxu0 0
  %1934 = vmatprep.subr.bf16.mxu0 0
  %1935 = vmatpush1.bf16.msra.mxu0 0
  %1936 = vmatprep.subr.bf16.mxu0 0
  %1937 = vmatpush1.bf16.msra.mxu0 0
  %1938 = vmatprep.subr.bf16.mxu0 0
  %1939 = vmatpush1.bf16.msra.mxu0 0
  %1940 = vmatprep.subr.bf16.mxu0 0
  %1941 = vmatpush1.bf16.msra.mxu0 0
  %1942 = vmatprep.subr.bf16.mxu0 0
  %1943 = vmatpush1.bf16.msra.mxu0 0
  %1944 = vmatprep.subr.bf16.mxu0 0
  %1945 = vmatpush1.bf16.msra.mxu0 0
  %1946 = vmatprep.subr.bf16.mxu0 0
  %1947 = vmatpush1.bf16.msra.mxu0 0
  %1948 = vmatprep.subr.bf16.mxu0 0
  %1949 = vmatpush1.bf16.msra.mxu0 0
  %1950 = vmatprep.subr.bf16.mxu0 0
  %1951 = vmatpush1.bf16.msra.mxu0 0
  %1952 = vmatprep.mubr.bf16.mxu0 0
  %1953 = vmatmul.mubr.bf16.gmra.mrb[0].mxu0 %v1918
  %v1954 = vpop.f32.mrb[0].mxu0
  %v1955 = vadd.f32 %v1861, %v1954
  %v1956 = vpop.f32.mrb[0].mxu0
  %v1957 = vadd.f32 %v1863, %v1956
  %v1958 = vpop.f32.mrb[0].mxu0
  %v1959 = vadd.f32 %v1865, %v1958
  %v1960 = vpop.f32.mrb[0].mxu0
  %v1961 = vadd.f32 %v1867, %v1960
  %1962 = vdwg.mxu0
  %1963 = vmatprep.subr.bf16.mxu0 %v1775
  %1964 = vmatpush1.bf16.msra.mxu0 %v1774
  %1965 = vmatprep.subr.bf16.mxu0 0
  %1966 = vmatpush1.bf16.msra.mxu0 0
  %1967 = vmatprep.subr.bf16.mxu0 0
  %1968 = vmatpush1.bf16.msra.mxu0 0
  %1969 = vmatprep.subr.bf16.mxu0 0
  %1970 = vmatpush1.bf16.msra.mxu0 0
  %1971 = vmatprep.subr.bf16.mxu0 0
  %1972 = vmatpush1.bf16.msra.mxu0 0
  %1973 = vmatprep.subr.bf16.mxu0 0
  %1974 = vmatpush1.bf16.msra.mxu0 0
  %1975 = vmatprep.subr.bf16.mxu0 0
  %1976 = vmatpush1.bf16.msra.mxu0 0
  %1977 = vmatprep.subr.bf16.mxu0 0
  %1978 = vmatpush1.bf16.msra.mxu0 0
  %1979 = vmatprep.subr.bf16.mxu0 0
  %1980 = vmatpush1.bf16.msra.mxu0 0
  %1981 = vmatprep.subr.bf16.mxu0 0
  %1982 = vmatpush1.bf16.msra.mxu0 0
  %1983 = vmatprep.subr.bf16.mxu0 0
  %1984 = vmatpush1.bf16.msra.mxu0 0
  %1985 = vmatprep.subr.bf16.mxu0 0
  %1986 = vmatpush1.bf16.msra.mxu0 0
  %1987 = vmatprep.subr.bf16.mxu0 0
  %1988 = vmatpush1.bf16.msra.mxu0 0
  %1989 = vmatprep.subr.bf16.mxu0 0
  %1990 = vmatpush1.bf16.msra.mxu0 0
  %1991 = vmatprep.subr.bf16.mxu0 0
  %1992 = vmatpush1.bf16.msra.mxu0 0
  %1993 = vmatprep.subr.bf16.mxu0 0
  %1994 = vmatpush1.bf16.msra.mxu0 0
  %1995 = vmatprep.mubr.bf16.mxu0 0
  %1996 = vmatmul.mubr.bf16.gmra.mrb[0].mxu0 %v1918
  %v1997 = vpop.f32.mrb[0].mxu0
  %v1998 = vadd.f32 %v1904, %v1997
  %v1999 = vpop.f32.mrb[0].mxu0
  %v2000 = vadd.f32 %v1906, %v1999
  %v2001 = vpop.f32.mrb[0].mxu0
  %v2002 = vadd.f32 %v1908, %v2001
  %v2003 = vpop.f32.mrb[0].mxu0
  %v2004 = vadd.f32 %v1910, %v2003
  %2005 = vdwg.mxu0
  %2006 = vrot.lane.b32.xlu0 %v1714, 15
  %v2007 = vpop.permute.xlu0 %2006
  %2008 = vrot.lane.b32.xlu0 %v1725, 15
  %v2009 = vpop.permute.xlu0 %2008
  %2010 = vrot.lane.b32.xlu0 %v1717, 15
  %v2011 = vpop.permute.xlu0 %2010
  %2012 = vrot.lane.b32.xlu0 %v1727, 15
  %v2013 = vpop.permute.xlu0 %2012
  %2014 = vrot.lane.b32.xlu0 %v1720, 15
  %v2015 = vpop.permute.xlu0 %2014
  %2016 = vrot.lane.b32.xlu0 %v1729, 15
  %v2017 = vpop.permute.xlu0 %2016
  %2018 = vrot.lane.b32.xlu0 %v1723, 15
  %v2019 = vpop.permute.xlu0 %2018
  %2020 = vrot.lane.b32.xlu0 %v1731, 15
  %v2021 = vpop.permute.xlu0 %2020
  %v2022 = vsel %vm414, %v2015, %v2019
  %v2023 = vsel %vm414, %v2017, %v2021
  %v2024 = vsel %vm414, %v2011, %v2015
  %v2025 = vsel %vm414, %v2013, %v2017
  %v2026 = vsel %vm414, %v2007, %v2011
  %v2027 = vsel %vm414, %v2009, %v2013
  %v2028 = vsel %vm414, %v2019, %v2007
  %v2029 = vsel %vm414, %v2021, %v2009
  %v2030 = vmul.f32 %v2028, %v422
  %v2031 = vmul.f32 %v2026, %v426
  %v2032 = vmul.f32 %v2024, %v430
  %v2033 = vmul.f32 %v2022, %v434
  %v2034 = vmul.f32 %v2029, %v422
  %v2035 = vmul.f32 %v2027, %v426
  %v2036 = vmul.f32 %v2025, %v430
  %v2037 = vmul.f32 %v2023, %v434
  %v2038 = vpack.c.bf16 %v2034, %v2030
  %v2039 = vpack.c.bf16 %v2035, %v2031
  %v2040 = vpack.c.bf16 %v2036, %v2032
  %v2041 = vpack.c.bf16 %v2037, %v2033
  %s2042 = scalar_lea.vmem %s5, 16
  %v2043 = vld [vmem:[%s2042] sm:$0xf]
  %v2044 = vld [vmem:[%s2042 + $0x4] sm:$0x3]
  %v2047 = vunpack.c.l.b16 %v2043
  %v2048 = vunpack.c.l.b16 %v2044
  %v2049 = vpack.c.b16 %v2048, %v2047
  %v2051 = vsel %vm1822, %v2049, 0
  %2053 = vmatprep.subr.bf16.mxu0 %v2039
  %2054 = vmatpush1.bf16.msra.mxu0 %v2038
  %2055 = vmatprep.subr.bf16.mxu0 0
  %2056 = vmatpush1.bf16.msra.mxu0 0
  %2057 = vmatprep.subr.bf16.mxu0 0
  %2058 = vmatpush1.bf16.msra.mxu0 0
  %2059 = vmatprep.subr.bf16.mxu0 0
  %2060 = vmatpush1.bf16.msra.mxu0 0
  %2061 = vmatprep.subr.bf16.mxu0 0
  %2062 = vmatpush1.bf16.msra.mxu0 0
  %2063 = vmatprep.subr.bf16.mxu0 0
  %2064 = vmatpush1.bf16.msra.mxu0 0
  %2065 = vmatprep.subr.bf16.mxu0 0
  %2066 = vmatpush1.bf16.msra.mxu0 0
  %2067 = vmatprep.subr.bf16.mxu0 0
  %2068 = vmatpush1.bf16.msra.mxu0 0
  %2069 = vmatprep.subr.bf16.mxu0 0
  %2070 = vmatpush1.bf16.msra.mxu0 0
  %2071 = vmatprep.subr.bf16.mxu0 0
  %2072 = vmatpush1.bf16.msra.mxu0 0
  %2073 = vmatprep.subr.bf16.mxu0 0
  %2074 = vmatpush1.bf16.msra.mxu0 0
  %2075 = vmatprep.subr.bf16.mxu0 0
  %2076 = vmatpush1.bf16.msra.mxu0 0
  %2077 = vmatprep.subr.bf16.mxu0 0
  %2078 = vmatpush1.bf16.msra.mxu0 0
  %2079 = vmatprep.subr.bf16.mxu0 0
  %2080 = vmatpush1.bf16.msra.mxu0 0
  %2081 = vmatprep.subr.bf16.mxu0 0
  %2082 = vmatpush1.bf16.msra.mxu0 0
  %2083 = vmatprep.subr.bf16.mxu0 0
  %2084 = vmatpush1.bf16.msra.mxu0 0
  %2085 = vmatprep.mubr.bf16.mxu0 0
  %2086 = vmatmul.mubr.bf16.gmra.mrb[0].mxu0 %v2051
  %v2087 = vpop.f32.mrb[0].mxu0
  %v2088 = vadd.f32 0.0, %v2087
  %v2089 = vpop.f32.mrb[0].mxu0
  %v2090 = vadd.f32 0.0, %v2089
  %v2091 = vpop.f32.mrb[0].mxu0
  %v2092 = vadd.f32 0.0, %v2091
  %v2093 = vpop.f32.mrb[0].mxu0
  %v2094 = vadd.f32 0.0, %v2093
  %2095 = vdwg.mxu0
  %2096 = vmatprep.subr.bf16.mxu0 %v2041
  %2097 = vmatpush1.bf16.msra.mxu0 %v2040
  %2098 = vmatprep.subr.bf16.mxu0 0
  %2099 = vmatpush1.bf16.msra.mxu0 0
  %2100 = vmatprep.subr.bf16.mxu0 0
  %2101 = vmatpush1.bf16.msra.mxu0 0
  %2102 = vmatprep.subr.bf16.mxu0 0
  %2103 = vmatpush1.bf16.msra.mxu0 0
  %2104 = vmatprep.subr.bf16.mxu0 0
  %2105 = vmatpush1.bf16.msra.mxu0 0
  %2106 = vmatprep.subr.bf16.mxu0 0
  %2107 = vmatpush1.bf16.msra.mxu0 0
  %2108 = vmatprep.subr.bf16.mxu0 0
  %2109 = vmatpush1.bf16.msra.mxu0 0
  %2110 = vmatprep.subr.bf16.mxu0 0
  %2111 = vmatpush1.bf16.msra.mxu0 0
  %2112 = vmatprep.subr.bf16.mxu0 0
  %2113 = vmatpush1.bf16.msra.mxu0 0
  %2114 = vmatprep.subr.bf16.mxu0 0
  %2115 = vmatpush1.bf16.msra.mxu0 0
  %2116 = vmatprep.subr.bf16.mxu0 0
  %2117 = vmatpush1.bf16.msra.mxu0 0
  %2118 = vmatprep.subr.bf16.mxu0 0
  %2119 = vmatpush1.bf16.msra.mxu0 0
  %2120 = vmatprep.subr.bf16.mxu0 0
  %2121 = vmatpush1.bf16.msra.mxu0 0
  %2122 = vmatprep.subr.bf16.mxu0 0
  %2123 = vmatpush1.bf16.msra.mxu0 0
  %2124 = vmatprep.subr.bf16.mxu0 0
  %2125 = vmatpush1.bf16.msra.mxu0 0
  %2126 = vmatprep.subr.bf16.mxu0 0
  %2127 = vmatpush1.bf16.msra.mxu0 0
  %2128 = vmatprep.mubr.bf16.mxu0 0
  %2129 = vmatmul.mubr.bf16.gmra.mrb[0].mxu0 %v2051
  %v2130 = vpop.f32.mrb[0].mxu0
  %v2131 = vadd.f32 0.0, %v2130
  %v2132 = vpop.f32.mrb[0].mxu0
  %v2133 = vadd.f32 0.0, %v2132
  %v2134 = vpop.f32.mrb[0].mxu0
  %v2135 = vadd.f32 0.0, %v2134
  %v2136 = vpop.f32.mrb[0].mxu0
  %v2137 = vadd.f32 0.0, %v2136
  %2138 = vdwg.mxu0
  %v2139 = vadd.f32 %v1955, %v2088
  %v2140 = vadd.f32 %v1957, %v2090
  %v2141 = vadd.f32 %v1998, %v2131
  %v2142 = vadd.f32 %v2000, %v2133
  %v2143 = vadd.f32 %v1959, %v2092
  %v2144 = vadd.f32 %v1961, %v2094
  %v2145 = vadd.f32 %v2002, %v2135
  %v2146 = vadd.f32 %v2004, %v2137
  %2147 = vrot.lane.b32.xlu0 %v1714, 1
  %v2148 = vpop.permute.xlu0 %2147
  %2149 = vrot.lane.b32.xlu0 %v1725, 1
  %v2150 = vpop.permute.xlu0 %2149
  %2151 = vrot.lane.b32.xlu0 %v1717, 1
  %v2152 = vpop.permute.xlu0 %2151
  %2153 = vrot.lane.b32.xlu0 %v1727, 1
  %v2154 = vpop.permute.xlu0 %2153
  %2155 = vrot.lane.b32.xlu0 %v1720, 1
  %v2156 = vpop.permute.xlu0 %2155
  %2157 = vrot.lane.b32.xlu0 %v1729, 1
  %v2158 = vpop.permute.xlu0 %2157
  %2159 = vrot.lane.b32.xlu0 %v1723, 1
  %v2160 = vpop.permute.xlu0 %2159
  %2161 = vrot.lane.b32.xlu0 %v1731, 1
  %v2162 = vpop.permute.xlu0 %2161
  %v2163 = vsel %vm568, %v2156, %v2160
  %v2164 = vsel %vm568, %v2158, %v2162
  %v2165 = vsel %vm568, %v2152, %v2156
  %v2166 = vsel %vm568, %v2154, %v2158
  %v2167 = vsel %vm568, %v2148, %v2152
  %v2168 = vsel %vm568, %v2150, %v2154
  %v2169 = vsel %vm568, %v2160, %v2148
  %v2170 = vsel %vm568, %v2162, %v2150
  %v2171 = vmul.f32 %v2169, %v576
  %v2172 = vmul.f32 %v2167, %v580
  %v2173 = vmul.f32 %v2165, %v584
  %v2174 = vmul.f32 %v2163, %v588
  %v2175 = vmul.f32 %v2170, %v576
  %v2176 = vmul.f32 %v2168, %v580
  %v2177 = vmul.f32 %v2166, %v584
  %v2178 = vmul.f32 %v2164, %v588
  %v2179 = vpack.c.bf16 %v2175, %v2171
  %v2180 = vpack.c.bf16 %v2176, %v2172
  %v2181 = vpack.c.bf16 %v2177, %v2173
  %v2182 = vpack.c.bf16 %v2178, %v2174
  %s2183 = scalar_lea.vmem %s5, 24
  %v2184 = vld [vmem:[%s2183] sm:$0xf]
  %v2185 = vld [vmem:[%s2183 + $0x4] sm:$0x3]
  %v2188 = vunpack.c.l.b16 %v2184
  %v2189 = vunpack.c.l.b16 %v2185
  %v2190 = vpack.c.b16 %v2189, %v2188
  %v2192 = vsel %vm1822, %v2190, 0
  %2194 = vmatprep.subr.bf16.mxu0 %v2180
  %2195 = vmatpush1.bf16.msra.mxu0 %v2179
  %2196 = vmatprep.subr.bf16.mxu0 0
  %2197 = vmatpush1.bf16.msra.mxu0 0
  %2198 = vmatprep.subr.bf16.mxu0 0
  %2199 = vmatpush1.bf16.msra.mxu0 0
  %2200 = vmatprep.subr.bf16.mxu0 0
  %2201 = vmatpush1.bf16.msra.mxu0 0
  %2202 = vmatprep.subr.bf16.mxu0 0
  %2203 = vmatpush1.bf16.msra.mxu0 0
  %2204 = vmatprep.subr.bf16.mxu0 0
  %2205 = vmatpush1.bf16.msra.mxu0 0
  %2206 = vmatprep.subr.bf16.mxu0 0
  %2207 = vmatpush1.bf16.msra.mxu0 0
  %2208 = vmatprep.subr.bf16.mxu0 0
  %2209 = vmatpush1.bf16.msra.mxu0 0
  %2210 = vmatprep.subr.bf16.mxu0 0
  %2211 = vmatpush1.bf16.msra.mxu0 0
  %2212 = vmatprep.subr.bf16.mxu0 0
  %2213 = vmatpush1.bf16.msra.mxu0 0
  %2214 = vmatprep.subr.bf16.mxu0 0
  %2215 = vmatpush1.bf16.msra.mxu0 0
  %2216 = vmatprep.subr.bf16.mxu0 0
  %2217 = vmatpush1.bf16.msra.mxu0 0
  %2218 = vmatprep.subr.bf16.mxu0 0
  %2219 = vmatpush1.bf16.msra.mxu0 0
  %2220 = vmatprep.subr.bf16.mxu0 0
  %2221 = vmatpush1.bf16.msra.mxu0 0
  %2222 = vmatprep.subr.bf16.mxu0 0
  %2223 = vmatpush1.bf16.msra.mxu0 0
  %2224 = vmatprep.subr.bf16.mxu0 0
  %2225 = vmatpush1.bf16.msra.mxu0 0
  %2226 = vmatprep.mubr.bf16.mxu0 0
  %2227 = vmatmul.mubr.bf16.gmra.mrb[0].mxu0 %v2192
  %v2228 = vpop.f32.mrb[0].mxu0
  %v2229 = vadd.f32 0.0, %v2228
  %v2230 = vpop.f32.mrb[0].mxu0
  %v2231 = vadd.f32 0.0, %v2230
  %v2232 = vpop.f32.mrb[0].mxu0
  %v2233 = vadd.f32 0.0, %v2232
  %v2234 = vpop.f32.mrb[0].mxu0
  %v2235 = vadd.f32 0.0, %v2234
  %2236 = vdwg.mxu0
  %2237 = vmatprep.subr.bf16.mxu0 %v2182
  %2238 = vmatpush1.bf16.msra.mxu0 %v2181
  %2239 = vmatprep.subr.bf16.mxu0 0
  %2240 = vmatpush1.bf16.msra.mxu0 0
  %2241 = vmatprep.subr.bf16.mxu0 0
  %2242 = vmatpush1.bf16.msra.mxu0 0
  %2243 = vmatprep.subr.bf16.mxu0 0
  %2244 = vmatpush1.bf16.msra.mxu0 0
  %2245 = vmatprep.subr.bf16.mxu0 0
  %2246 = vmatpush1.bf16.msra.mxu0 0
  %2247 = vmatprep.subr.bf16.mxu0 0
  %2248 = vmatpush1.bf16.msra.mxu0 0
  %2249 = vmatprep.subr.bf16.mxu0 0
  %2250 = vmatpush1.bf16.msra.mxu0 0
  %2251 = vmatprep.subr.bf16.mxu0 0
  %2252 = vmatpush1.bf16.msra.mxu0 0
  %2253 = vmatprep.subr.bf16.mxu0 0
  %2254 = vmatpush1.bf16.msra.mxu0 0
  %2255 = vmatprep.subr.bf16.mxu0 0
  %2256 = vmatpush1.bf16.msra.mxu0 0
  %2257 = vmatprep.subr.bf16.mxu0 0
  %2258 = vmatpush1.bf16.msra.mxu0 0
  %2259 = vmatprep.subr.bf16.mxu0 0
  %2260 = vmatpush1.bf16.msra.mxu0 0
  %2261 = vmatprep.subr.bf16.mxu0 0
  %2262 = vmatpush1.bf16.msra.mxu0 0
  %2263 = vmatprep.subr.bf16.mxu0 0
  %2264 = vmatpush1.bf16.msra.mxu0 0
  %2265 = vmatprep.subr.bf16.mxu0 0
  %2266 = vmatpush1.bf16.msra.mxu0 0
  %2267 = vmatprep.subr.bf16.mxu0 0
  %2268 = vmatpush1.bf16.msra.mxu0 0
  %2269 = vmatprep.mubr.bf16.mxu0 0
  %2270 = vmatmul.mubr.bf16.gmra.mrb[0].mxu0 %v2192
  %v2271 = vpop.f32.mrb[0].mxu0
  %v2272 = vadd.f32 0.0, %v2271
  %v2273 = vpop.f32.mrb[0].mxu0
  %v2274 = vadd.f32 0.0, %v2273
  %v2275 = vpop.f32.mrb[0].mxu0
  %v2276 = vadd.f32 0.0, %v2275
  %v2277 = vpop.f32.mrb[0].mxu0
  %v2278 = vadd.f32 0.0, %v2277
  %2279 = vdwg.mxu0
  %v2280 = vadd.f32 %v2139, %v2229
  %v2281 = vadd.f32 %v2140, %v2231
  %v2282 = vadd.f32 %v2141, %v2272
  %v2283 = vadd.f32 %v2142, %v2274
  %v2284 = vadd.f32 %v2143, %v2233
  %v2285 = vadd.f32 %v2144, %v2235
  %v2286 = vadd.f32 %v2145, %v2276
  %v2287 = vadd.f32 %v2146, %v2278
  %v2288 = vmul.f32 %v1688, %v717
  %v2289 = vmul.f32 %v1689, %v721
  %v2290 = vmul.f32 %v1690, %v725
  %v2291 = vmul.f32 %v1691, %v729
  %v2292 = vmul.f32 %v1692, %v717
  %v2293 = vmul.f32 %v1693, %v721
  %v2294 = vmul.f32 %v1694, %v725
  %v2295 = vmul.f32 %v1695, %v729
  %v2296 = vmul.f32 %v1696, %v717
  %v2297 = vmul.f32 %v1697, %v721
  %v2298 = vmul.f32 %v1698, %v725
  %v2299 = vmul.f32 %v1699, %v729
  %v2300 = vpack.c.bf16 %v2292, %v2288
  %v2301 = vpack.c.bf16 %v2293, %v2289
  %v2302 = vpack.c.bf16 %v2294, %v2290
  %v2303 = vpack.c.bf16 %v2295, %v2291
  %v2304 = vpack.c.bf16 %v2296, %v2296
  %v2305 = vpack.c.bf16 %v2297, %v2297
  %v2306 = vpack.c.bf16 %v2298, %v2298
  %v2307 = vpack.c.bf16 %v2299, %v2299
  %s2308 = scalar_lea.vmem %s5, 32
  %v2309 = vld [vmem:[%s2308] sm:$0xf]
  %v2310 = vld [vmem:[%s2308 + $0x4] sm:$0x3]
  %v2313 = vunpack.c.l.b16 %v2309
  %v2314 = vunpack.c.l.b16 %v2310
  %v2315 = vpack.c.b16 %v2314, %v2313
  %vm2324 = vcmask 1045504
  %v2325 = vrot.slane %v2300, 2
  %v2326 = vrot.slane %v2304, 2
  %v2327 = vsel %vm2324, %v2325, %v2326
  %v2328 = vrot.slane %v2301, 2
  %v2329 = vrot.slane %v2305, 2
  %v2330 = vsel %vm2324, %v2328, %v2329
  %v2331 = vrot.slane %v2302, 2
  %v2332 = vrot.slane %v2306, 2
  %v2333 = vsel %vm2324, %v2331, %v2332
  %v2334 = vrot.slane %v2303, 2
  %v2335 = vrot.slane %v2307, 2
  %v2336 = vsel %vm2324, %v2334, %v2335
  %v2342 = vsel %vm1822, %v2315, 0
  %2344 = vmatprep.subr.bf16.mxu0 %v2330
  %2345 = vmatpush1.bf16.msra.mxu0 %v2327
  %2346 = vmatprep.subr.bf16.mxu0 0
  %2347 = vmatpush1.bf16.msra.mxu0 0
  %2348 = vmatprep.subr.bf16.mxu0 0
  %2349 = vmatpush1.bf16.msra.mxu0 0
  %2350 = vmatprep.subr.bf16.mxu0 0
  %2351 = vmatpush1.bf16.msra.mxu0 0
  %2352 = vmatprep.subr.bf16.mxu0 0
  %2353 = vmatpush1.bf16.msra.mxu0 0
  %2354 = vmatprep.subr.bf16.mxu0 0
  %2355 = vmatpush1.bf16.msra.mxu0 0
  %2356 = vmatprep.subr.bf16.mxu0 0
  %2357 = vmatpush1.bf16.msra.mxu0 0
  %2358 = vmatprep.subr.bf16.mxu0 0
  %2359 = vmatpush1.bf16.msra.mxu0 0
  %2360 = vmatprep.subr.bf16.mxu0 0
  %2361 = vmatpush1.bf16.msra.mxu0 0
  %2362 = vmatprep.subr.bf16.mxu0 0
  %2363 = vmatpush1.bf16.msra.mxu0 0
  %2364 = vmatprep.subr.bf16.mxu0 0
  %2365 = vmatpush1.bf16.msra.mxu0 0
  %2366 = vmatprep.subr.bf16.mxu0 0
  %2367 = vmatpush1.bf16.msra.mxu0 0
  %2368 = vmatprep.subr.bf16.mxu0 0
  %2369 = vmatpush1.bf16.msra.mxu0 0
  %2370 = vmatprep.subr.bf16.mxu0 0
  %2371 = vmatpush1.bf16.msra.mxu0 0
  %2372 = vmatprep.subr.bf16.mxu0 0
  %2373 = vmatpush1.bf16.msra.mxu0 0
  %2374 = vmatprep.subr.bf16.mxu0 0
  %2375 = vmatpush1.bf16.msra.mxu0 0
  %2376 = vmatprep.mubr.bf16.mxu0 0
  %2377 = vmatmul.mubr.bf16.gmra.mrb[0].mxu0 %v2342
  %v2378 = vpop.f32.mrb[0].mxu0
  %v2379 = vadd.f32 0.0, %v2378
  %v2380 = vpop.f32.mrb[0].mxu0
  %v2381 = vadd.f32 0.0, %v2380
  %v2382 = vpop.f32.mrb[0].mxu0
  %v2383 = vadd.f32 0.0, %v2382
  %v2384 = vpop.f32.mrb[0].mxu0
  %v2385 = vadd.f32 0.0, %v2384
  %2386 = vdwg.mxu0
  %2387 = vmatprep.subr.bf16.mxu0 %v2336
  %2388 = vmatpush1.bf16.msra.mxu0 %v2333
  %2389 = vmatprep.subr.bf16.mxu0 0
  %2390 = vmatpush1.bf16.msra.mxu0 0
  %2391 = vmatprep.subr.bf16.mxu0 0
  %2392 = vmatpush1.bf16.msra.mxu0 0
  %2393 = vmatprep.subr.bf16.mxu0 0
  %2394 = vmatpush1.bf16.msra.mxu0 0
  %2395 = vmatprep.subr.bf16.mxu0 0
  %2396 = vmatpush1.bf16.msra.mxu0 0
  %2397 = vmatprep.subr.bf16.mxu0 0
  %2398 = vmatpush1.bf16.msra.mxu0 0
  %2399 = vmatprep.subr.bf16.mxu0 0
  %2400 = vmatpush1.bf16.msra.mxu0 0
  %2401 = vmatprep.subr.bf16.mxu0 0
  %2402 = vmatpush1.bf16.msra.mxu0 0
  %2403 = vmatprep.subr.bf16.mxu0 0
  %2404 = vmatpush1.bf16.msra.mxu0 0
  %2405 = vmatprep.subr.bf16.mxu0 0
  %2406 = vmatpush1.bf16.msra.mxu0 0
  %2407 = vmatprep.subr.bf16.mxu0 0
  %2408 = vmatpush1.bf16.msra.mxu0 0
  %2409 = vmatprep.subr.bf16.mxu0 0
  %2410 = vmatpush1.bf16.msra.mxu0 0
  %2411 = vmatprep.subr.bf16.mxu0 0
  %2412 = vmatpush1.bf16.msra.mxu0 0
  %2413 = vmatprep.subr.bf16.mxu0 0
  %2414 = vmatpush1.bf16.msra.mxu0 0
  %2415 = vmatprep.subr.bf16.mxu0 0
  %2416 = vmatpush1.bf16.msra.mxu0 0
  %2417 = vmatprep.subr.bf16.mxu0 0
  %2418 = vmatpush1.bf16.msra.mxu0 0
  %2419 = vmatprep.mubr.bf16.mxu0 0
  %2420 = vmatmul.mubr.bf16.gmra.mrb[0].mxu0 %v2342
  %v2421 = vpop.f32.mrb[0].mxu0
  %v2422 = vadd.f32 0.0, %v2421
  %v2423 = vpop.f32.mrb[0].mxu0
  %v2424 = vadd.f32 0.0, %v2423
  %v2425 = vpop.f32.mrb[0].mxu0
  %v2426 = vadd.f32 0.0, %v2425
  %v2427 = vpop.f32.mrb[0].mxu0
  %v2428 = vadd.f32 0.0, %v2427
  %2429 = vdwg.mxu0
  %v2430 = vadd.f32 %v2280, %v2379
  %v2431 = vadd.f32 %v2281, %v2381
  %v2432 = vadd.f32 %v2282, %v2422
  %v2433 = vadd.f32 %v2283, %v2424
  %v2434 = vadd.f32 %v2284, %v2383
  %v2435 = vadd.f32 %v2285, %v2385
  %v2436 = vadd.f32 %v2286, %v2426
  %v2437 = vadd.f32 %v2287, %v2428
  %2438 = vrot.lane.b32.xlu0 %v1714, 127
  %v2439 = vpop.permute.xlu0 %2438
  %2440 = vrot.lane.b32.xlu0 %v1725, 127
  %v2441 = vpop.permute.xlu0 %2440
  %2442 = vrot.lane.b32.xlu0 %v1717, 127
  %v2443 = vpop.permute.xlu0 %2442
  %2444 = vrot.lane.b32.xlu0 %v1727, 127
  %v2445 = vpop.permute.xlu0 %2444
  %2446 = vrot.lane.b32.xlu0 %v1720, 127
  %v2447 = vpop.permute.xlu0 %2446
  %2448 = vrot.lane.b32.xlu0 %v1729, 127
  %v2449 = vpop.permute.xlu0 %2448
  %2450 = vrot.lane.b32.xlu0 %v1723, 127
  %v2451 = vpop.permute.xlu0 %2450
  %2452 = vrot.lane.b32.xlu0 %v1731, 127
  %v2453 = vpop.permute.xlu0 %2452
  %v2454 = vsel %vm863, %v2447, %v2451
  %v2455 = vsel %vm863, %v2449, %v2453
  %v2456 = vsel %vm863, %v2443, %v2447
  %v2457 = vsel %vm863, %v2445, %v2449
  %v2458 = vsel %vm863, %v2439, %v2443
  %v2459 = vsel %vm863, %v2441, %v2445
  %v2460 = vsel %vm863, %v2451, %v2439
  %v2461 = vsel %vm863, %v2453, %v2441
  %v2462 = vmul.f32 %v2458, %v871
  %v2463 = vmul.f32 %v2456, %v875
  %v2464 = vmul.f32 %v2454, %v879
  %v2465 = vmul.f32 %v2460, %v883
  %v2466 = vmul.f32 %v2459, %v871
  %v2467 = vmul.f32 %v2457, %v875
  %v2468 = vmul.f32 %v2455, %v879
  %v2469 = vmul.f32 %v2461, %v883
  %v2470 = vpack.c.bf16 %v2466, %v2462
  %v2471 = vpack.c.bf16 %v2467, %v2463
  %v2472 = vpack.c.bf16 %v2468, %v2464
  %v2473 = vpack.c.bf16 %v2469, %v2465
  %s2474 = scalar_lea.vmem %s5, 40
  %v2475 = vld [vmem:[%s2474] sm:$0xf]
  %v2476 = vld [vmem:[%s2474 + $0x4] sm:$0x3]
  %v2479 = vunpack.c.l.b16 %v2475
  %v2480 = vunpack.c.l.b16 %v2476
  %v2481 = vpack.c.b16 %v2480, %v2479
  %v2483 = vsel %vm1822, %v2481, 0
  %2485 = vmatprep.subr.bf16.mxu0 %v2471
  %2486 = vmatpush1.bf16.msra.mxu0 %v2470
  %2487 = vmatprep.subr.bf16.mxu0 0
  %2488 = vmatpush1.bf16.msra.mxu0 0
  %2489 = vmatprep.subr.bf16.mxu0 0
  %2490 = vmatpush1.bf16.msra.mxu0 0
  %2491 = vmatprep.subr.bf16.mxu0 0
  %2492 = vmatpush1.bf16.msra.mxu0 0
  %2493 = vmatprep.subr.bf16.mxu0 0
  %2494 = vmatpush1.bf16.msra.mxu0 0
  %2495 = vmatprep.subr.bf16.mxu0 0
  %2496 = vmatpush1.bf16.msra.mxu0 0
  %2497 = vmatprep.subr.bf16.mxu0 0
  %2498 = vmatpush1.bf16.msra.mxu0 0
  %2499 = vmatprep.subr.bf16.mxu0 0
  %2500 = vmatpush1.bf16.msra.mxu0 0
  %2501 = vmatprep.subr.bf16.mxu0 0
  %2502 = vmatpush1.bf16.msra.mxu0 0
  %2503 = vmatprep.subr.bf16.mxu0 0
  %2504 = vmatpush1.bf16.msra.mxu0 0
  %2505 = vmatprep.subr.bf16.mxu0 0
  %2506 = vmatpush1.bf16.msra.mxu0 0
  %2507 = vmatprep.subr.bf16.mxu0 0
  %2508 = vmatpush1.bf16.msra.mxu0 0
  %2509 = vmatprep.subr.bf16.mxu0 0
  %2510 = vmatpush1.bf16.msra.mxu0 0
  %2511 = vmatprep.subr.bf16.mxu0 0
  %2512 = vmatpush1.bf16.msra.mxu0 0
  %2513 = vmatprep.subr.bf16.mxu0 0
  %2514 = vmatpush1.bf16.msra.mxu0 0
  %2515 = vmatprep.subr.bf16.mxu0 0
  %2516 = vmatpush1.bf16.msra.mxu0 0
  %2517 = vmatprep.mubr.bf16.mxu0 0
  %2518 = vmatmul.mubr.bf16.gmra.mrb[0].mxu0 %v2483
  %v2519 = vpop.f32.mrb[0].mxu0
  %v2520 = vadd.f32 0.0, %v2519
  %v2521 = vpop.f32.mrb[0].mxu0
  %v2522 = vadd.f32 0.0, %v2521
  %v2523 = vpop.f32.mrb[0].mxu0
  %v2524 = vadd.f32 0.0, %v2523
  %v2525 = vpop.f32.mrb[0].mxu0
  %v2526 = vadd.f32 0.0, %v2525
  %2527 = vdwg.mxu0
  %2528 = vmatprep.subr.bf16.mxu0 %v2473
  %2529 = vmatpush1.bf16.msra.mxu0 %v2472
  %2530 = vmatprep.subr.bf16.mxu0 0
  %2531 = vmatpush1.bf16.msra.mxu0 0
  %2532 = vmatprep.subr.bf16.mxu0 0
  %2533 = vmatpush1.bf16.msra.mxu0 0
  %2534 = vmatprep.subr.bf16.mxu0 0
  %2535 = vmatpush1.bf16.msra.mxu0 0
  %2536 = vmatprep.subr.bf16.mxu0 0
  %2537 = vmatpush1.bf16.msra.mxu0 0
  %2538 = vmatprep.subr.bf16.mxu0 0
  %2539 = vmatpush1.bf16.msra.mxu0 0
  %2540 = vmatprep.subr.bf16.mxu0 0
  %2541 = vmatpush1.bf16.msra.mxu0 0
  %2542 = vmatprep.subr.bf16.mxu0 0
  %2543 = vmatpush1.bf16.msra.mxu0 0
  %2544 = vmatprep.subr.bf16.mxu0 0
  %2545 = vmatpush1.bf16.msra.mxu0 0
  %2546 = vmatprep.subr.bf16.mxu0 0
  %2547 = vmatpush1.bf16.msra.mxu0 0
  %2548 = vmatprep.subr.bf16.mxu0 0
  %2549 = vmatpush1.bf16.msra.mxu0 0
  %2550 = vmatprep.subr.bf16.mxu0 0
  %2551 = vmatpush1.bf16.msra.mxu0 0
  %2552 = vmatprep.subr.bf16.mxu0 0
  %2553 = vmatpush1.bf16.msra.mxu0 0
  %2554 = vmatprep.subr.bf16.mxu0 0
  %2555 = vmatpush1.bf16.msra.mxu0 0
  %2556 = vmatprep.subr.bf16.mxu0 0
  %2557 = vmatpush1.bf16.msra.mxu0 0
  %2558 = vmatprep.subr.bf16.mxu0 0
  %2559 = vmatpush1.bf16.msra.mxu0 0
  %2560 = vmatprep.mubr.bf16.mxu0 0
  %2561 = vmatmul.mubr.bf16.gmra.mrb[0].mxu0 %v2483
  %v2562 = vpop.f32.mrb[0].mxu0
  %v2563 = vadd.f32 0.0, %v2562
  %v2564 = vpop.f32.mrb[0].mxu0
  %v2565 = vadd.f32 0.0, %v2564
  %v2566 = vpop.f32.mrb[0].mxu0
  %v2567 = vadd.f32 0.0, %v2566
  %v2568 = vpop.f32.mrb[0].mxu0
  %v2569 = vadd.f32 0.0, %v2568
  %2570 = vdwg.mxu0
  %v2571 = vadd.f32 %v2430, %v2520
  %v2572 = vadd.f32 %v2431, %v2522
  %v2573 = vadd.f32 %v2432, %v2563
  %v2574 = vadd.f32 %v2433, %v2565
  %v2575 = vadd.f32 %v2434, %v2524
  %v2576 = vadd.f32 %v2435, %v2526
  %v2577 = vadd.f32 %v2436, %v2567
  %v2578 = vadd.f32 %v2437, %v2569
  %2579 = vrot.lane.b32.xlu0 %v1714, 113
  %v2580 = vpop.permute.xlu0 %2579
  %2581 = vrot.lane.b32.xlu0 %v1725, 113
  %v2582 = vpop.permute.xlu0 %2581
  %2583 = vrot.lane.b32.xlu0 %v1717, 113
  %v2584 = vpop.permute.xlu0 %2583
  %2585 = vrot.lane.b32.xlu0 %v1727, 113
  %v2586 = vpop.permute.xlu0 %2585
  %2587 = vrot.lane.b32.xlu0 %v1720, 113
  %v2588 = vpop.permute.xlu0 %2587
  %2589 = vrot.lane.b32.xlu0 %v1729, 113
  %v2590 = vpop.permute.xlu0 %2589
  %2591 = vrot.lane.b32.xlu0 %v1723, 113
  %v2592 = vpop.permute.xlu0 %2591
  %2593 = vrot.lane.b32.xlu0 %v1731, 113
  %v2594 = vpop.permute.xlu0 %2593
  %v2595 = vsel %vm1017, %v2588, %v2592
  %v2596 = vsel %vm1017, %v2590, %v2594
  %v2597 = vsel %vm1017, %v2584, %v2588
  %v2598 = vsel %vm1017, %v2586, %v2590
  %v2599 = vsel %vm1017, %v2580, %v2584
  %v2600 = vsel %vm1017, %v2582, %v2586
  %v2601 = vsel %vm1017, %v2592, %v2580
  %v2602 = vsel %vm1017, %v2594, %v2582
  %v2603 = vmul.f32 %v2599, %v1025
  %v2604 = vmul.f32 %v2597, %v1029
  %v2605 = vmul.f32 %v2595, %v1033
  %v2606 = vmul.f32 %v2601, %v1037
  %v2607 = vmul.f32 %v2600, %v1025
  %v2608 = vmul.f32 %v2598, %v1029
  %v2609 = vmul.f32 %v2596, %v1033
  %v2610 = vmul.f32 %v2602, %v1037
  %v2611 = vpack.c.bf16 %v2607, %v2603
  %v2612 = vpack.c.bf16 %v2608, %v2604
  %v2613 = vpack.c.bf16 %v2609, %v2605
  %v2614 = vpack.c.bf16 %v2610, %v2606
  %s2615 = scalar_lea.vmem %s5, 48
  %v2616 = vld [vmem:[%s2615] sm:$0xf]
  %v2617 = vld [vmem:[%s2615 + $0x4] sm:$0x3]
  %v2620 = vunpack.c.l.b16 %v2616
  %v2621 = vunpack.c.l.b16 %v2617
  %v2622 = vpack.c.b16 %v2621, %v2620
  %v2624 = vsel %vm1822, %v2622, 0
  %2626 = vmatprep.subr.bf16.mxu0 %v2612
  %2627 = vmatpush1.bf16.msra.mxu0 %v2611
  %2628 = vmatprep.subr.bf16.mxu0 0
  %2629 = vmatpush1.bf16.msra.mxu0 0
  %2630 = vmatprep.subr.bf16.mxu0 0
  %2631 = vmatpush1.bf16.msra.mxu0 0
  %2632 = vmatprep.subr.bf16.mxu0 0
  %2633 = vmatpush1.bf16.msra.mxu0 0
  %2634 = vmatprep.subr.bf16.mxu0 0
  %2635 = vmatpush1.bf16.msra.mxu0 0
  %2636 = vmatprep.subr.bf16.mxu0 0
  %2637 = vmatpush1.bf16.msra.mxu0 0
  %2638 = vmatprep.subr.bf16.mxu0 0
  %2639 = vmatpush1.bf16.msra.mxu0 0
  %2640 = vmatprep.subr.bf16.mxu0 0
  %2641 = vmatpush1.bf16.msra.mxu0 0
  %2642 = vmatprep.subr.bf16.mxu0 0
  %2643 = vmatpush1.bf16.msra.mxu0 0
  %2644 = vmatprep.subr.bf16.mxu0 0
  %2645 = vmatpush1.bf16.msra.mxu0 0
  %2646 = vmatprep.subr.bf16.mxu0 0
  %2647 = vmatpush1.bf16.msra.mxu0 0
  %2648 = vmatprep.subr.bf16.mxu0 0
  %2649 = vmatpush1.bf16.msra.mxu0 0
  %2650 = vmatprep.subr.bf16.mxu0 0
  %2651 = vmatpush1.bf16.msra.mxu0 0
  %2652 = vmatprep.subr.bf16.mxu0 0
  %2653 = vmatpush1.bf16.msra.mxu0 0
  %2654 = vmatprep.subr.bf16.mxu0 0
  %2655 = vmatpush1.bf16.msra.mxu0 0
  %2656 = vmatprep.subr.bf16.mxu0 0
  %2657 = vmatpush1.bf16.msra.mxu0 0
  %2658 = vmatprep.mubr.bf16.mxu0 0
  %2659 = vmatmul.mubr.bf16.gmra.mrb[0].mxu0 %v2624
  %v2660 = vpop.f32.mrb[0].mxu0
  %v2661 = vadd.f32 0.0, %v2660
  %v2662 = vpop.f32.mrb[0].mxu0
  %v2663 = vadd.f32 0.0, %v2662
  %v2664 = vpop.f32.mrb[0].mxu0
  %v2665 = vadd.f32 0.0, %v2664
  %v2666 = vpop.f32.mrb[0].mxu0
  %v2667 = vadd.f32 0.0, %v2666
  %2668 = vdwg.mxu0
  %2669 = vmatprep.subr.bf16.mxu0 %v2614
  %2670 = vmatpush1.bf16.msra.mxu0 %v2613
  %2671 = vmatprep.subr.bf16.mxu0 0
  %2672 = vmatpush1.bf16.msra.mxu0 0
  %2673 = vmatprep.subr.bf16.mxu0 0
  %2674 = vmatpush1.bf16.msra.mxu0 0
  %2675 = vmatprep.subr.bf16.mxu0 0
  %2676 = vmatpush1.bf16.msra.mxu0 0
  %2677 = vmatprep.subr.bf16.mxu0 0
  %2678 = vmatpush1.bf16.msra.mxu0 0
  %2679 = vmatprep.subr.bf16.mxu0 0
  %2680 = vmatpush1.bf16.msra.mxu0 0
  %2681 = vmatprep.subr.bf16.mxu0 0
  %2682 = vmatpush1.bf16.msra.mxu0 0
  %2683 = vmatprep.subr.bf16.mxu0 0
  %2684 = vmatpush1.bf16.msra.mxu0 0
  %2685 = vmatprep.subr.bf16.mxu0 0
  %2686 = vmatpush1.bf16.msra.mxu0 0
  %2687 = vmatprep.subr.bf16.mxu0 0
  %2688 = vmatpush1.bf16.msra.mxu0 0
  %2689 = vmatprep.subr.bf16.mxu0 0
  %2690 = vmatpush1.bf16.msra.mxu0 0
  %2691 = vmatprep.subr.bf16.mxu0 0
  %2692 = vmatpush1.bf16.msra.mxu0 0
  %2693 = vmatprep.subr.bf16.mxu0 0
  %2694 = vmatpush1.bf16.msra.mxu0 0
  %2695 = vmatprep.subr.bf16.mxu0 0
  %2696 = vmatpush1.bf16.msra.mxu0 0
  %2697 = vmatprep.subr.bf16.mxu0 0
  %2698 = vmatpush1.bf16.msra.mxu0 0
  %2699 = vmatprep.subr.bf16.mxu0 0
  %2700 = vmatpush1.bf16.msra.mxu0 0
  %2701 = vmatprep.mubr.bf16.mxu0 0
  %2702 = vmatmul.mubr.bf16.gmra.mrb[0].mxu0 %v2624
  %v2703 = vpop.f32.mrb[0].mxu0
  %v2704 = vadd.f32 0.0, %v2703
  %v2705 = vpop.f32.mrb[0].mxu0
  %v2706 = vadd.f32 0.0, %v2705
  %v2707 = vpop.f32.mrb[0].mxu0
  %v2708 = vadd.f32 0.0, %v2707
  %v2709 = vpop.f32.mrb[0].mxu0
  %v2710 = vadd.f32 0.0, %v2709
  %2711 = vdwg.mxu0
  %v2712 = vadd.f32 %v2571, %v2661
  %v2713 = vadd.f32 %v2572, %v2663
  %v2714 = vadd.f32 %v2573, %v2704
  %v2715 = vadd.f32 %v2574, %v2706
  %v2716 = vadd.f32 %v2575, %v2665
  %v2717 = vadd.f32 %v2576, %v2667
  %v2718 = vadd.f32 %v2577, %v2708
  %v2719 = vadd.f32 %v2578, %v2710
  %2720 = vrot.lane.b32.xlu0 %v1714, 112
  %v2721 = vpop.permute.xlu0 %2720
  %2722 = vrot.lane.b32.xlu0 %v1725, 112
  %v2723 = vpop.permute.xlu0 %2722
  %2724 = vrot.lane.b32.xlu0 %v1717, 112
  %v2725 = vpop.permute.xlu0 %2724
  %2726 = vrot.lane.b32.xlu0 %v1727, 112
  %v2727 = vpop.permute.xlu0 %2726
  %2728 = vrot.lane.b32.xlu0 %v1720, 112
  %v2729 = vpop.permute.xlu0 %2728
  %2730 = vrot.lane.b32.xlu0 %v1729, 112
  %v2731 = vpop.permute.xlu0 %2730
  %2732 = vrot.lane.b32.xlu0 %v1723, 112
  %v2733 = vpop.permute.xlu0 %2732
  %2734 = vrot.lane.b32.xlu0 %v1731, 112
  %v2735 = vpop.permute.xlu0 %2734
  %v2736 = vsel %vm1171, %v2729, %v2733
  %v2737 = vsel %vm1171, %v2731, %v2735
  %v2738 = vsel %vm1171, %v2725, %v2729
  %v2739 = vsel %vm1171, %v2727, %v2731
  %v2740 = vsel %vm1171, %v2721, %v2725
  %v2741 = vsel %vm1171, %v2723, %v2727
  %v2742 = vsel %vm1171, %v2733, %v2721
  %v2743 = vsel %vm1171, %v2735, %v2723
  %v2744 = vmul.f32 %v2740, %v1179
  %v2745 = vmul.f32 %v2738, %v1183
  %v2746 = vmul.f32 %v2736, %v1187
  %v2747 = vmul.f32 %v2742, %v1191
  %v2748 = vmul.f32 %v2741, %v1179
  %v2749 = vmul.f32 %v2739, %v1183
  %v2750 = vmul.f32 %v2737, %v1187
  %v2751 = vmul.f32 %v2743, %v1191
  %v2752 = vpack.c.bf16 %v2748, %v2744
  %v2753 = vpack.c.bf16 %v2749, %v2745
  %v2754 = vpack.c.bf16 %v2750, %v2746
  %v2755 = vpack.c.bf16 %v2751, %v2747
  %s2756 = scalar_lea.vmem %s5, 56
  %v2757 = vld [vmem:[%s2756] sm:$0xf]
  %v2758 = vld [vmem:[%s2756 + $0x4] sm:$0x3]
  %v2761 = vunpack.c.l.b16 %v2757
  %v2762 = vunpack.c.l.b16 %v2758
  %v2763 = vpack.c.b16 %v2762, %v2761
  %v2765 = vsel %vm1822, %v2763, 0
  %2767 = vmatprep.subr.bf16.mxu0 %v2753
  %2768 = vmatpush1.bf16.msra.mxu0 %v2752
  %2769 = vmatprep.subr.bf16.mxu0 0
  %2770 = vmatpush1.bf16.msra.mxu0 0
  %2771 = vmatprep.subr.bf16.mxu0 0
  %2772 = vmatpush1.bf16.msra.mxu0 0
  %2773 = vmatprep.subr.bf16.mxu0 0
  %2774 = vmatpush1.bf16.msra.mxu0 0
  %2775 = vmatprep.subr.bf16.mxu0 0
  %2776 = vmatpush1.bf16.msra.mxu0 0
  %2777 = vmatprep.subr.bf16.mxu0 0
  %2778 = vmatpush1.bf16.msra.mxu0 0
  %2779 = vmatprep.subr.bf16.mxu0 0
  %2780 = vmatpush1.bf16.msra.mxu0 0
  %2781 = vmatprep.subr.bf16.mxu0 0
  %2782 = vmatpush1.bf16.msra.mxu0 0
  %2783 = vmatprep.subr.bf16.mxu0 0
  %2784 = vmatpush1.bf16.msra.mxu0 0
  %2785 = vmatprep.subr.bf16.mxu0 0
  %2786 = vmatpush1.bf16.msra.mxu0 0
  %2787 = vmatprep.subr.bf16.mxu0 0
  %2788 = vmatpush1.bf16.msra.mxu0 0
  %2789 = vmatprep.subr.bf16.mxu0 0
  %2790 = vmatpush1.bf16.msra.mxu0 0
  %2791 = vmatprep.subr.bf16.mxu0 0
  %2792 = vmatpush1.bf16.msra.mxu0 0
  %2793 = vmatprep.subr.bf16.mxu0 0
  %2794 = vmatpush1.bf16.msra.mxu0 0
  %2795 = vmatprep.subr.bf16.mxu0 0
  %2796 = vmatpush1.bf16.msra.mxu0 0
  %2797 = vmatprep.subr.bf16.mxu0 0
  %2798 = vmatpush1.bf16.msra.mxu0 0
  %2799 = vmatprep.mubr.bf16.mxu0 0
  %2800 = vmatmul.mubr.bf16.gmra.mrb[0].mxu0 %v2765
  %v2801 = vpop.f32.mrb[0].mxu0
  %v2802 = vadd.f32 0.0, %v2801
  %v2803 = vpop.f32.mrb[0].mxu0
  %v2804 = vadd.f32 0.0, %v2803
  %v2805 = vpop.f32.mrb[0].mxu0
  %v2806 = vadd.f32 0.0, %v2805
  %v2807 = vpop.f32.mrb[0].mxu0
  %v2808 = vadd.f32 0.0, %v2807
  %2809 = vdwg.mxu0
  %2810 = vmatprep.subr.bf16.mxu0 %v2755
  %2811 = vmatpush1.bf16.msra.mxu0 %v2754
  %2812 = vmatprep.subr.bf16.mxu0 0
  %2813 = vmatpush1.bf16.msra.mxu0 0
  %2814 = vmatprep.subr.bf16.mxu0 0
  %2815 = vmatpush1.bf16.msra.mxu0 0
  %2816 = vmatprep.subr.bf16.mxu0 0
  %2817 = vmatpush1.bf16.msra.mxu0 0
  %2818 = vmatprep.subr.bf16.mxu0 0
  %2819 = vmatpush1.bf16.msra.mxu0 0
  %2820 = vmatprep.subr.bf16.mxu0 0
  %2821 = vmatpush1.bf16.msra.mxu0 0
  %2822 = vmatprep.subr.bf16.mxu0 0
  %2823 = vmatpush1.bf16.msra.mxu0 0
  %2824 = vmatprep.subr.bf16.mxu0 0
  %2825 = vmatpush1.bf16.msra.mxu0 0
  %2826 = vmatprep.subr.bf16.mxu0 0
  %2827 = vmatpush1.bf16.msra.mxu0 0
  %2828 = vmatprep.subr.bf16.mxu0 0
  %2829 = vmatpush1.bf16.msra.mxu0 0
  %2830 = vmatprep.subr.bf16.mxu0 0
  %2831 = vmatpush1.bf16.msra.mxu0 0
  %2832 = vmatprep.subr.bf16.mxu0 0
  %2833 = vmatpush1.bf16.msra.mxu0 0
  %2834 = vmatprep.subr.bf16.mxu0 0
  %2835 = vmatpush1.bf16.msra.mxu0 0
  %2836 = vmatprep.subr.bf16.mxu0 0
  %2837 = vmatpush1.bf16.msra.mxu0 0
  %2838 = vmatprep.subr.bf16.mxu0 0
  %2839 = vmatpush1.bf16.msra.mxu0 0
  %2840 = vmatprep.subr.bf16.mxu0 0
  %2841 = vmatpush1.bf16.msra.mxu0 0
  %2842 = vmatprep.mubr.bf16.mxu0 0
  %2843 = vmatmul.mubr.bf16.gmra.mrb[0].mxu0 %v2765
  %v2844 = vpop.f32.mrb[0].mxu0
  %v2845 = vadd.f32 0.0, %v2844
  %v2846 = vpop.f32.mrb[0].mxu0
  %v2847 = vadd.f32 0.0, %v2846
  %v2848 = vpop.f32.mrb[0].mxu0
  %v2849 = vadd.f32 0.0, %v2848
  %v2850 = vpop.f32.mrb[0].mxu0
  %v2851 = vadd.f32 0.0, %v2850
  %2852 = vdwg.mxu0
  %v2853 = vadd.f32 %v2712, %v2802
  %v2854 = vadd.f32 %v2713, %v2804
  %v2855 = vadd.f32 %v2714, %v2845
  %v2856 = vadd.f32 %v2715, %v2847
  %v2857 = vadd.f32 %v2716, %v2806
  %v2858 = vadd.f32 %v2717, %v2808
  %v2859 = vadd.f32 %v2718, %v2849
  %v2860 = vadd.f32 %v2719, %v2851
  %2861 = vrot.lane.b32.xlu0 %v1714, 111
  %v2862 = vpop.permute.xlu0 %2861
  %2863 = vrot.lane.b32.xlu0 %v1725, 111
  %v2864 = vpop.permute.xlu0 %2863
  %2865 = vrot.lane.b32.xlu0 %v1717, 111
  %v2866 = vpop.permute.xlu0 %2865
  %2867 = vrot.lane.b32.xlu0 %v1727, 111
  %v2868 = vpop.permute.xlu0 %2867
  %2869 = vrot.lane.b32.xlu0 %v1720, 111
  %v2870 = vpop.permute.xlu0 %2869
  %2871 = vrot.lane.b32.xlu0 %v1729, 111
  %v2872 = vpop.permute.xlu0 %2871
  %2873 = vrot.lane.b32.xlu0 %v1723, 111
  %v2874 = vpop.permute.xlu0 %2873
  %2875 = vrot.lane.b32.xlu0 %v1731, 111
  %v2876 = vpop.permute.xlu0 %2875
  %v2877 = vsel %vm1325, %v2870, %v2874
  %v2878 = vsel %vm1325, %v2872, %v2876
  %v2879 = vsel %vm1325, %v2866, %v2870
  %v2880 = vsel %vm1325, %v2868, %v2872
  %v2881 = vsel %vm1325, %v2862, %v2866
  %v2882 = vsel %vm1325, %v2864, %v2868
  %v2883 = vsel %vm1325, %v2874, %v2862
  %v2884 = vsel %vm1325, %v2876, %v2864
  %v2885 = vmul.f32 %v2881, %v1333
  %v2886 = vmul.f32 %v2879, %v1337
  %v2887 = vmul.f32 %v2877, %v1341
  %v2888 = vmul.f32 %v2883, %v1345
  %v2889 = vmul.f32 %v2882, %v1333
  %v2890 = vmul.f32 %v2880, %v1337
  %v2891 = vmul.f32 %v2878, %v1341
  %v2892 = vmul.f32 %v2884, %v1345
  %v2893 = vpack.c.bf16 %v2889, %v2885
  %v2894 = vpack.c.bf16 %v2890, %v2886
  %v2895 = vpack.c.bf16 %v2891, %v2887
  %v2896 = vpack.c.bf16 %v2892, %v2888
  %s2897 = scalar_lea.vmem %s5, 64
  %v2898 = vld [vmem:[%s2897] sm:$0xf]
  %v2899 = vld [vmem:[%s2897 + $0x4] sm:$0x3]
  %v2902 = vunpack.c.l.b16 %v2898
  %v2903 = vunpack.c.l.b16 %v2899
  %v2904 = vpack.c.b16 %v2903, %v2902
  %v2906 = vsel %vm1822, %v2904, 0
  %2908 = vmatprep.subr.bf16.mxu0 %v2894
  %2909 = vmatpush1.bf16.msra.mxu0 %v2893
  %2910 = vmatprep.subr.bf16.mxu0 0
  %2911 = vmatpush1.bf16.msra.mxu0 0
  %2912 = vmatprep.subr.bf16.mxu0 0
  %2913 = vmatpush1.bf16.msra.mxu0 0
  %2914 = vmatprep.subr.bf16.mxu0 0
  %2915 = vmatpush1.bf16.msra.mxu0 0
  %2916 = vmatprep.subr.bf16.mxu0 0
  %2917 = vmatpush1.bf16.msra.mxu0 0
  %2918 = vmatprep.subr.bf16.mxu0 0
  %2919 = vmatpush1.bf16.msra.mxu0 0
  %2920 = vmatprep.subr.bf16.mxu0 0
  %2921 = vmatpush1.bf16.msra.mxu0 0
  %2922 = vmatprep.subr.bf16.mxu0 0
  %2923 = vmatpush1.bf16.msra.mxu0 0
  %2924 = vmatprep.subr.bf16.mxu0 0
  %2925 = vmatpush1.bf16.msra.mxu0 0
  %2926 = vmatprep.subr.bf16.mxu0 0
  %2927 = vmatpush1.bf16.msra.mxu0 0
  %2928 = vmatprep.subr.bf16.mxu0 0
  %2929 = vmatpush1.bf16.msra.mxu0 0
  %2930 = vmatprep.subr.bf16.mxu0 0
  %2931 = vmatpush1.bf16.msra.mxu0 0
  %2932 = vmatprep.subr.bf16.mxu0 0
  %2933 = vmatpush1.bf16.msra.mxu0 0
  %2934 = vmatprep.subr.bf16.mxu0 0
  %2935 = vmatpush1.bf16.msra.mxu0 0
  %2936 = vmatprep.subr.bf16.mxu0 0
  %2937 = vmatpush1.bf16.msra.mxu0 0
  %2938 = vmatprep.subr.bf16.mxu0 0
  %2939 = vmatpush1.bf16.msra.mxu0 0
  %2940 = vmatprep.mubr.bf16.mxu0 0
  %2941 = vmatmul.mubr.bf16.gmra.mrb[0].mxu0 %v2906
  %v2942 = vpop.f32.mrb[0].mxu0
  %v2943 = vadd.f32 0.0, %v2942
  %v2944 = vpop.f32.mrb[0].mxu0
  %v2945 = vadd.f32 0.0, %v2944
  %v2946 = vpop.f32.mrb[0].mxu0
  %v2947 = vadd.f32 0.0, %v2946
  %v2948 = vpop.f32.mrb[0].mxu0
  %v2949 = vadd.f32 0.0, %v2948
  %2950 = vdwg.mxu0
  %2951 = vmatprep.subr.bf16.mxu0 %v2896
  %2952 = vmatpush1.bf16.msra.mxu0 %v2895
  %2953 = vmatprep.subr.bf16.mxu0 0
  %2954 = vmatpush1.bf16.msra.mxu0 0
  %2955 = vmatprep.subr.bf16.mxu0 0
  %2956 = vmatpush1.bf16.msra.mxu0 0
  %2957 = vmatprep.subr.bf16.mxu0 0
  %2958 = vmatpush1.bf16.msra.mxu0 0
  %2959 = vmatprep.subr.bf16.mxu0 0
  %2960 = vmatpush1.bf16.msra.mxu0 0
  %2961 = vmatprep.subr.bf16.mxu0 0
  %2962 = vmatpush1.bf16.msra.mxu0 0
  %2963 = vmatprep.subr.bf16.mxu0 0
  %2964 = vmatpush1.bf16.msra.mxu0 0
  %2965 = vmatprep.subr.bf16.mxu0 0
  %2966 = vmatpush1.bf16.msra.mxu0 0
  %2967 = vmatprep.subr.bf16.mxu0 0
  %2968 = vmatpush1.bf16.msra.mxu0 0
  %2969 = vmatprep.subr.bf16.mxu0 0
  %2970 = vmatpush1.bf16.msra.mxu0 0
  %2971 = vmatprep.subr.bf16.mxu0 0
  %2972 = vmatpush1.bf16.msra.mxu0 0
  %2973 = vmatprep.subr.bf16.mxu0 0
  %2974 = vmatpush1.bf16.msra.mxu0 0
  %2975 = vmatprep.subr.bf16.mxu0 0
  %2976 = vmatpush1.bf16.msra.mxu0 0
  %2977 = vmatprep.subr.bf16.mxu0 0
  %2978 = vmatpush1.bf16.msra.mxu0 0
  %2979 = vmatprep.subr.bf16.mxu0 0
  %2980 = vmatpush1.bf16.msra.mxu0 0
  %2981 = vmatprep.subr.bf16.mxu0 0
  %2982 = vmatpush1.bf16.msra.mxu0 0
  %2983 = vmatprep.mubr.bf16.mxu0 0
  %2984 = vmatmul.mubr.bf16.gmra.mrb[0].mxu0 %v2906
  %v2985 = vpop.f32.mrb[0].mxu0
  %v2986 = vadd.f32 0.0, %v2985
  %v2987 = vpop.f32.mrb[0].mxu0
  %v2988 = vadd.f32 0.0, %v2987
  %v2989 = vpop.f32.mrb[0].mxu0
  %v2990 = vadd.f32 0.0, %v2989
  %v2991 = vpop.f32.mrb[0].mxu0
  %v2992 = vadd.f32 0.0, %v2991
  %2993 = vdwg.mxu0
  %v2994 = vadd.f32 %v2853, %v2943
  %v2995 = vadd.f32 %v2854, %v2945
  %v2996 = vadd.f32 %v2855, %v2986
  %v2997 = vadd.f32 %v2856, %v2988
  %v2998 = vadd.f32 %v2857, %v2947
  %v2999 = vadd.f32 %v2858, %v2949
  %v3000 = vadd.f32 %v2859, %v2990
  %v3001 = vadd.f32 %v2860, %v2992
  %3002 = vst [vmem:[%s8] sm:$0xff] %v2994
  %3003 = vst [vmem:[%s8 + $0x8] sm:$0xff] %v2995
  %3004 = vst [vmem:[%s8 + $0x10] sm:$0xff] %v2996
  %3005 = vst [vmem:[%s8 + $0x18] sm:$0xff] %v2997
  %3006 = vst [vmem:[%s8 + $0x20] sm:$0xf] %v2998
  %3007 = vst [vmem:[%s8 + $0x28] sm:$0xf] %v2999
  %3008 = vst [vmem:[%s8 + $0x30] sm:$0xf] %v3000
  %3009 = vst [vmem:[%s8 + $0x38] sm:$0xf] %v3001
  // Predicated region
  $region34: #{dense_block_forward.1} parent=0 // pred_check
    _
  $region35: #{dense_block_forward.1} parent=0 // pred_check_branch
    %3011 = sbr.rel (0) target = $region37
  $region36: #{dense_block_forward.1} parent=0 // pred_region
    _
  $region37: #{dense_block_forward.1} parent=0 // pred_fallthru
    _
  // Predicated region
  $region38: #{dense_block_forward.1} parent=0 // pred_check
    _
  $region39: #{dense_block_forward.1} parent=0 // pred_check_branch
    %3013 = sbr.rel (0) target = $region41
  $region40: #{dense_block_forward.1} parent=0 // pred_region
    _
  $region41: #{dense_block_forward.1} parent=0 // pred_fallthru
    _

</llo_original>
